<compile_context>
chip_gen: v6e
topology: v6e:2x2x1
jax: 0.10.0
libtpu: 0.0.40
codegen_flags: <defaults>
</compile_context>

<pallas_src>
import jax
import jax.numpy as jnp
from jax.experimental import pallas as pl
from jax.experimental.pallas import tpu as pltpu


NEG_SLOPE = 0.2  # LeakyReLU slope used by the ConvBlock2d pre-activation
C_IN, C_MID1, C_MID2, C_OUT = 1024, 512, 256, 128


def _leaky(x):
    return jnp.where(x > 0, x, NEG_SLOPE * x)


def project_kernel(x_ref, w1_ref, b1_ref, w2_ref, b2_ref, w3_ref, b3_ref, o_ref):
    # x_ref: (1024, tm) f32  (channels on sublanes, pixels on lanes)
    # w1: (512, 1024) bf16   w2: (256, 512) bf16   w3: (128, 256) bf16   (resident)
    # b*: (Cout, 1) f32      o_ref: (128, tm) f32
    a = _leaky(x_ref[...]).astype(jnp.bfloat16)                            # pre-act 1 (f32 math)
    h = jnp.dot(w1_ref[...], a, preferred_element_type=jnp.float32) + b1_ref[...]
    a = _leaky(h).astype(jnp.bfloat16)                                     # pre-act 2
    h = jnp.dot(w2_ref[...], a, preferred_element_type=jnp.float32) + b2_ref[...]
    a = _leaky(h).astype(jnp.bfloat16)                                     # pre-act 3
    h = jnp.dot(w3_ref[...], a, preferred_element_type=jnp.float32) + b3_ref[...]
    o_ref[...] = h.astype(o_ref.dtype)


def _pick_pixel_tile(hw, cap=1024):
    """Largest legal pixel tile: a 128-multiple divisor of hw up to `cap`, or the full extent."""
    if hw <= cap:
        return hw                       # full array dim -> always a legal block dim
    if hw % 128 == 0:
        t = (cap // 128) * 128
        while t >= 128:
            if hw % t == 0:
                return t
            t -= 128
    # TODO(synk): pad the pixel axis when H*W is large and not a multiple of 128.
    return hw


def project_3d_to_2d(x_5d, params, *, tile_cap=1024):
    """x_5d: (B, c, d, H, W) float32 with c*d == 1024  ->  (B, 128, H, W) float32."""
    w1, b1, w2, b2, w3, b3 = params
    B, C, D, H, W = x_5d.shape
    assert C * D == C_IN, "rearrange 'b c d h w -> b (c d) h w' must yield 1024 channels"
    HW = H * W

    # 'b c d h w -> b (c d) (h w)' — pure reshape, no data movement, no dtype change.
    x = x_5d.reshape(B, C_IN, HW)

    tm = _pick_pixel_tile(HW, tile_cap)
    grid = (B, HW // tm)

    out = pl.pallas_call(
        project_kernel,
        out_shape=jax.ShapeDtypeStruct((B, C_OUT, HW), jnp.float32),
        grid_spec=pltpu.PrefetchScalarGridSpec(
            num_scalar_prefetch=0,
            grid=grid,
            in_specs=[
                pl.BlockSpec((None, C_IN, tm), lambda b, i: (b, 0, i)),   # x pixel tile
                pl.BlockSpec((C_MID1, C_IN), lambda b, i: (0, 0)),        # W1 (resident)
                pl.BlockSpec((C_MID1, 1), lambda b, i: (0, 0)),           # b1
                pl.BlockSpec((C_MID2, C_MID1), lambda b, i: (0, 0)),      # W2 (resident)
                pl.BlockSpec((C_MID2, 1), lambda b, i: (0, 0)),           # b2
                pl.BlockSpec((C_OUT, C_MID2), lambda b, i: (0, 0)),       # W3 (resident)
                pl.BlockSpec((C_OUT, 1), lambda b, i: (0, 0)),            # b3
            ],
            out_specs=pl.BlockSpec((None, C_OUT, tm), lambda b, i: (b, 0, i)),
        ),
        compiler_params=pltpu.CompilerParams(
            dimension_semantics=("parallel", "parallel"),
            vmem_limit_bytes=32 * 1024 * 1024,
        ),
    )(x, w1, b1, w2, b2, w3, b3)

    # (B, 128, H*W) -> (B, 128, H, W): free reshape, no transpose.
    return out.reshape(B, C_OUT, H, W)


def init_params(key):
    """Deterministic synthetic weights.  Conv2d(k=1) weight (Cout, Cin, 1, 1) is stored squeezed
    as (Cout, Cin) bf16 for the channels-major MXU matmul; biases as (Cout, 1) f32."""
    dims = [(C_IN, C_MID1), (C_MID1, C_MID2), (C_MID2, C_OUT)]  # (Cin, Cout)
    params = []
    for cin, cout in dims:
        key, kw, kb = jax.random.split(key, 3)
        scale = 1.0 / jnp.sqrt(jnp.float32(cin))
        w = (jax.random.normal(kw, (cout, cin), jnp.float32) * scale).astype(jnp.bfloat16)
        b = jax.random.normal(kb, (cout, 1), jnp.float32) * 0.01
        params += [w, b]
    return tuple(params)


def reference_forward(x_5d, params):
    """Pure-JAX reference of the same semantics (pre-act LeakyReLU + 1x1 conv chain), with the
    same f32-activation / bf16-MXU-operand / f32-accumulation choices as the kernel."""
    w1, b1, w2, b2, w3, b3 = params
    B, C, D, H, W = x_5d.shape
    x = x_5d.reshape(B, C * D, H * W)                            # (B, 1024, HW) f32
    a = _leaky(x).astype(jnp.bfloat16)
    h = jnp.einsum("oc,bcp->bop", w1, a, preferred_element_type=jnp.float32) + b1
    a = _leaky(h).astype(jnp.bfloat16)
    h = jnp.einsum("oc,bcp->bop", w2, a, preferred_element_type=jnp.float32) + b2
    a = _leaky(h).astype(jnp.bfloat16)
    h = jnp.einsum("oc,bcp->bop", w3, a, preferred_element_type=jnp.float32) + b3
    return h.reshape(B, C_OUT, H, W)


if __name__ == "__main__":
    key = jax.random.PRNGKey(0)
    B, in_channels, H, W = 2, 64, 16, 16
    depth = C_IN // in_channels   # rearrange must produce 1024 = in_channels * depth channels

    key, kx = jax.random.split(key)
    x = jax.random.normal(kx, (B, in_channels, depth, H, W), jnp.float32)
    params = init_params(key)

    out = jax.jit(project_3d_to_2d)(x, params)
    out = jax.block_until_ready(out)

    ref = reference_forward(x, params)
    assert out.shape == (B, C_OUT, H, W), out.shape
    assert jnp.allclose(out, ref, atol=1e-2, rtol=1e-2), float(jnp.max(jnp.abs(out - ref)))

    print("KERNEL_OK")
</pallas_src>

<mosaic_0001>
module attributes {stable_mosaic.version = 11 : i64} {
  func.func @project_kernel(%arg0: i32, %arg1: i32, %arg2: memref<1x1024x256xf32, #tpu.memory_space<vmem>>, %arg3: memref<512x1024xbf16, #tpu.memory_space<vmem>>, %arg4: memref<512x1xf32, #tpu.memory_space<vmem>>, %arg5: memref<256x512xbf16, #tpu.memory_space<vmem>>, %arg6: memref<256x1xf32, #tpu.memory_space<vmem>>, %arg7: memref<128x256xbf16, #tpu.memory_space<vmem>>, %arg8: memref<128x1xf32, #tpu.memory_space<vmem>>, %arg9: memref<1x128x256xf32, #tpu.memory_space<vmem>>) attributes {dimension_semantics = [#tpu.dimension_semantics<parallel>, #tpu.dimension_semantics<parallel>], iteration_bounds = array<i64: 2, 1>, scalar_prefetch = 0 : i64, scratch_operands = 0 : i64, tpu.core_type = #tpu.core_type<tc>, window_params = [{transform_indices = @transform_0, window_bounds = array<i64: 1, 1024, 256>}, {pipeline_mode = #tpu.pipeline_mode<synchronous>, transform_indices = @transform_1, window_bounds = array<i64: 512, 1024>}, {pipeline_mode = #tpu.pipeline_mode<synchronous>, transform_indices = @transform_2, window_bounds = array<i64: 512, 1>}, {pipeline_mode = #tpu.pipeline_mode<synchronous>, transform_indices = @transform_3, window_bounds = array<i64: 256, 512>}, {pipeline_mode = #tpu.pipeline_mode<synchronous>, transform_indices = @transform_4, window_bounds = array<i64: 256, 1>}, {pipeline_mode = #tpu.pipeline_mode<synchronous>, transform_indices = @transform_5, window_bounds = array<i64: 128, 256>}, {pipeline_mode = #tpu.pipeline_mode<synchronous>, transform_indices = @transform_6, window_bounds = array<i64: 128, 1>}, {transform_indices = @transform_7, window_bounds = array<i64: 1, 128, 256>}]} {
    %c0 = arith.constant 0 : index
    %c0_0 = arith.constant 0 : index
    %c0_1 = arith.constant 0 : index
    %0 = vector.load %arg2[%c0, %c0_0, %c0_1] : memref<1x1024x256xf32, #tpu.memory_space<vmem>>, vector<1x1024x256xf32>
    %1 = vector.shape_cast %0 : vector<1x1024x256xf32> to vector<1024x256xf32>
    %cst = arith.constant 0.000000e+00 : f32
    %2 = vector.broadcast %cst : f32 to vector<1024x256xf32>
    %3 = arith.cmpf ogt, %1, %2 : vector<1024x256xf32>
    %cst_2 = arith.constant 2.000000e-01 : f32
    %4 = vector.broadcast %cst_2 : f32 to vector<1024x256xf32>
    %5 = arith.mulf %4, %1 : vector<1024x256xf32>
    %6 = arith.select %3, %1, %5 : vector<1024x256xi1>, vector<1024x256xf32>
    %7 = arith.truncf %6 : vector<1024x256xf32> to vector<1024x256xbf16>
    %c0_3 = arith.constant 0 : index
    %c0_4 = arith.constant 0 : index
    %8 = vector.load %arg3[%c0_3, %c0_4] : memref<512x1024xbf16, #tpu.memory_space<vmem>>, vector<512x1024xbf16>
    %cst_5 = arith.constant dense<0.000000e+00> : vector<512x256xf32>
    %9 = tpu.matmul %8, %7, %cst_5 {dimension_numbers = #tpu.dot_dimension_numbers<[1], [0], [0], [1], [0, 0, 1, 1], [], []>} : vector<512x1024xbf16>, vector<1024x256xbf16>, vector<512x256xf32> -> vector<512x256xf32>
    %c0_6 = arith.constant 0 : index
    %c0_7 = arith.constant 0 : index
    %10 = vector.load %arg4[%c0_6, %c0_7] : memref<512x1xf32, #tpu.memory_space<vmem>>, vector<512x1xf32>
    %11 = vector.broadcast %10 : vector<512x1xf32> to vector<512x256xf32>
    %12 = arith.addf %9, %11 : vector<512x256xf32>
    %cst_8 = arith.constant 0.000000e+00 : f32
    %13 = vector.broadcast %cst_8 : f32 to vector<512x256xf32>
    %14 = arith.cmpf ogt, %12, %13 : vector<512x256xf32>
    %cst_9 = arith.constant 2.000000e-01 : f32
    %15 = vector.broadcast %cst_9 : f32 to vector<512x256xf32>
    %16 = arith.mulf %15, %12 : vector<512x256xf32>
    %17 = arith.select %14, %12, %16 : vector<512x256xi1>, vector<512x256xf32>
    %18 = arith.truncf %17 : vector<512x256xf32> to vector<512x256xbf16>
    %c0_10 = arith.constant 0 : index
    %c0_11 = arith.constant 0 : index
    %19 = vector.load %arg5[%c0_10, %c0_11] : memref<256x512xbf16, #tpu.memory_space<vmem>>, vector<256x512xbf16>
    %cst_12 = arith.constant dense<0.000000e+00> : vector<256x256xf32>
    %20 = tpu.matmul %19, %18, %cst_12 {dimension_numbers = #tpu.dot_dimension_numbers<[1], [0], [0], [1], [0, 0, 1, 1], [], []>} : vector<256x512xbf16>, vector<512x256xbf16>, vector<256x256xf32> -> vector<256x256xf32>
    %c0_13 = arith.constant 0 : index
    %c0_14 = arith.constant 0 : index
    %21 = vector.load %arg6[%c0_13, %c0_14] : memref<256x1xf32, #tpu.memory_space<vmem>>, vector<256x1xf32>
    %22 = vector.broadcast %21 : vector<256x1xf32> to vector<256x256xf32>
    %23 = arith.addf %20, %22 : vector<256x256xf32>
    %cst_15 = arith.constant 0.000000e+00 : f32
    %24 = vector.broadcast %cst_15 : f32 to vector<256x256xf32>
    %25 = arith.cmpf ogt, %23, %24 : vector<256x256xf32>
    %cst_16 = arith.constant 2.000000e-01 : f32
    %26 = vector.broadcast %cst_16 : f32 to vector<256x256xf32>
    %27 = arith.mulf %26, %23 : vector<256x256xf32>
    %28 = arith.select %25, %23, %27 : vector<256x256xi1>, vector<256x256xf32>
    %29 = arith.truncf %28 : vector<256x256xf32> to vector<256x256xbf16>
    %c0_17 = arith.constant 0 : index
    %c0_18 = arith.constant 0 : index
    %30 = vector.load %arg7[%c0_17, %c0_18] : memref<128x256xbf16, #tpu.memory_space<vmem>>, vector<128x256xbf16>
    %cst_19 = arith.constant dense<0.000000e+00> : vector<128x256xf32>
    %31 = tpu.matmul %30, %29, %cst_19 {dimension_numbers = #tpu.dot_dimension_numbers<[1], [0], [0], [1], [0, 0, 1, 1], [], []>} : vector<128x256xbf16>, vector<256x256xbf16>, vector<128x256xf32> -> vector<128x256xf32>
    %c0_20 = arith.constant 0 : index
    %c0_21 = arith.constant 0 : index
    %32 = vector.load %arg8[%c0_20, %c0_21] : memref<128x1xf32, #tpu.memory_space<vmem>>, vector<128x1xf32>
    %33 = vector.broadcast %32 : vector<128x1xf32> to vector<128x256xf32>
    %34 = arith.addf %31, %33 : vector<128x256xf32>
    %c0_22 = arith.constant 0 : index
    %c0_23 = arith.constant 0 : index
    %c0_24 = arith.constant 0 : index
    %35 = vector.load %arg9[%c0_22, %c0_23, %c0_24] : memref<1x128x256xf32, #tpu.memory_space<vmem>>, vector<1x128x256xf32>
    %36 = vector.shape_cast %35 : vector<1x128x256xf32> to vector<128x256xf32>
    %37 = vector.shape_cast %34 : vector<128x256xf32> to vector<1x128x256xf32>
    tpu.vector_store %arg9[%c0_22, %c0_23, %c0_24], %37 {strides = array<i32>} : memref<1x128x256xf32, #tpu.memory_space<vmem>>, vector<1x128x256xf32>,
    return
  }
  func.func @transform_0(%arg0: i32, %arg1: i32) -> (i32, i32, i32) {
    %c0_i32 = arith.constant 0 : i32
    %c0_i32_0 = arith.constant 0 : i32
    return %arg0, %c0_i32, %arg1 : i32, i32, i32
  }
  func.func @transform_1(%arg0: i32, %arg1: i32) -> (i32, i32) {
    %c0_i32 = arith.constant 0 : i32
    %c0_i32_0 = arith.constant 0 : i32
    %c0_i32_1 = arith.constant 0 : i32
    return %c0_i32, %c0_i32_0 : i32, i32
  }
  func.func @transform_2(%arg0: i32, %arg1: i32) -> (i32, i32) {
    %c0_i32 = arith.constant 0 : i32
    %c0_i32_0 = arith.constant 0 : i32
    %c0_i32_1 = arith.constant 0 : i32
    return %c0_i32, %c0_i32_0 : i32, i32
  }
  func.func @transform_3(%arg0: i32, %arg1: i32) -> (i32, i32) {
    %c0_i32 = arith.constant 0 : i32
    %c0_i32_0 = arith.constant 0 : i32
    %c0_i32_1 = arith.constant 0 : i32
    return %c0_i32, %c0_i32_0 : i32, i32
  }
  func.func @transform_4(%arg0: i32, %arg1: i32) -> (i32, i32) {
    %c0_i32 = arith.constant 0 : i32
    %c0_i32_0 = arith.constant 0 : i32
    %c0_i32_1 = arith.constant 0 : i32
    return %c0_i32, %c0_i32_0 : i32, i32
  }
  func.func @transform_5(%arg0: i32, %arg1: i32) -> (i32, i32) {
    %c0_i32 = arith.constant 0 : i32
    %c0_i32_0 = arith.constant 0 : i32
    %c0_i32_1 = arith.constant 0 : i32
    return %c0_i32, %c0_i32_0 : i32, i32
  }
  func.func @transform_6(%arg0: i32, %arg1: i32) -> (i32, i32) {
    %c0_i32 = arith.constant 0 : i32
    %c0_i32_0 = arith.constant 0 : i32
    %c0_i32_1 = arith.constant 0 : i32
    return %c0_i32, %c0_i32_0 : i32, i32
  }
  func.func @transform_7(%arg0: i32, %arg1: i32) -> (i32, i32, i32) {
    %c0_i32 = arith.constant 0 : i32
    %c0_i32_0 = arith.constant 0 : i32
    return %arg0, %c0_i32, %arg1 : i32, i32, i32
  }
}

</mosaic_0001>

<llo_original>
// kernel: project_3d_to_2d.1
$region0: #{project_3d_to_2d.1}
  #allocation0 [shape = 'u32[]', space=smem, size = 0x4, offset = 0x4, fixed_abs, tag = 'smem constant byte address 0x4 - core index']
  #allocation1 [shape = 'u32[144,128]{1,0:T(1,128)}', space=vmem, size = 0x12000, scoped, tag = 'internal scratch']
  %s0 = inlined_call_operand.vmem [shape: f32[2,1024,256], index: 0, kind: input, shape index: {}]
  %s1 = inlined_call_operand.vmem [shape: bf16[512,1024], index: 1, kind: input, shape index: {}]
  %s2 = inlined_call_operand.vmem [shape: f32[512,1], index: 2, kind: input, shape index: {}]
  %s3 = inlined_call_operand.vmem [shape: bf16[256,512], index: 3, kind: input, shape index: {}]
  %s4 = inlined_call_operand.vmem [shape: f32[256,1], index: 4, kind: input, shape index: {}]
  %s5 = inlined_call_operand.vmem [shape: bf16[128,256], index: 5, kind: input, shape index: {}]
  %s6 = inlined_call_operand.vmem [shape: f32[128,1], index: 6, kind: input, shape index: {}]
  %s7 = inlined_call_operand.vmem [shape: f32[2,128,256], index: 7, kind: output, shape index: {}]
  %s8 = sld [smem:[#allocation0]]
  $region61: #{project_3d_to_2d.1} parent=0
    _
  %s10 = ssub.s32 1, %s8
  %s11 = scalar_select 0, %s10, %s8
  loop: start=0, step=1, limit=4
  $region2: #{project_3d_to_2d.1} parent=0 // loop_pre_header
    _
  $region3: #{project_3d_to_2d.1} parent=0 // loop_header
    %s13 = sphi 0, %s17
    %p14 = scmp.ge.s32.totalorder %s13, 4
    %s20 = sphi 0, %s32
    %s21 = sphi 0, %s28
    %s22 = sphi 0, %s20
    %s23 = sphi 0, %s21
    %s24 = sphi 0, %s22
    %s25 = sphi 0, %s23
    %s37 = sphi 0, %s39
    %s40 = sphi 0, %s37
    %s41 = sphi 0, %s40
    %s57 = sphi 0, %s41
    %s61 = sphi 0, %s61
    %s63 = sphi 0, %s61
    %s64 = sphi 0, %s63
    %s78 = sphi 0, %s64
    %s82 = sphi 0, %s82
    %s84 = sphi 0, %s82
    %s85 = sphi 0, %s84
    %s99 = sphi 0, %s85
    %s103 = sphi 0, %s103
    %s105 = sphi 0, %s103
    %s106 = sphi 0, %s105
    %s120 = sphi 0, %s106
    %s124 = sphi 0, %s124
    %s126 = sphi 0, %s124
    %s127 = sphi 0, %s126
    %s141 = sphi 0, %s127
    %s145 = sphi 0, %s145
    %s147 = sphi 0, %s145
    %s148 = sphi 0, %s147
    %s162 = sphi 0, %s148
    %s166 = sphi 0, %s166
    %s168 = sphi 0, %s166
    %s169 = sphi 0, %s168
    %s183 = sphi 0, %s169
    %s191 = sphi 0, %s193
    %s194 = sphi 0, %s191
    %s195 = sphi 0, %s194
    %s211 = sphi 0, %s195
  $region4: #{project_3d_to_2d.1} parent=0 // loop_header_branch
    %16 = sbr.rel (%p14) target = $region8
  $region5: #{project_3d_to_2d.1} parent=0 // loop_body
    %s18 = ssub.s32 %s13, 1
    %s19 = ssub.s32 %s13, 2
    %s26 = sadd.s32 1, %s21
    %p27 = scmp.ge.s32.totalorder %s26, 1
    %s28 = scalar_select %p27, 0, %s26
    %s29 = sadd.s32 1, %s20
    %s30 = scalar_select %p27, %s29, %s20
    %p31 = scmp.ge.s32.totalorder %s30, 2
    %s32 = scalar_select %p31, 0, %s30
    %s33 = ssub.s32 %s20, %s32
    %s34 = ssub.s32 %s21, %s28
    %s35 = sor.u32 %s33, %s34
    %p36 = scmp.eq.s32.totalorder %s35, 0
    %s38 = sadd.s32 %s37, 1
    %s39 = scalar_select %p36, %s37, %s38
    %p42 = pneg %p36
    %p43 = scmp.eq.s32.totalorder %s13, 1
    %p44 = por %p42, %p43
    %p45 = scmp.ne.s32.totalorder %s37, %s40
    %p46 = scmp.eq.s32.totalorder %s13, 0
    %p47 = por %p45, %p46
    %p48 = scmp.ne.s32.totalorder %s37, %s40
    %p49 = scmp.eq.s32.totalorder %s18, 1
    %p50 = por %p48, %p49
    %p51 = scmp.ne.s32.totalorder %s40, %s41
    %p52 = scmp.eq.s32.totalorder %s18, 0
    %p53 = por %p51, %p52
    %p54 = scmp.ne.s32.totalorder %s40, %s41
    %p55 = scmp.eq.s32.totalorder %s19, 1
    %p56 = por %p54, %p55
    %p58 = scmp.ne.s32.totalorder %s41, %s57
    %p59 = scmp.eq.s32.totalorder %s19, 0
    %p60 = por %p58, %p59
    %s62 = sadd.s32 %s61, 1
    %p65 = scmp.eq.s32.totalorder %s13, 1
    %p66 = scmp.ne.s32.totalorder %s61, %s63
    %p67 = scmp.eq.s32.totalorder %s13, 0
    %p68 = por %p66, %p67
    %p69 = scmp.ne.s32.totalorder %s61, %s63
    %p70 = scmp.eq.s32.totalorder %s18, 1
    %p71 = por %p69, %p70
    %p72 = scmp.ne.s32.totalorder %s63, %s64
    %p73 = scmp.eq.s32.totalorder %s18, 0
    %p74 = por %p72, %p73
    %p75 = scmp.ne.s32.totalorder %s63, %s64
    %p76 = scmp.eq.s32.totalorder %s19, 1
    %p77 = por %p75, %p76
    %p79 = scmp.ne.s32.totalorder %s64, %s78
    %p80 = scmp.eq.s32.totalorder %s19, 0
    %p81 = por %p79, %p80
    %s83 = sadd.s32 %s82, 1
    %p86 = scmp.eq.s32.totalorder %s13, 1
    %p87 = scmp.ne.s32.totalorder %s82, %s84
    %p88 = scmp.eq.s32.totalorder %s13, 0
    %p89 = por %p87, %p88
    %p90 = scmp.ne.s32.totalorder %s82, %s84
    %p91 = scmp.eq.s32.totalorder %s18, 1
    %p92 = por %p90, %p91
    %p93 = scmp.ne.s32.totalorder %s84, %s85
    %p94 = scmp.eq.s32.totalorder %s18, 0
    %p95 = por %p93, %p94
    %p96 = scmp.ne.s32.totalorder %s84, %s85
    %p97 = scmp.eq.s32.totalorder %s19, 1
    %p98 = por %p96, %p97
    %p100 = scmp.ne.s32.totalorder %s85, %s99
    %p101 = scmp.eq.s32.totalorder %s19, 0
    %p102 = por %p100, %p101
    %s104 = sadd.s32 %s103, 1
    %p107 = scmp.eq.s32.totalorder %s13, 1
    %p108 = scmp.ne.s32.totalorder %s103, %s105
    %p109 = scmp.eq.s32.totalorder %s13, 0
    %p110 = por %p108, %p109
    %p111 = scmp.ne.s32.totalorder %s103, %s105
    %p112 = scmp.eq.s32.totalorder %s18, 1
    %p113 = por %p111, %p112
    %p114 = scmp.ne.s32.totalorder %s105, %s106
    %p115 = scmp.eq.s32.totalorder %s18, 0
    %p116 = por %p114, %p115
    %p117 = scmp.ne.s32.totalorder %s105, %s106
    %p118 = scmp.eq.s32.totalorder %s19, 1
    %p119 = por %p117, %p118
    %p121 = scmp.ne.s32.totalorder %s106, %s120
    %p122 = scmp.eq.s32.totalorder %s19, 0
    %p123 = por %p121, %p122
    %s125 = sadd.s32 %s124, 1
    %p128 = scmp.eq.s32.totalorder %s13, 1
    %p129 = scmp.ne.s32.totalorder %s124, %s126
    %p130 = scmp.eq.s32.totalorder %s13, 0
    %p131 = por %p129, %p130
    %p132 = scmp.ne.s32.totalorder %s124, %s126
    %p133 = scmp.eq.s32.totalorder %s18, 1
    %p134 = por %p132, %p133
    %p135 = scmp.ne.s32.totalorder %s126, %s127
    %p136 = scmp.eq.s32.totalorder %s18, 0
    %p137 = por %p135, %p136
    %p138 = scmp.ne.s32.totalorder %s126, %s127
    %p139 = scmp.eq.s32.totalorder %s19, 1
    %p140 = por %p138, %p139
    %p142 = scmp.ne.s32.totalorder %s127, %s141
    %p143 = scmp.eq.s32.totalorder %s19, 0
    %p144 = por %p142, %p143
    %s146 = sadd.s32 %s145, 1
    %p149 = scmp.eq.s32.totalorder %s13, 1
    %p150 = scmp.ne.s32.totalorder %s145, %s147
    %p151 = scmp.eq.s32.totalorder %s13, 0
    %p152 = por %p150, %p151
    %p153 = scmp.ne.s32.totalorder %s145, %s147
    %p154 = scmp.eq.s32.totalorder %s18, 1
    %p155 = por %p153, %p154
    %p156 = scmp.ne.s32.totalorder %s147, %s148
    %p157 = scmp.eq.s32.totalorder %s18, 0
    %p158 = por %p156, %p157
    %p159 = scmp.ne.s32.totalorder %s147, %s148
    %p160 = scmp.eq.s32.totalorder %s19, 1
    %p161 = por %p159, %p160
    %p163 = scmp.ne.s32.totalorder %s148, %s162
    %p164 = scmp.eq.s32.totalorder %s19, 0
    %p165 = por %p163, %p164
    %s167 = sadd.s32 %s166, 1
    %p170 = scmp.eq.s32.totalorder %s13, 1
    %p171 = scmp.ne.s32.totalorder %s166, %s168
    %p172 = scmp.eq.s32.totalorder %s13, 0
    %p173 = por %p171, %p172
    %p174 = scmp.ne.s32.totalorder %s166, %s168
    %p175 = scmp.eq.s32.totalorder %s18, 1
    %p176 = por %p174, %p175
    %p177 = scmp.ne.s32.totalorder %s168, %s169
    %p178 = scmp.eq.s32.totalorder %s18, 0
    %p179 = por %p177, %p178
    %p180 = scmp.ne.s32.totalorder %s168, %s169
    %p181 = scmp.eq.s32.totalorder %s19, 1
    %p182 = por %p180, %p181
    %p184 = scmp.ne.s32.totalorder %s169, %s183
    %p185 = scmp.eq.s32.totalorder %s19, 0
    %p186 = por %p184, %p185
    %s187 = ssub.s32 %s20, %s32
    %s188 = ssub.s32 %s21, %s28
    %s189 = sor.u32 %s187, %s188
    %p190 = scmp.eq.s32.totalorder %s189, 0
    %s192 = sadd.s32 %s191, 1
    %s193 = scalar_select %p190, %s191, %s192
    %p196 = pneg %p190
    %p197 = scmp.eq.s32.totalorder %s13, 1
    %p198 = por %p196, %p197
    %p199 = scmp.ne.s32.totalorder %s191, %s194
    %p200 = scmp.eq.s32.totalorder %s13, 0
    %p201 = por %p199, %p200
    %p202 = scmp.ne.s32.totalorder %s191, %s194
    %p203 = scmp.eq.s32.totalorder %s18, 1
    %p204 = por %p202, %p203
    %p205 = scmp.ne.s32.totalorder %s194, %s195
    %p206 = scmp.eq.s32.totalorder %s18, 0
    %p207 = por %p205, %p206
    %p208 = scmp.ne.s32.totalorder %s194, %s195
    %p209 = scmp.eq.s32.totalorder %s19, 1
    %p210 = por %p208, %p209
    %p212 = scmp.ne.s32.totalorder %s195, %s211
    %p213 = scmp.eq.s32.totalorder %s19, 0
    %p214 = por %p212, %p213
    %p215 = scmp.le.s32.totalorder 1, %s13
    %p216 = scmp.lt.s32.totalorder %s13, 3
    %p217 = pnand %p215, %p216
    %p218 = pneg %p217
    // Predicated region
    $region9: #{project_3d_to_2d.1} parent=5 // pred_check
      _
    $region10: #{project_3d_to_2d.1} parent=5 // pred_check_branch
      %220 = sbr.rel (%p217) target = $region12
    $region11: #{project_3d_to_2d.1} parent=5 // pred_region
      %s221 = ssub.s32 %s13, 1
      // Predicated region
      $region13: #{project_3d_to_2d.1} parent=11 // pred_check
        %p222 = pneg %p74
      $region14: #{project_3d_to_2d.1} parent=11 // pred_check_branch
        %224 = sbr.rel (%p222) target = $region16
      $region15: #{project_3d_to_2d.1} parent=11 // pred_region
        _
      $region16: #{project_3d_to_2d.1} parent=11 // pred_fallthru
        _
      // Predicated region
      $region17: #{project_3d_to_2d.1} parent=11 // pred_check
        %p225 = pneg %p95
      $region18: #{project_3d_to_2d.1} parent=11 // pred_check_branch
        %227 = sbr.rel (%p225) target = $region20
      $region19: #{project_3d_to_2d.1} parent=11 // pred_region
        _
      $region20: #{project_3d_to_2d.1} parent=11 // pred_fallthru
        _
      // Predicated region
      $region21: #{project_3d_to_2d.1} parent=11 // pred_check
        %p228 = pneg %p116
      $region22: #{project_3d_to_2d.1} parent=11 // pred_check_branch
        %230 = sbr.rel (%p228) target = $region24
      $region23: #{project_3d_to_2d.1} parent=11 // pred_region
        _
      $region24: #{project_3d_to_2d.1} parent=11 // pred_fallthru
        _
      // Predicated region
      $region25: #{project_3d_to_2d.1} parent=11 // pred_check
        %p231 = pneg %p137
      $region26: #{project_3d_to_2d.1} parent=11 // pred_check_branch
        %233 = sbr.rel (%p231) target = $region28
      $region27: #{project_3d_to_2d.1} parent=11 // pred_region
        _
      $region28: #{project_3d_to_2d.1} parent=11 // pred_fallthru
        _
      // Predicated region
      $region29: #{project_3d_to_2d.1} parent=11 // pred_check
        %p234 = pneg %p158
      $region30: #{project_3d_to_2d.1} parent=11 // pred_check_branch
        %236 = sbr.rel (%p234) target = $region32
      $region31: #{project_3d_to_2d.1} parent=11 // pred_region
        _
      $region32: #{project_3d_to_2d.1} parent=11 // pred_fallthru
        _
      // Predicated region
      $region33: #{project_3d_to_2d.1} parent=11 // pred_check
        %p237 = pneg %p179
      $region34: #{project_3d_to_2d.1} parent=11 // pred_check_branch
        %239 = sbr.rel (%p237) target = $region36
      $region35: #{project_3d_to_2d.1} parent=11 // pred_region
        _
      $region36: #{project_3d_to_2d.1} parent=11 // pred_fallthru
        _
    $region12: #{project_3d_to_2d.1} parent=5 // pred_fallthru
      _
    %p240 = scmp.lt.s32.totalorder %s13, 2
    // Predicated region
    $region37: #{project_3d_to_2d.1} parent=5 // pred_check
      %p241 = pneg %p240
    $region38: #{project_3d_to_2d.1} parent=5 // pred_check_branch
      %243 = sbr.rel (%p241) target = $region40
    $region39: #{project_3d_to_2d.1} parent=5 // pred_region
      // Predicated region
      $region41: #{project_3d_to_2d.1} parent=39 // pred_check
        %p244 = pneg %p47
      $region42: #{project_3d_to_2d.1} parent=39 // pred_check_branch
        %246 = sbr.rel (%p244) target = $region44
      $region43: #{project_3d_to_2d.1} parent=39 // pred_region
        %s247 = smul.u32 2, %s21
        %p248 = scmp.lt.s32.totalorder %s20, 1
        %s249 = scalar_select %p248, %s20, 1
        %p250 = scmp.lt.s32.totalorder %s247, 1
        %s251 = scalar_select %p250, %s247, 1
        %s252 = smul.addr %s249, 256
        %s253 = sadd.s32 %s251, %s252
        %s254 = smul.addr %s253, 8
        %s255 = scalar_lea.vmem %s0, %s254
        %s256 = smul.u32 2, %s21
      $region44: #{project_3d_to_2d.1} parent=39 // pred_fallthru
        _
    $region40: #{project_3d_to_2d.1} parent=5 // pred_fallthru
      _
    %p257 = scmp.le.s32.totalorder 1, %s13
    %p258 = scmp.lt.s32.totalorder %s13, 3
    %p259 = pnand %p257, %p258
    %p260 = pneg %p259
    // Predicated region
    $region45: #{project_3d_to_2d.1} parent=5 // pred_check
      _
    $region46: #{project_3d_to_2d.1} parent=5 // pred_check_branch
      %262 = sbr.rel (%p259) target = $region48
    $region47: #{project_3d_to_2d.1} parent=5 // pred_region
      %s263 = ssub.s32 %s13, 1
      %s264 = smul.u32 2, %s23
      %p265 = scmp.lt.s32.totalorder %s22, 1
      %s266 = scalar_select %p265, %s22, 1
      %p267 = scmp.lt.s32.totalorder %s264, 1
      %s268 = scalar_select %p267, %s264, 1
      %s269 = smul.addr %s266, 256
      %s270 = sadd.s32 %s268, %s269
      %s271 = smul.addr %s270, 8
      %s272 = scalar_lea.vmem %s0, %s271
      %p273 = pneg %p53
      %p274 = pneg %p50
      %p275 = pneg %p74
      %p276 = pneg %p71
      %p277 = pneg %p95
      %p278 = pneg %p92
      %p279 = pneg %p116
      %p280 = pneg %p113
      %p281 = pneg %p137
      %p282 = pneg %p134
      %p283 = pneg %p158
      %p284 = pneg %p155
      %p285 = pneg %p179
      %p286 = pneg %p176
      %p287 = pneg %p207
      %p288 = pneg %p204
      %s289 = smul.u32 2, %s23
      %p290 = scmp.lt.s32.totalorder %s22, 1
      %s291 = scalar_select %p290, %s22, 1
      %p292 = scmp.lt.s32.totalorder %s289, 1
      %s293 = scalar_select %p292, %s289, 1
      %s294 = smul.addr %s291, 32
      %s295 = sadd.s32 %s293, %s294
      %s296 = smul.addr %s295, 8
      %s297 = scalar_lea.vmem %s7, %s296
      %s298 = smul.u32 2, %s23
      %p299 = scmp.lt.s32.totalorder %s22, 1
      %s300 = scalar_select %p299, %s22, 1
      %p301 = scmp.lt.s32.totalorder %s298, 1
      %s302 = scalar_select %p301, %s298, 1
      %s303 = smul.addr %s300, 256
      %s304 = sadd.s32 %s302, %s303
      %s305 = smul.addr %s304, 8
      %s306 = scalar_lea.vmem %s0, %s305
      %s307 = smul.u32 2, %s23
      %s308 = smul.u32 2, %s23
      %p309 = scmp.lt.s32.totalorder %s22, 1
      %s310 = scalar_select %p309, %s22, 1
      %p311 = scmp.lt.s32.totalorder %s308, 1
      %s312 = scalar_select %p311, %s308, 1
      %s313 = smul.addr %s310, 32
      %s314 = sadd.s32 %s312, %s313
      %s315 = smul.addr %s314, 8
      %s316 = scalar_lea.vmem %s7, %s315
      %s317 = smul.u32 2, %s23
      %v318 = vld [vmem:[%s306] sm:$0xff]
      %v319 = vld [vmem:[%s306 + $0x8] sm:$0xff]
      %v320 = vld [vmem:[%s306 + $0x10] sm:$0xff]
      %v321 = vld [vmem:[%s306 + $0x18] sm:$0xff]
      %v322 = vld [vmem:[%s306 + $0x20] sm:$0xff]
      %v323 = vld [vmem:[%s306 + $0x28] sm:$0xff]
      %v324 = vld [vmem:[%s306 + $0x30] sm:$0xff]
      %v325 = vld [vmem:[%s306 + $0x38] sm:$0xff]
      %v326 = vld [vmem:[%s306 + $0x40] sm:$0xff]
      %v327 = vld [vmem:[%s306 + $0x48] sm:$0xff]
      %v328 = vld [vmem:[%s306 + $0x50] sm:$0xff]
      %v329 = vld [vmem:[%s306 + $0x58] sm:$0xff]
      %v330 = vld [vmem:[%s306 + $0x60] sm:$0xff]
      %v331 = vld [vmem:[%s306 + $0x68] sm:$0xff]
      %v332 = vld [vmem:[%s306 + $0x70] sm:$0xff]
      %v333 = vld [vmem:[%s306 + $0x78] sm:$0xff]
      %v334 = vld [vmem:[%s306 + $0x80] sm:$0xff]
      %v335 = vld [vmem:[%s306 + $0x88] sm:$0xff]
      %v336 = vld [vmem:[%s306 + $0x90] sm:$0xff]
      %v337 = vld [vmem:[%s306 + $0x98] sm:$0xff]
      %v338 = vld [vmem:[%s306 + $0xa0] sm:$0xff]
      %v339 = vld [vmem:[%s306 + $0xa8] sm:$0xff]
      %v340 = vld [vmem:[%s306 + $0xb0] sm:$0xff]
      %v341 = vld [vmem:[%s306 + $0xb8] sm:$0xff]
      %v342 = vld [vmem:[%s306 + $0xc0] sm:$0xff]
      %v343 = vld [vmem:[%s306 + $0xc8] sm:$0xff]
      %v344 = vld [vmem:[%s306 + $0xd0] sm:$0xff]
      %v345 = vld [vmem:[%s306 + $0xd8] sm:$0xff]
      %v346 = vld [vmem:[%s306 + $0xe0] sm:$0xff]
      %v347 = vld [vmem:[%s306 + $0xe8] sm:$0xff]
      %v348 = vld [vmem:[%s306 + $0xf0] sm:$0xff]
      %v349 = vld [vmem:[%s306 + $0xf8] sm:$0xff]
      %v350 = vld [vmem:[%s306 + $0x100] sm:$0xff]
      %v351 = vld [vmem:[%s306 + $0x108] sm:$0xff]
      %v352 = vld [vmem:[%s306 + $0x110] sm:$0xff]
      %v353 = vld [vmem:[%s306 + $0x118] sm:$0xff]
      %v354 = vld [vmem:[%s306 + $0x120] sm:$0xff]
      %v355 = vld [vmem:[%s306 + $0x128] sm:$0xff]
      %v356 = vld [vmem:[%s306 + $0x130] sm:$0xff]
      %v357 = vld [vmem:[%s306 + $0x138] sm:$0xff]
      %v358 = vld [vmem:[%s306 + $0x140] sm:$0xff]
      %v359 = vld [vmem:[%s306 + $0x148] sm:$0xff]
      %v360 = vld [vmem:[%s306 + $0x150] sm:$0xff]
      %v361 = vld [vmem:[%s306 + $0x158] sm:$0xff]
      %v362 = vld [vmem:[%s306 + $0x160] sm:$0xff]
      %v363 = vld [vmem:[%s306 + $0x168] sm:$0xff]
      %v364 = vld [vmem:[%s306 + $0x170] sm:$0xff]
      %v365 = vld [vmem:[%s306 + $0x178] sm:$0xff]
      %v366 = vld [vmem:[%s306 + $0x180] sm:$0xff]
      %v367 = vld [vmem:[%s306 + $0x188] sm:$0xff]
      %v368 = vld [vmem:[%s306 + $0x190] sm:$0xff]
      %v369 = vld [vmem:[%s306 + $0x198] sm:$0xff]
      %v370 = vld [vmem:[%s306 + $0x1a0] sm:$0xff]
      %v371 = vld [vmem:[%s306 + $0x1a8] sm:$0xff]
      %v372 = vld [vmem:[%s306 + $0x1b0] sm:$0xff]
      %v373 = vld [vmem:[%s306 + $0x1b8] sm:$0xff]
      %v374 = vld [vmem:[%s306 + $0x1c0] sm:$0xff]
      %v375 = vld [vmem:[%s306 + $0x1c8] sm:$0xff]
      %v376 = vld [vmem:[%s306 + $0x1d0] sm:$0xff]
      %v377 = vld [vmem:[%s306 + $0x1d8] sm:$0xff]
      %v378 = vld [vmem:[%s306 + $0x1e0] sm:$0xff]
      %v379 = vld [vmem:[%s306 + $0x1e8] sm:$0xff]
      %v380 = vld [vmem:[%s306 + $0x1f0] sm:$0xff]
      %v381 = vld [vmem:[%s306 + $0x1f8] sm:$0xff]
      %v382 = vld [vmem:[%s306 + $0x200] sm:$0xff]
      %v383 = vld [vmem:[%s306 + $0x208] sm:$0xff]
      %v384 = vld [vmem:[%s306 + $0x210] sm:$0xff]
      %v385 = vld [vmem:[%s306 + $0x218] sm:$0xff]
      %v386 = vld [vmem:[%s306 + $0x220] sm:$0xff]
      %v387 = vld [vmem:[%s306 + $0x228] sm:$0xff]
      %v388 = vld [vmem:[%s306 + $0x230] sm:$0xff]
      %v389 = vld [vmem:[%s306 + $0x238] sm:$0xff]
      %v390 = vld [vmem:[%s306 + $0x240] sm:$0xff]
      %v391 = vld [vmem:[%s306 + $0x248] sm:$0xff]
      %v392 = vld [vmem:[%s306 + $0x250] sm:$0xff]
      %v393 = vld [vmem:[%s306 + $0x258] sm:$0xff]
      %v394 = vld [vmem:[%s306 + $0x260] sm:$0xff]
      %v395 = vld [vmem:[%s306 + $0x268] sm:$0xff]
      %v396 = vld [vmem:[%s306 + $0x270] sm:$0xff]
      %v397 = vld [vmem:[%s306 + $0x278] sm:$0xff]
      %v398 = vld [vmem:[%s306 + $0x280] sm:$0xff]
      %v399 = vld [vmem:[%s306 + $0x288] sm:$0xff]
      %v400 = vld [vmem:[%s306 + $0x290] sm:$0xff]
      %v401 = vld [vmem:[%s306 + $0x298] sm:$0xff]
      %v402 = vld [vmem:[%s306 + $0x2a0] sm:$0xff]
      %v403 = vld [vmem:[%s306 + $0x2a8] sm:$0xff]
      %v404 = vld [vmem:[%s306 + $0x2b0] sm:$0xff]
      %v405 = vld [vmem:[%s306 + $0x2b8] sm:$0xff]
      %v406 = vld [vmem:[%s306 + $0x2c0] sm:$0xff]
      %v407 = vld [vmem:[%s306 + $0x2c8] sm:$0xff]
      %v408 = vld [vmem:[%s306 + $0x2d0] sm:$0xff]
      %v409 = vld [vmem:[%s306 + $0x2d8] sm:$0xff]
      %v410 = vld [vmem:[%s306 + $0x2e0] sm:$0xff]
      %v411 = vld [vmem:[%s306 + $0x2e8] sm:$0xff]
      %v412 = vld [vmem:[%s306 + $0x2f0] sm:$0xff]
      %v413 = vld [vmem:[%s306 + $0x2f8] sm:$0xff]
      %v414 = vld [vmem:[%s306 + $0x300] sm:$0xff]
      %v415 = vld [vmem:[%s306 + $0x308] sm:$0xff]
      %v416 = vld [vmem:[%s306 + $0x310] sm:$0xff]
      %v417 = vld [vmem:[%s306 + $0x318] sm:$0xff]
      %v418 = vld [vmem:[%s306 + $0x320] sm:$0xff]
      %v419 = vld [vmem:[%s306 + $0x328] sm:$0xff]
      %v420 = vld [vmem:[%s306 + $0x330] sm:$0xff]
      %v421 = vld [vmem:[%s306 + $0x338] sm:$0xff]
      %v422 = vld [vmem:[%s306 + $0x340] sm:$0xff]
      %v423 = vld [vmem:[%s306 + $0x348] sm:$0xff]
      %v424 = vld [vmem:[%s306 + $0x350] sm:$0xff]
      %v425 = vld [vmem:[%s306 + $0x358] sm:$0xff]
      %v426 = vld [vmem:[%s306 + $0x360] sm:$0xff]
      %v427 = vld [vmem:[%s306 + $0x368] sm:$0xff]
      %v428 = vld [vmem:[%s306 + $0x370] sm:$0xff]
      %v429 = vld [vmem:[%s306 + $0x378] sm:$0xff]
      %v430 = vld [vmem:[%s306 + $0x380] sm:$0xff]
      %v431 = vld [vmem:[%s306 + $0x388] sm:$0xff]
      %v432 = vld [vmem:[%s306 + $0x390] sm:$0xff]
      %v433 = vld [vmem:[%s306 + $0x398] sm:$0xff]
      %v434 = vld [vmem:[%s306 + $0x3a0] sm:$0xff]
      %v435 = vld [vmem:[%s306 + $0x3a8] sm:$0xff]
      %v436 = vld [vmem:[%s306 + $0x3b0] sm:$0xff]
      %v437 = vld [vmem:[%s306 + $0x3b8] sm:$0xff]
      %v438 = vld [vmem:[%s306 + $0x3c0] sm:$0xff]
      %v439 = vld [vmem:[%s306 + $0x3c8] sm:$0xff]
      %v440 = vld [vmem:[%s306 + $0x3d0] sm:$0xff]
      %v441 = vld [vmem:[%s306 + $0x3d8] sm:$0xff]
      %v442 = vld [vmem:[%s306 + $0x3e0] sm:$0xff]
      %v443 = vld [vmem:[%s306 + $0x3e8] sm:$0xff]
      %v444 = vld [vmem:[%s306 + $0x3f0] sm:$0xff]
      %v445 = vld [vmem:[%s306 + $0x3f8] sm:$0xff]
      %v446 = vld [vmem:[%s306 + $0x400] sm:$0xff]
      %v447 = vld [vmem:[%s306 + $0x408] sm:$0xff]
      %v448 = vld [vmem:[%s306 + $0x410] sm:$0xff]
      %v449 = vld [vmem:[%s306 + $0x418] sm:$0xff]
      %v450 = vld [vmem:[%s306 + $0x420] sm:$0xff]
      %v451 = vld [vmem:[%s306 + $0x428] sm:$0xff]
      %v452 = vld [vmem:[%s306 + $0x430] sm:$0xff]
      %v453 = vld [vmem:[%s306 + $0x438] sm:$0xff]
      %v454 = vld [vmem:[%s306 + $0x440] sm:$0xff]
      %v455 = vld [vmem:[%s306 + $0x448] sm:$0xff]
      %v456 = vld [vmem:[%s306 + $0x450] sm:$0xff]
      %v457 = vld [vmem:[%s306 + $0x458] sm:$0xff]
      %v458 = vld [vmem:[%s306 + $0x460] sm:$0xff]
      %v459 = vld [vmem:[%s306 + $0x468] sm:$0xff]
      %v460 = vld [vmem:[%s306 + $0x470] sm:$0xff]
      %v461 = vld [vmem:[%s306 + $0x478] sm:$0xff]
      %v462 = vld [vmem:[%s306 + $0x480] sm:$0xff]
      %v463 = vld [vmem:[%s306 + $0x488] sm:$0xff]
      %v464 = vld [vmem:[%s306 + $0x490] sm:$0xff]
      %v465 = vld [vmem:[%s306 + $0x498] sm:$0xff]
      %v466 = vld [vmem:[%s306 + $0x4a0] sm:$0xff]
      %v467 = vld [vmem:[%s306 + $0x4a8] sm:$0xff]
      %v468 = vld [vmem:[%s306 + $0x4b0] sm:$0xff]
      %v469 = vld [vmem:[%s306 + $0x4b8] sm:$0xff]
      %v470 = vld [vmem:[%s306 + $0x4c0] sm:$0xff]
      %v471 = vld [vmem:[%s306 + $0x4c8] sm:$0xff]
      %v472 = vld [vmem:[%s306 + $0x4d0] sm:$0xff]
      %v473 = vld [vmem:[%s306 + $0x4d8] sm:$0xff]
      %v474 = vld [vmem:[%s306 + $0x4e0] sm:$0xff]
      %v475 = vld [vmem:[%s306 + $0x4e8] sm:$0xff]
      %v476 = vld [vmem:[%s306 + $0x4f0] sm:$0xff]
      %v477 = vld [vmem:[%s306 + $0x4f8] sm:$0xff]
      %v478 = vld [vmem:[%s306 + $0x500] sm:$0xff]
      %v479 = vld [vmem:[%s306 + $0x508] sm:$0xff]
      %v480 = vld [vmem:[%s306 + $0x510] sm:$0xff]
      %v481 = vld [vmem:[%s306 + $0x518] sm:$0xff]
      %v482 = vld [vmem:[%s306 + $0x520] sm:$0xff]
      %v483 = vld [vmem:[%s306 + $0x528] sm:$0xff]
      %v484 = vld [vmem:[%s306 + $0x530] sm:$0xff]
      %v485 = vld [vmem:[%s306 + $0x538] sm:$0xff]
      %v486 = vld [vmem:[%s306 + $0x540] sm:$0xff]
      %v487 = vld [vmem:[%s306 + $0x548] sm:$0xff]
      %v488 = vld [vmem:[%s306 + $0x550] sm:$0xff]
      %v489 = vld [vmem:[%s306 + $0x558] sm:$0xff]
      %v490 = vld [vmem:[%s306 + $0x560] sm:$0xff]
      %v491 = vld [vmem:[%s306 + $0x568] sm:$0xff]
      %v492 = vld [vmem:[%s306 + $0x570] sm:$0xff]
      %v493 = vld [vmem:[%s306 + $0x578] sm:$0xff]
      %v494 = vld [vmem:[%s306 + $0x580] sm:$0xff]
      %v495 = vld [vmem:[%s306 + $0x588] sm:$0xff]
      %v496 = vld [vmem:[%s306 + $0x590] sm:$0xff]
      %v497 = vld [vmem:[%s306 + $0x598] sm:$0xff]
      %v498 = vld [vmem:[%s306 + $0x5a0] sm:$0xff]
      %v499 = vld [vmem:[%s306 + $0x5a8] sm:$0xff]
      %v500 = vld [vmem:[%s306 + $0x5b0] sm:$0xff]
      %v501 = vld [vmem:[%s306 + $0x5b8] sm:$0xff]
      %v502 = vld [vmem:[%s306 + $0x5c0] sm:$0xff]
      %v503 = vld [vmem:[%s306 + $0x5c8] sm:$0xff]
      %v504 = vld [vmem:[%s306 + $0x5d0] sm:$0xff]
      %v505 = vld [vmem:[%s306 + $0x5d8] sm:$0xff]
      %v506 = vld [vmem:[%s306 + $0x5e0] sm:$0xff]
      %v507 = vld [vmem:[%s306 + $0x5e8] sm:$0xff]
      %v508 = vld [vmem:[%s306 + $0x5f0] sm:$0xff]
      %v509 = vld [vmem:[%s306 + $0x5f8] sm:$0xff]
      %v510 = vld [vmem:[%s306 + $0x600] sm:$0xff]
      %v511 = vld [vmem:[%s306 + $0x608] sm:$0xff]
      %v512 = vld [vmem:[%s306 + $0x610] sm:$0xff]
      %v513 = vld [vmem:[%s306 + $0x618] sm:$0xff]
      %v514 = vld [vmem:[%s306 + $0x620] sm:$0xff]
      %v515 = vld [vmem:[%s306 + $0x628] sm:$0xff]
      %v516 = vld [vmem:[%s306 + $0x630] sm:$0xff]
      %v517 = vld [vmem:[%s306 + $0x638] sm:$0xff]
      %v518 = vld [vmem:[%s306 + $0x640] sm:$0xff]
      %v519 = vld [vmem:[%s306 + $0x648] sm:$0xff]
      %v520 = vld [vmem:[%s306 + $0x650] sm:$0xff]
      %v521 = vld [vmem:[%s306 + $0x658] sm:$0xff]
      %v522 = vld [vmem:[%s306 + $0x660] sm:$0xff]
      %v523 = vld [vmem:[%s306 + $0x668] sm:$0xff]
      %v524 = vld [vmem:[%s306 + $0x670] sm:$0xff]
      %v525 = vld [vmem:[%s306 + $0x678] sm:$0xff]
      %v526 = vld [vmem:[%s306 + $0x680] sm:$0xff]
      %v527 = vld [vmem:[%s306 + $0x688] sm:$0xff]
      %v528 = vld [vmem:[%s306 + $0x690] sm:$0xff]
      %v529 = vld [vmem:[%s306 + $0x698] sm:$0xff]
      %v530 = vld [vmem:[%s306 + $0x6a0] sm:$0xff]
      %v531 = vld [vmem:[%s306 + $0x6a8] sm:$0xff]
      %v532 = vld [vmem:[%s306 + $0x6b0] sm:$0xff]
      %v533 = vld [vmem:[%s306 + $0x6b8] sm:$0xff]
      %v534 = vld [vmem:[%s306 + $0x6c0] sm:$0xff]
      %v535 = vld [vmem:[%s306 + $0x6c8] sm:$0xff]
      %v536 = vld [vmem:[%s306 + $0x6d0] sm:$0xff]
      %v537 = vld [vmem:[%s306 + $0x6d8] sm:$0xff]
      %v538 = vld [vmem:[%s306 + $0x6e0] sm:$0xff]
      %v539 = vld [vmem:[%s306 + $0x6e8] sm:$0xff]
      %v540 = vld [vmem:[%s306 + $0x6f0] sm:$0xff]
      %v541 = vld [vmem:[%s306 + $0x6f8] sm:$0xff]
      %v542 = vld [vmem:[%s306 + $0x700] sm:$0xff]
      %v543 = vld [vmem:[%s306 + $0x708] sm:$0xff]
      %v544 = vld [vmem:[%s306 + $0x710] sm:$0xff]
      %v545 = vld [vmem:[%s306 + $0x718] sm:$0xff]
      %v546 = vld [vmem:[%s306 + $0x720] sm:$0xff]
      %v547 = vld [vmem:[%s306 + $0x728] sm:$0xff]
      %v548 = vld [vmem:[%s306 + $0x730] sm:$0xff]
      %v549 = vld [vmem:[%s306 + $0x738] sm:$0xff]
      %v550 = vld [vmem:[%s306 + $0x740] sm:$0xff]
      %v551 = vld [vmem:[%s306 + $0x748] sm:$0xff]
      %v552 = vld [vmem:[%s306 + $0x750] sm:$0xff]
      %v553 = vld [vmem:[%s306 + $0x758] sm:$0xff]
      %v554 = vld [vmem:[%s306 + $0x760] sm:$0xff]
      %v555 = vld [vmem:[%s306 + $0x768] sm:$0xff]
      %v556 = vld [vmem:[%s306 + $0x770] sm:$0xff]
      %v557 = vld [vmem:[%s306 + $0x778] sm:$0xff]
      %v558 = vld [vmem:[%s306 + $0x780] sm:$0xff]
      %v559 = vld [vmem:[%s306 + $0x788] sm:$0xff]
      %v560 = vld [vmem:[%s306 + $0x790] sm:$0xff]
      %v561 = vld [vmem:[%s306 + $0x798] sm:$0xff]
      %v562 = vld [vmem:[%s306 + $0x7a0] sm:$0xff]
      %v563 = vld [vmem:[%s306 + $0x7a8] sm:$0xff]
      %v564 = vld [vmem:[%s306 + $0x7b0] sm:$0xff]
      %v565 = vld [vmem:[%s306 + $0x7b8] sm:$0xff]
      %v566 = vld [vmem:[%s306 + $0x7c0] sm:$0xff]
      %v567 = vld [vmem:[%s306 + $0x7c8] sm:$0xff]
      %v568 = vld [vmem:[%s306 + $0x7d0] sm:$0xff]
      %v569 = vld [vmem:[%s306 + $0x7d8] sm:$0xff]
      %v570 = vld [vmem:[%s306 + $0x7e0] sm:$0xff]
      %v571 = vld [vmem:[%s306 + $0x7e8] sm:$0xff]
      %v572 = vld [vmem:[%s306 + $0x7f0] sm:$0xff]
      %v573 = vld [vmem:[%s306 + $0x7f8] sm:$0xff]
      %vm574 = vcmp.gt.f32.partialorder %v318, 0.0
      %vm575 = vcmp.gt.f32.partialorder %v319, 0.0
      %vm576 = vcmp.gt.f32.partialorder %v320, 0.0
      %vm577 = vcmp.gt.f32.partialorder %v321, 0.0
      %vm578 = vcmp.gt.f32.partialorder %v322, 0.0
      %vm579 = vcmp.gt.f32.partialorder %v323, 0.0
      %vm580 = vcmp.gt.f32.partialorder %v324, 0.0
      %vm581 = vcmp.gt.f32.partialorder %v325, 0.0
      %vm582 = vcmp.gt.f32.partialorder %v326, 0.0
      %vm583 = vcmp.gt.f32.partialorder %v327, 0.0
      %vm584 = vcmp.gt.f32.partialorder %v328, 0.0
      %vm585 = vcmp.gt.f32.partialorder %v329, 0.0
      %vm586 = vcmp.gt.f32.partialorder %v330, 0.0
      %vm587 = vcmp.gt.f32.partialorder %v331, 0.0
      %vm588 = vcmp.gt.f32.partialorder %v332, 0.0
      %vm589 = vcmp.gt.f32.partialorder %v333, 0.0
      %vm590 = vcmp.gt.f32.partialorder %v334, 0.0
      %vm591 = vcmp.gt.f32.partialorder %v335, 0.0
      %vm592 = vcmp.gt.f32.partialorder %v336, 0.0
      %vm593 = vcmp.gt.f32.partialorder %v337, 0.0
      %vm594 = vcmp.gt.f32.partialorder %v338, 0.0
      %vm595 = vcmp.gt.f32.partialorder %v339, 0.0
      %vm596 = vcmp.gt.f32.partialorder %v340, 0.0
      %vm597 = vcmp.gt.f32.partialorder %v341, 0.0
      %vm598 = vcmp.gt.f32.partialorder %v342, 0.0
      %vm599 = vcmp.gt.f32.partialorder %v343, 0.0
      %vm600 = vcmp.gt.f32.partialorder %v344, 0.0
      %vm601 = vcmp.gt.f32.partialorder %v345, 0.0
      %vm602 = vcmp.gt.f32.partialorder %v346, 0.0
      %vm603 = vcmp.gt.f32.partialorder %v347, 0.0
      %vm604 = vcmp.gt.f32.partialorder %v348, 0.0
      %vm605 = vcmp.gt.f32.partialorder %v349, 0.0
      %vm606 = vcmp.gt.f32.partialorder %v350, 0.0
      %vm607 = vcmp.gt.f32.partialorder %v351, 0.0
      %vm608 = vcmp.gt.f32.partialorder %v352, 0.0
      %vm609 = vcmp.gt.f32.partialorder %v353, 0.0
      %vm610 = vcmp.gt.f32.partialorder %v354, 0.0
      %vm611 = vcmp.gt.f32.partialorder %v355, 0.0
      %vm612 = vcmp.gt.f32.partialorder %v356, 0.0
      %vm613 = vcmp.gt.f32.partialorder %v357, 0.0
      %vm614 = vcmp.gt.f32.partialorder %v358, 0.0
      %vm615 = vcmp.gt.f32.partialorder %v359, 0.0
      %vm616 = vcmp.gt.f32.partialorder %v360, 0.0
      %vm617 = vcmp.gt.f32.partialorder %v361, 0.0
      %vm618 = vcmp.gt.f32.partialorder %v362, 0.0
      %vm619 = vcmp.gt.f32.partialorder %v363, 0.0
      %vm620 = vcmp.gt.f32.partialorder %v364, 0.0
      %vm621 = vcmp.gt.f32.partialorder %v365, 0.0
      %vm622 = vcmp.gt.f32.partialorder %v366, 0.0
      %vm623 = vcmp.gt.f32.partialorder %v367, 0.0
      %vm624 = vcmp.gt.f32.partialorder %v368, 0.0
      %vm625 = vcmp.gt.f32.partialorder %v369, 0.0
      %vm626 = vcmp.gt.f32.partialorder %v370, 0.0
      %vm627 = vcmp.gt.f32.partialorder %v371, 0.0
      %vm628 = vcmp.gt.f32.partialorder %v372, 0.0
      %vm629 = vcmp.gt.f32.partialorder %v373, 0.0
      %vm630 = vcmp.gt.f32.partialorder %v374, 0.0
      %vm631 = vcmp.gt.f32.partialorder %v375, 0.0
      %vm632 = vcmp.gt.f32.partialorder %v376, 0.0
      %vm633 = vcmp.gt.f32.partialorder %v377, 0.0
      %vm634 = vcmp.gt.f32.partialorder %v378, 0.0
      %vm635 = vcmp.gt.f32.partialorder %v379, 0.0
      %vm636 = vcmp.gt.f32.partialorder %v380, 0.0
      %vm637 = vcmp.gt.f32.partialorder %v381, 0.0
      %vm638 = vcmp.gt.f32.partialorder %v382, 0.0
      %vm639 = vcmp.gt.f32.partialorder %v383, 0.0
      %vm640 = vcmp.gt.f32.partialorder %v384, 0.0
      %vm641 = vcmp.gt.f32.partialorder %v385, 0.0
      %vm642 = vcmp.gt.f32.partialorder %v386, 0.0
      %vm643 = vcmp.gt.f32.partialorder %v387, 0.0
      %vm644 = vcmp.gt.f32.partialorder %v388, 0.0
      %vm645 = vcmp.gt.f32.partialorder %v389, 0.0
      %vm646 = vcmp.gt.f32.partialorder %v390, 0.0
      %vm647 = vcmp.gt.f32.partialorder %v391, 0.0
      %vm648 = vcmp.gt.f32.partialorder %v392, 0.0
      %vm649 = vcmp.gt.f32.partialorder %v393, 0.0
      %vm650 = vcmp.gt.f32.partialorder %v394, 0.0
      %vm651 = vcmp.gt.f32.partialorder %v395, 0.0
      %vm652 = vcmp.gt.f32.partialorder %v396, 0.0
      %vm653 = vcmp.gt.f32.partialorder %v397, 0.0
      %vm654 = vcmp.gt.f32.partialorder %v398, 0.0
      %vm655 = vcmp.gt.f32.partialorder %v399, 0.0
      %vm656 = vcmp.gt.f32.partialorder %v400, 0.0
      %vm657 = vcmp.gt.f32.partialorder %v401, 0.0
      %vm658 = vcmp.gt.f32.partialorder %v402, 0.0
      %vm659 = vcmp.gt.f32.partialorder %v403, 0.0
      %vm660 = vcmp.gt.f32.partialorder %v404, 0.0
      %vm661 = vcmp.gt.f32.partialorder %v405, 0.0
      %vm662 = vcmp.gt.f32.partialorder %v406, 0.0
      %vm663 = vcmp.gt.f32.partialorder %v407, 0.0
      %vm664 = vcmp.gt.f32.partialorder %v408, 0.0
      %vm665 = vcmp.gt.f32.partialorder %v409, 0.0
      %vm666 = vcmp.gt.f32.partialorder %v410, 0.0
      %vm667 = vcmp.gt.f32.partialorder %v411, 0.0
      %vm668 = vcmp.gt.f32.partialorder %v412, 0.0
      %vm669 = vcmp.gt.f32.partialorder %v413, 0.0
      %vm670 = vcmp.gt.f32.partialorder %v414, 0.0
      %vm671 = vcmp.gt.f32.partialorder %v415, 0.0
      %vm672 = vcmp.gt.f32.partialorder %v416, 0.0
      %vm673 = vcmp.gt.f32.partialorder %v417, 0.0
      %vm674 = vcmp.gt.f32.partialorder %v418, 0.0
      %vm675 = vcmp.gt.f32.partialorder %v419, 0.0
      %vm676 = vcmp.gt.f32.partialorder %v420, 0.0
      %vm677 = vcmp.gt.f32.partialorder %v421, 0.0
      %vm678 = vcmp.gt.f32.partialorder %v422, 0.0
      %vm679 = vcmp.gt.f32.partialorder %v423, 0.0
      %vm680 = vcmp.gt.f32.partialorder %v424, 0.0
      %vm681 = vcmp.gt.f32.partialorder %v425, 0.0
      %vm682 = vcmp.gt.f32.partialorder %v426, 0.0
      %vm683 = vcmp.gt.f32.partialorder %v427, 0.0
      %vm684 = vcmp.gt.f32.partialorder %v428, 0.0
      %vm685 = vcmp.gt.f32.partialorder %v429, 0.0
      %vm686 = vcmp.gt.f32.partialorder %v430, 0.0
      %vm687 = vcmp.gt.f32.partialorder %v431, 0.0
      %vm688 = vcmp.gt.f32.partialorder %v432, 0.0
      %vm689 = vcmp.gt.f32.partialorder %v433, 0.0
      %vm690 = vcmp.gt.f32.partialorder %v434, 0.0
      %vm691 = vcmp.gt.f32.partialorder %v435, 0.0
      %vm692 = vcmp.gt.f32.partialorder %v436, 0.0
      %vm693 = vcmp.gt.f32.partialorder %v437, 0.0
      %vm694 = vcmp.gt.f32.partialorder %v438, 0.0
      %vm695 = vcmp.gt.f32.partialorder %v439, 0.0
      %vm696 = vcmp.gt.f32.partialorder %v440, 0.0
      %vm697 = vcmp.gt.f32.partialorder %v441, 0.0
      %vm698 = vcmp.gt.f32.partialorder %v442, 0.0
      %vm699 = vcmp.gt.f32.partialorder %v443, 0.0
      %vm700 = vcmp.gt.f32.partialorder %v444, 0.0
      %vm701 = vcmp.gt.f32.partialorder %v445, 0.0
      %vm702 = vcmp.gt.f32.partialorder %v446, 0.0
      %vm703 = vcmp.gt.f32.partialorder %v447, 0.0
      %vm704 = vcmp.gt.f32.partialorder %v448, 0.0
      %vm705 = vcmp.gt.f32.partialorder %v449, 0.0
      %vm706 = vcmp.gt.f32.partialorder %v450, 0.0
      %vm707 = vcmp.gt.f32.partialorder %v451, 0.0
      %vm708 = vcmp.gt.f32.partialorder %v452, 0.0
      %vm709 = vcmp.gt.f32.partialorder %v453, 0.0
      %vm710 = vcmp.gt.f32.partialorder %v454, 0.0
      %vm711 = vcmp.gt.f32.partialorder %v455, 0.0
      %vm712 = vcmp.gt.f32.partialorder %v456, 0.0
      %vm713 = vcmp.gt.f32.partialorder %v457, 0.0
      %vm714 = vcmp.gt.f32.partialorder %v458, 0.0
      %vm715 = vcmp.gt.f32.partialorder %v459, 0.0
      %vm716 = vcmp.gt.f32.partialorder %v460, 0.0
      %vm717 = vcmp.gt.f32.partialorder %v461, 0.0
      %vm718 = vcmp.gt.f32.partialorder %v462, 0.0
      %vm719 = vcmp.gt.f32.partialorder %v463, 0.0
      %vm720 = vcmp.gt.f32.partialorder %v464, 0.0
      %vm721 = vcmp.gt.f32.partialorder %v465, 0.0
      %vm722 = vcmp.gt.f32.partialorder %v466, 0.0
      %vm723 = vcmp.gt.f32.partialorder %v467, 0.0
      %vm724 = vcmp.gt.f32.partialorder %v468, 0.0
      %vm725 = vcmp.gt.f32.partialorder %v469, 0.0
      %vm726 = vcmp.gt.f32.partialorder %v470, 0.0
      %vm727 = vcmp.gt.f32.partialorder %v471, 0.0
      %vm728 = vcmp.gt.f32.partialorder %v472, 0.0
      %vm729 = vcmp.gt.f32.partialorder %v473, 0.0
      %vm730 = vcmp.gt.f32.partialorder %v474, 0.0
      %vm731 = vcmp.gt.f32.partialorder %v475, 0.0
      %vm732 = vcmp.gt.f32.partialorder %v476, 0.0
      %vm733 = vcmp.gt.f32.partialorder %v477, 0.0
      %vm734 = vcmp.gt.f32.partialorder %v478, 0.0
      %vm735 = vcmp.gt.f32.partialorder %v479, 0.0
      %vm736 = vcmp.gt.f32.partialorder %v480, 0.0
      %vm737 = vcmp.gt.f32.partialorder %v481, 0.0
      %vm738 = vcmp.gt.f32.partialorder %v482, 0.0
      %vm739 = vcmp.gt.f32.partialorder %v483, 0.0
      %vm740 = vcmp.gt.f32.partialorder %v484, 0.0
      %vm741 = vcmp.gt.f32.partialorder %v485, 0.0
      %vm742 = vcmp.gt.f32.partialorder %v486, 0.0
      %vm743 = vcmp.gt.f32.partialorder %v487, 0.0
      %vm744 = vcmp.gt.f32.partialorder %v488, 0.0
      %vm745 = vcmp.gt.f32.partialorder %v489, 0.0
      %vm746 = vcmp.gt.f32.partialorder %v490, 0.0
      %vm747 = vcmp.gt.f32.partialorder %v491, 0.0
      %vm748 = vcmp.gt.f32.partialorder %v492, 0.0
      %vm749 = vcmp.gt.f32.partialorder %v493, 0.0
      %vm750 = vcmp.gt.f32.partialorder %v494, 0.0
      %vm751 = vcmp.gt.f32.partialorder %v495, 0.0
      %vm752 = vcmp.gt.f32.partialorder %v496, 0.0
      %vm753 = vcmp.gt.f32.partialorder %v497, 0.0
      %vm754 = vcmp.gt.f32.partialorder %v498, 0.0
      %vm755 = vcmp.gt.f32.partialorder %v499, 0.0
      %vm756 = vcmp.gt.f32.partialorder %v500, 0.0
      %vm757 = vcmp.gt.f32.partialorder %v501, 0.0
      %vm758 = vcmp.gt.f32.partialorder %v502, 0.0
      %vm759 = vcmp.gt.f32.partialorder %v503, 0.0
      %vm760 = vcmp.gt.f32.partialorder %v504, 0.0
      %vm761 = vcmp.gt.f32.partialorder %v505, 0.0
      %vm762 = vcmp.gt.f32.partialorder %v506, 0.0
      %vm763 = vcmp.gt.f32.partialorder %v507, 0.0
      %vm764 = vcmp.gt.f32.partialorder %v508, 0.0
      %vm765 = vcmp.gt.f32.partialorder %v509, 0.0
      %vm766 = vcmp.gt.f32.partialorder %v510, 0.0
      %vm767 = vcmp.gt.f32.partialorder %v511, 0.0
      %vm768 = vcmp.gt.f32.partialorder %v512, 0.0
      %vm769 = vcmp.gt.f32.partialorder %v513, 0.0
      %vm770 = vcmp.gt.f32.partialorder %v514, 0.0
      %vm771 = vcmp.gt.f32.partialorder %v515, 0.0
      %vm772 = vcmp.gt.f32.partialorder %v516, 0.0
      %vm773 = vcmp.gt.f32.partialorder %v517, 0.0
      %vm774 = vcmp.gt.f32.partialorder %v518, 0.0
      %vm775 = vcmp.gt.f32.partialorder %v519, 0.0
      %vm776 = vcmp.gt.f32.partialorder %v520, 0.0
      %vm777 = vcmp.gt.f32.partialorder %v521, 0.0
      %vm778 = vcmp.gt.f32.partialorder %v522, 0.0
      %vm779 = vcmp.gt.f32.partialorder %v523, 0.0
      %vm780 = vcmp.gt.f32.partialorder %v524, 0.0
      %vm781 = vcmp.gt.f32.partialorder %v525, 0.0
      %vm782 = vcmp.gt.f32.partialorder %v526, 0.0
      %vm783 = vcmp.gt.f32.partialorder %v527, 0.0
      %vm784 = vcmp.gt.f32.partialorder %v528, 0.0
      %vm785 = vcmp.gt.f32.partialorder %v529, 0.0
      %vm786 = vcmp.gt.f32.partialorder %v530, 0.0
      %vm787 = vcmp.gt.f32.partialorder %v531, 0.0
      %vm788 = vcmp.gt.f32.partialorder %v532, 0.0
      %vm789 = vcmp.gt.f32.partialorder %v533, 0.0
      %vm790 = vcmp.gt.f32.partialorder %v534, 0.0
      %vm791 = vcmp.gt.f32.partialorder %v535, 0.0
      %vm792 = vcmp.gt.f32.partialorder %v536, 0.0
      %vm793 = vcmp.gt.f32.partialorder %v537, 0.0
      %vm794 = vcmp.gt.f32.partialorder %v538, 0.0
      %vm795 = vcmp.gt.f32.partialorder %v539, 0.0
      %vm796 = vcmp.gt.f32.partialorder %v540, 0.0
      %vm797 = vcmp.gt.f32.partialorder %v541, 0.0
      %vm798 = vcmp.gt.f32.partialorder %v542, 0.0
      %vm799 = vcmp.gt.f32.partialorder %v543, 0.0
      %vm800 = vcmp.gt.f32.partialorder %v544, 0.0
      %vm801 = vcmp.gt.f32.partialorder %v545, 0.0
      %vm802 = vcmp.gt.f32.partialorder %v546, 0.0
      %vm803 = vcmp.gt.f32.partialorder %v547, 0.0
      %vm804 = vcmp.gt.f32.partialorder %v548, 0.0
      %vm805 = vcmp.gt.f32.partialorder %v549, 0.0
      %vm806 = vcmp.gt.f32.partialorder %v550, 0.0
      %vm807 = vcmp.gt.f32.partialorder %v551, 0.0
      %vm808 = vcmp.gt.f32.partialorder %v552, 0.0
      %vm809 = vcmp.gt.f32.partialorder %v553, 0.0
      %vm810 = vcmp.gt.f32.partialorder %v554, 0.0
      %vm811 = vcmp.gt.f32.partialorder %v555, 0.0
      %vm812 = vcmp.gt.f32.partialorder %v556, 0.0
      %vm813 = vcmp.gt.f32.partialorder %v557, 0.0
      %vm814 = vcmp.gt.f32.partialorder %v558, 0.0
      %vm815 = vcmp.gt.f32.partialorder %v559, 0.0
      %vm816 = vcmp.gt.f32.partialorder %v560, 0.0
      %vm817 = vcmp.gt.f32.partialorder %v561, 0.0
      %vm818 = vcmp.gt.f32.partialorder %v562, 0.0
      %vm819 = vcmp.gt.f32.partialorder %v563, 0.0
      %vm820 = vcmp.gt.f32.partialorder %v564, 0.0
      %vm821 = vcmp.gt.f32.partialorder %v565, 0.0
      %vm822 = vcmp.gt.f32.partialorder %v566, 0.0
      %vm823 = vcmp.gt.f32.partialorder %v567, 0.0
      %vm824 = vcmp.gt.f32.partialorder %v568, 0.0
      %vm825 = vcmp.gt.f32.partialorder %v569, 0.0
      %vm826 = vcmp.gt.f32.partialorder %v570, 0.0
      %vm827 = vcmp.gt.f32.partialorder %v571, 0.0
      %vm828 = vcmp.gt.f32.partialorder %v572, 0.0
      %vm829 = vcmp.gt.f32.partialorder %v573, 0.0
      %v830 = vmul.f32 %v318, 0.2
      %v831 = vmul.f32 %v319, 0.2
      %v832 = vmul.f32 %v320, 0.2
      %v833 = vmul.f32 %v321, 0.2
      %v834 = vmul.f32 %v322, 0.2
      %v835 = vmul.f32 %v323, 0.2
      %v836 = vmul.f32 %v324, 0.2
      %v837 = vmul.f32 %v325, 0.2
      %v838 = vmul.f32 %v326, 0.2
      %v839 = vmul.f32 %v327, 0.2
      %v840 = vmul.f32 %v328, 0.2
      %v841 = vmul.f32 %v329, 0.2
      %v842 = vmul.f32 %v330, 0.2
      %v843 = vmul.f32 %v331, 0.2
      %v844 = vmul.f32 %v332, 0.2
      %v845 = vmul.f32 %v333, 0.2
      %v846 = vmul.f32 %v334, 0.2
      %v847 = vmul.f32 %v335, 0.2
      %v848 = vmul.f32 %v336, 0.2
      %v849 = vmul.f32 %v337, 0.2
      %v850 = vmul.f32 %v338, 0.2
      %v851 = vmul.f32 %v339, 0.2
      %v852 = vmul.f32 %v340, 0.2
      %v853 = vmul.f32 %v341, 0.2
      %v854 = vmul.f32 %v342, 0.2
      %v855 = vmul.f32 %v343, 0.2
      %v856 = vmul.f32 %v344, 0.2
      %v857 = vmul.f32 %v345, 0.2
      %v858 = vmul.f32 %v346, 0.2
      %v859 = vmul.f32 %v347, 0.2
      %v860 = vmul.f32 %v348, 0.2
      %v861 = vmul.f32 %v349, 0.2
      %v862 = vmul.f32 %v350, 0.2
      %v863 = vmul.f32 %v351, 0.2
      %v864 = vmul.f32 %v352, 0.2
      %v865 = vmul.f32 %v353, 0.2
      %v866 = vmul.f32 %v354, 0.2
      %v867 = vmul.f32 %v355, 0.2
      %v868 = vmul.f32 %v356, 0.2
      %v869 = vmul.f32 %v357, 0.2
      %v870 = vmul.f32 %v358, 0.2
      %v871 = vmul.f32 %v359, 0.2
      %v872 = vmul.f32 %v360, 0.2
      %v873 = vmul.f32 %v361, 0.2
      %v874 = vmul.f32 %v362, 0.2
      %v875 = vmul.f32 %v363, 0.2
      %v876 = vmul.f32 %v364, 0.2
      %v877 = vmul.f32 %v365, 0.2
      %v878 = vmul.f32 %v366, 0.2
      %v879 = vmul.f32 %v367, 0.2
      %v880 = vmul.f32 %v368, 0.2
      %v881 = vmul.f32 %v369, 0.2
      %v882 = vmul.f32 %v370, 0.2
      %v883 = vmul.f32 %v371, 0.2
      %v884 = vmul.f32 %v372, 0.2
      %v885 = vmul.f32 %v373, 0.2
      %v886 = vmul.f32 %v374, 0.2
      %v887 = vmul.f32 %v375, 0.2
      %v888 = vmul.f32 %v376, 0.2
      %v889 = vmul.f32 %v377, 0.2
      %v890 = vmul.f32 %v378, 0.2
      %v891 = vmul.f32 %v379, 0.2
      %v892 = vmul.f32 %v380, 0.2
      %v893 = vmul.f32 %v381, 0.2
      %v894 = vmul.f32 %v382, 0.2
      %v895 = vmul.f32 %v383, 0.2
      %v896 = vmul.f32 %v384, 0.2
      %v897 = vmul.f32 %v385, 0.2
      %v898 = vmul.f32 %v386, 0.2
      %v899 = vmul.f32 %v387, 0.2
      %v900 = vmul.f32 %v388, 0.2
      %v901 = vmul.f32 %v389, 0.2
      %v902 = vmul.f32 %v390, 0.2
      %v903 = vmul.f32 %v391, 0.2
      %v904 = vmul.f32 %v392, 0.2
      %v905 = vmul.f32 %v393, 0.2
      %v906 = vmul.f32 %v394, 0.2
      %v907 = vmul.f32 %v395, 0.2
      %v908 = vmul.f32 %v396, 0.2
      %v909 = vmul.f32 %v397, 0.2
      %v910 = vmul.f32 %v398, 0.2
      %v911 = vmul.f32 %v399, 0.2
      %v912 = vmul.f32 %v400, 0.2
      %v913 = vmul.f32 %v401, 0.2
      %v914 = vmul.f32 %v402, 0.2
      %v915 = vmul.f32 %v403, 0.2
      %v916 = vmul.f32 %v404, 0.2
      %v917 = vmul.f32 %v405, 0.2
      %v918 = vmul.f32 %v406, 0.2
      %v919 = vmul.f32 %v407, 0.2
      %v920 = vmul.f32 %v408, 0.2
      %v921 = vmul.f32 %v409, 0.2
      %v922 = vmul.f32 %v410, 0.2
      %v923 = vmul.f32 %v411, 0.2
      %v924 = vmul.f32 %v412, 0.2
      %v925 = vmul.f32 %v413, 0.2
      %v926 = vmul.f32 %v414, 0.2
      %v927 = vmul.f32 %v415, 0.2
      %v928 = vmul.f32 %v416, 0.2
      %v929 = vmul.f32 %v417, 0.2
      %v930 = vmul.f32 %v418, 0.2
      %v931 = vmul.f32 %v419, 0.2
      %v932 = vmul.f32 %v420, 0.2
      %v933 = vmul.f32 %v421, 0.2
      %v934 = vmul.f32 %v422, 0.2
      %v935 = vmul.f32 %v423, 0.2
      %v936 = vmul.f32 %v424, 0.2
      %v937 = vmul.f32 %v425, 0.2
      %v938 = vmul.f32 %v426, 0.2
      %v939 = vmul.f32 %v427, 0.2
      %v940 = vmul.f32 %v428, 0.2
      %v941 = vmul.f32 %v429, 0.2
      %v942 = vmul.f32 %v430, 0.2
      %v943 = vmul.f32 %v431, 0.2
      %v944 = vmul.f32 %v432, 0.2
      %v945 = vmul.f32 %v433, 0.2
      %v946 = vmul.f32 %v434, 0.2
      %v947 = vmul.f32 %v435, 0.2
      %v948 = vmul.f32 %v436, 0.2
      %v949 = vmul.f32 %v437, 0.2
      %v950 = vmul.f32 %v438, 0.2
      %v951 = vmul.f32 %v439, 0.2
      %v952 = vmul.f32 %v440, 0.2
      %v953 = vmul.f32 %v441, 0.2
      %v954 = vmul.f32 %v442, 0.2
      %v955 = vmul.f32 %v443, 0.2
      %v956 = vmul.f32 %v444, 0.2
      %v957 = vmul.f32 %v445, 0.2
      %v958 = vmul.f32 %v446, 0.2
      %v959 = vmul.f32 %v447, 0.2
      %v960 = vmul.f32 %v448, 0.2
      %v961 = vmul.f32 %v449, 0.2
      %v962 = vmul.f32 %v450, 0.2
      %v963 = vmul.f32 %v451, 0.2
      %v964 = vmul.f32 %v452, 0.2
      %v965 = vmul.f32 %v453, 0.2
      %v966 = vmul.f32 %v454, 0.2
      %v967 = vmul.f32 %v455, 0.2
      %v968 = vmul.f32 %v456, 0.2
      %v969 = vmul.f32 %v457, 0.2
      %v970 = vmul.f32 %v458, 0.2
      %v971 = vmul.f32 %v459, 0.2
      %v972 = vmul.f32 %v460, 0.2
      %v973 = vmul.f32 %v461, 0.2
      %v974 = vmul.f32 %v462, 0.2
      %v975 = vmul.f32 %v463, 0.2
      %v976 = vmul.f32 %v464, 0.2
      %v977 = vmul.f32 %v465, 0.2
      %v978 = vmul.f32 %v466, 0.2
      %v979 = vmul.f32 %v467, 0.2
      %v980 = vmul.f32 %v468, 0.2
      %v981 = vmul.f32 %v469, 0.2
      %v982 = vmul.f32 %v470, 0.2
      %v983 = vmul.f32 %v471, 0.2
      %v984 = vmul.f32 %v472, 0.2
      %v985 = vmul.f32 %v473, 0.2
      %v986 = vmul.f32 %v474, 0.2
      %v987 = vmul.f32 %v475, 0.2
      %v988 = vmul.f32 %v476, 0.2
      %v989 = vmul.f32 %v477, 0.2
      %v990 = vmul.f32 %v478, 0.2
      %v991 = vmul.f32 %v479, 0.2
      %v992 = vmul.f32 %v480, 0.2
      %v993 = vmul.f32 %v481, 0.2
      %v994 = vmul.f32 %v482, 0.2
      %v995 = vmul.f32 %v483, 0.2
      %v996 = vmul.f32 %v484, 0.2
      %v997 = vmul.f32 %v485, 0.2
      %v998 = vmul.f32 %v486, 0.2
      %v999 = vmul.f32 %v487, 0.2
      %v1000 = vmul.f32 %v488, 0.2
      %v1001 = vmul.f32 %v489, 0.2
      %v1002 = vmul.f32 %v490, 0.2
      %v1003 = vmul.f32 %v491, 0.2
      %v1004 = vmul.f32 %v492, 0.2
      %v1005 = vmul.f32 %v493, 0.2
      %v1006 = vmul.f32 %v494, 0.2
      %v1007 = vmul.f32 %v495, 0.2
      %v1008 = vmul.f32 %v496, 0.2
      %v1009 = vmul.f32 %v497, 0.2
      %v1010 = vmul.f32 %v498, 0.2
      %v1011 = vmul.f32 %v499, 0.2
      %v1012 = vmul.f32 %v500, 0.2
      %v1013 = vmul.f32 %v501, 0.2
      %v1014 = vmul.f32 %v502, 0.2
      %v1015 = vmul.f32 %v503, 0.2
      %v1016 = vmul.f32 %v504, 0.2
      %v1017 = vmul.f32 %v505, 0.2
      %v1018 = vmul.f32 %v506, 0.2
      %v1019 = vmul.f32 %v507, 0.2
      %v1020 = vmul.f32 %v508, 0.2
      %v1021 = vmul.f32 %v509, 0.2
      %v1022 = vmul.f32 %v510, 0.2
      %v1023 = vmul.f32 %v511, 0.2
      %v1024 = vmul.f32 %v512, 0.2
      %v1025 = vmul.f32 %v513, 0.2
      %v1026 = vmul.f32 %v514, 0.2
      %v1027 = vmul.f32 %v515, 0.2
      %v1028 = vmul.f32 %v516, 0.2
      %v1029 = vmul.f32 %v517, 0.2
      %v1030 = vmul.f32 %v518, 0.2
      %v1031 = vmul.f32 %v519, 0.2
      %v1032 = vmul.f32 %v520, 0.2
      %v1033 = vmul.f32 %v521, 0.2
      %v1034 = vmul.f32 %v522, 0.2
      %v1035 = vmul.f32 %v523, 0.2
      %v1036 = vmul.f32 %v524, 0.2
      %v1037 = vmul.f32 %v525, 0.2
      %v1038 = vmul.f32 %v526, 0.2
      %v1039 = vmul.f32 %v527, 0.2
      %v1040 = vmul.f32 %v528, 0.2
      %v1041 = vmul.f32 %v529, 0.2
      %v1042 = vmul.f32 %v530, 0.2
      %v1043 = vmul.f32 %v531, 0.2
      %v1044 = vmul.f32 %v532, 0.2
      %v1045 = vmul.f32 %v533, 0.2
      %v1046 = vmul.f32 %v534, 0.2
      %v1047 = vmul.f32 %v535, 0.2
      %v1048 = vmul.f32 %v536, 0.2
      %v1049 = vmul.f32 %v537, 0.2
      %v1050 = vmul.f32 %v538, 0.2
      %v1051 = vmul.f32 %v539, 0.2
      %v1052 = vmul.f32 %v540, 0.2
      %v1053 = vmul.f32 %v541, 0.2
      %v1054 = vmul.f32 %v542, 0.2
      %v1055 = vmul.f32 %v543, 0.2
      %v1056 = vmul.f32 %v544, 0.2
      %v1057 = vmul.f32 %v545, 0.2
      %v1058 = vmul.f32 %v546, 0.2
      %v1059 = vmul.f32 %v547, 0.2
      %v1060 = vmul.f32 %v548, 0.2
      %v1061 = vmul.f32 %v549, 0.2
      %v1062 = vmul.f32 %v550, 0.2
      %v1063 = vmul.f32 %v551, 0.2
      %v1064 = vmul.f32 %v552, 0.2
      %v1065 = vmul.f32 %v553, 0.2
      %v1066 = vmul.f32 %v554, 0.2
      %v1067 = vmul.f32 %v555, 0.2
      %v1068 = vmul.f32 %v556, 0.2
      %v1069 = vmul.f32 %v557, 0.2
      %v1070 = vmul.f32 %v558, 0.2
      %v1071 = vmul.f32 %v559, 0.2
      %v1072 = vmul.f32 %v560, 0.2
      %v1073 = vmul.f32 %v561, 0.2
      %v1074 = vmul.f32 %v562, 0.2
      %v1075 = vmul.f32 %v563, 0.2
      %v1076 = vmul.f32 %v564, 0.2
      %v1077 = vmul.f32 %v565, 0.2
      %v1078 = vmul.f32 %v566, 0.2
      %v1079 = vmul.f32 %v567, 0.2
      %v1080 = vmul.f32 %v568, 0.2
      %v1081 = vmul.f32 %v569, 0.2
      %v1082 = vmul.f32 %v570, 0.2
      %v1083 = vmul.f32 %v571, 0.2
      %v1084 = vmul.f32 %v572, 0.2
      %v1085 = vmul.f32 %v573, 0.2
      %v1086 = vsel %vm574, %v318, %v830
      %v1087 = vsel %vm575, %v319, %v831
      %v1088 = vsel %vm576, %v320, %v832
      %v1089 = vsel %vm577, %v321, %v833
      %v1090 = vsel %vm578, %v322, %v834
      %v1091 = vsel %vm579, %v323, %v835
      %v1092 = vsel %vm580, %v324, %v836
      %v1093 = vsel %vm581, %v325, %v837
      %v1094 = vsel %vm582, %v326, %v838
      %v1095 = vsel %vm583, %v327, %v839
      %v1096 = vsel %vm584, %v328, %v840
      %v1097 = vsel %vm585, %v329, %v841
      %v1098 = vsel %vm586, %v330, %v842
      %v1099 = vsel %vm587, %v331, %v843
      %v1100 = vsel %vm588, %v332, %v844
      %v1101 = vsel %vm589, %v333, %v845
      %v1102 = vsel %vm590, %v334, %v846
      %v1103 = vsel %vm591, %v335, %v847
      %v1104 = vsel %vm592, %v336, %v848
      %v1105 = vsel %vm593, %v337, %v849
      %v1106 = vsel %vm594, %v338, %v850
      %v1107 = vsel %vm595, %v339, %v851
      %v1108 = vsel %vm596, %v340, %v852
      %v1109 = vsel %vm597, %v341, %v853
      %v1110 = vsel %vm598, %v342, %v854
      %v1111 = vsel %vm599, %v343, %v855
      %v1112 = vsel %vm600, %v344, %v856
      %v1113 = vsel %vm601, %v345, %v857
      %v1114 = vsel %vm602, %v346, %v858
      %v1115 = vsel %vm603, %v347, %v859
      %v1116 = vsel %vm604, %v348, %v860
      %v1117 = vsel %vm605, %v349, %v861
      %v1118 = vsel %vm606, %v350, %v862
      %v1119 = vsel %vm607, %v351, %v863
      %v1120 = vsel %vm608, %v352, %v864
      %v1121 = vsel %vm609, %v353, %v865
      %v1122 = vsel %vm610, %v354, %v866
      %v1123 = vsel %vm611, %v355, %v867
      %v1124 = vsel %vm612, %v356, %v868
      %v1125 = vsel %vm613, %v357, %v869
      %v1126 = vsel %vm614, %v358, %v870
      %v1127 = vsel %vm615, %v359, %v871
      %v1128 = vsel %vm616, %v360, %v872
      %v1129 = vsel %vm617, %v361, %v873
      %v1130 = vsel %vm618, %v362, %v874
      %v1131 = vsel %vm619, %v363, %v875
      %v1132 = vsel %vm620, %v364, %v876
      %v1133 = vsel %vm621, %v365, %v877
      %v1134 = vsel %vm622, %v366, %v878
      %v1135 = vsel %vm623, %v367, %v879
      %v1136 = vsel %vm624, %v368, %v880
      %v1137 = vsel %vm625, %v369, %v881
      %v1138 = vsel %vm626, %v370, %v882
      %v1139 = vsel %vm627, %v371, %v883
      %v1140 = vsel %vm628, %v372, %v884
      %v1141 = vsel %vm629, %v373, %v885
      %v1142 = vsel %vm630, %v374, %v886
      %v1143 = vsel %vm631, %v375, %v887
      %v1144 = vsel %vm632, %v376, %v888
      %v1145 = vsel %vm633, %v377, %v889
      %v1146 = vsel %vm634, %v378, %v890
      %v1147 = vsel %vm635, %v379, %v891
      %v1148 = vsel %vm636, %v380, %v892
      %v1149 = vsel %vm637, %v381, %v893
      %v1150 = vsel %vm638, %v382, %v894
      %v1151 = vsel %vm639, %v383, %v895
      %v1152 = vsel %vm640, %v384, %v896
      %v1153 = vsel %vm641, %v385, %v897
      %v1154 = vsel %vm642, %v386, %v898
      %v1155 = vsel %vm643, %v387, %v899
      %v1156 = vsel %vm644, %v388, %v900
      %v1157 = vsel %vm645, %v389, %v901
      %v1158 = vsel %vm646, %v390, %v902
      %v1159 = vsel %vm647, %v391, %v903
      %v1160 = vsel %vm648, %v392, %v904
      %v1161 = vsel %vm649, %v393, %v905
      %v1162 = vsel %vm650, %v394, %v906
      %v1163 = vsel %vm651, %v395, %v907
      %v1164 = vsel %vm652, %v396, %v908
      %v1165 = vsel %vm653, %v397, %v909
      %v1166 = vsel %vm654, %v398, %v910
      %v1167 = vsel %vm655, %v399, %v911
      %v1168 = vsel %vm656, %v400, %v912
      %v1169 = vsel %vm657, %v401, %v913
      %v1170 = vsel %vm658, %v402, %v914
      %v1171 = vsel %vm659, %v403, %v915
      %v1172 = vsel %vm660, %v404, %v916
      %v1173 = vsel %vm661, %v405, %v917
      %v1174 = vsel %vm662, %v406, %v918
      %v1175 = vsel %vm663, %v407, %v919
      %v1176 = vsel %vm664, %v408, %v920
      %v1177 = vsel %vm665, %v409, %v921
      %v1178 = vsel %vm666, %v410, %v922
      %v1179 = vsel %vm667, %v411, %v923
      %v1180 = vsel %vm668, %v412, %v924
      %v1181 = vsel %vm669, %v413, %v925
      %v1182 = vsel %vm670, %v414, %v926
      %v1183 = vsel %vm671, %v415, %v927
      %v1184 = vsel %vm672, %v416, %v928
      %v1185 = vsel %vm673, %v417, %v929
      %v1186 = vsel %vm674, %v418, %v930
      %v1187 = vsel %vm675, %v419, %v931
      %v1188 = vsel %vm676, %v420, %v932
      %v1189 = vsel %vm677, %v421, %v933
      %v1190 = vsel %vm678, %v422, %v934
      %v1191 = vsel %vm679, %v423, %v935
      %v1192 = vsel %vm680, %v424, %v936
      %v1193 = vsel %vm681, %v425, %v937
      %v1194 = vsel %vm682, %v426, %v938
      %v1195 = vsel %vm683, %v427, %v939
      %v1196 = vsel %vm684, %v428, %v940
      %v1197 = vsel %vm685, %v429, %v941
      %v1198 = vsel %vm686, %v430, %v942
      %v1199 = vsel %vm687, %v431, %v943
      %v1200 = vsel %vm688, %v432, %v944
      %v1201 = vsel %vm689, %v433, %v945
      %v1202 = vsel %vm690, %v434, %v946
      %v1203 = vsel %vm691, %v435, %v947
      %v1204 = vsel %vm692, %v436, %v948
      %v1205 = vsel %vm693, %v437, %v949
      %v1206 = vsel %vm694, %v438, %v950
      %v1207 = vsel %vm695, %v439, %v951
      %v1208 = vsel %vm696, %v440, %v952
      %v1209 = vsel %vm697, %v441, %v953
      %v1210 = vsel %vm698, %v442, %v954
      %v1211 = vsel %vm699, %v443, %v955
      %v1212 = vsel %vm700, %v444, %v956
      %v1213 = vsel %vm701, %v445, %v957
      %v1214 = vsel %vm702, %v446, %v958
      %v1215 = vsel %vm703, %v447, %v959
      %v1216 = vsel %vm704, %v448, %v960
      %v1217 = vsel %vm705, %v449, %v961
      %v1218 = vsel %vm706, %v450, %v962
      %v1219 = vsel %vm707, %v451, %v963
      %v1220 = vsel %vm708, %v452, %v964
      %v1221 = vsel %vm709, %v453, %v965
      %v1222 = vsel %vm710, %v454, %v966
      %v1223 = vsel %vm711, %v455, %v967
      %v1224 = vsel %vm712, %v456, %v968
      %v1225 = vsel %vm713, %v457, %v969
      %v1226 = vsel %vm714, %v458, %v970
      %v1227 = vsel %vm715, %v459, %v971
      %v1228 = vsel %vm716, %v460, %v972
      %v1229 = vsel %vm717, %v461, %v973
      %v1230 = vsel %vm718, %v462, %v974
      %v1231 = vsel %vm719, %v463, %v975
      %v1232 = vsel %vm720, %v464, %v976
      %v1233 = vsel %vm721, %v465, %v977
      %v1234 = vsel %vm722, %v466, %v978
      %v1235 = vsel %vm723, %v467, %v979
      %v1236 = vsel %vm724, %v468, %v980
      %v1237 = vsel %vm725, %v469, %v981
      %v1238 = vsel %vm726, %v470, %v982
      %v1239 = vsel %vm727, %v471, %v983
      %v1240 = vsel %vm728, %v472, %v984
      %v1241 = vsel %vm729, %v473, %v985
      %v1242 = vsel %vm730, %v474, %v986
      %v1243 = vsel %vm731, %v475, %v987
      %v1244 = vsel %vm732, %v476, %v988
      %v1245 = vsel %vm733, %v477, %v989
      %v1246 = vsel %vm734, %v478, %v990
      %v1247 = vsel %vm735, %v479, %v991
      %v1248 = vsel %vm736, %v480, %v992
      %v1249 = vsel %vm737, %v481, %v993
      %v1250 = vsel %vm738, %v482, %v994
      %v1251 = vsel %vm739, %v483, %v995
      %v1252 = vsel %vm740, %v484, %v996
      %v1253 = vsel %vm741, %v485, %v997
      %v1254 = vsel %vm742, %v486, %v998
      %v1255 = vsel %vm743, %v487, %v999
      %v1256 = vsel %vm744, %v488, %v1000
      %v1257 = vsel %vm745, %v489, %v1001
      %v1258 = vsel %vm746, %v490, %v1002
      %v1259 = vsel %vm747, %v491, %v1003
      %v1260 = vsel %vm748, %v492, %v1004
      %v1261 = vsel %vm749, %v493, %v1005
      %v1262 = vsel %vm750, %v494, %v1006
      %v1263 = vsel %vm751, %v495, %v1007
      %v1264 = vsel %vm752, %v496, %v1008
      %v1265 = vsel %vm753, %v497, %v1009
      %v1266 = vsel %vm754, %v498, %v1010
      %v1267 = vsel %vm755, %v499, %v1011
      %v1268 = vsel %vm756, %v500, %v1012
      %v1269 = vsel %vm757, %v501, %v1013
      %v1270 = vsel %vm758, %v502, %v1014
      %v1271 = vsel %vm759, %v503, %v1015
      %v1272 = vsel %vm760, %v504, %v1016
      %v1273 = vsel %vm761, %v505, %v1017
      %v1274 = vsel %vm762, %v506, %v1018
      %v1275 = vsel %vm763, %v507, %v1019
      %v1276 = vsel %vm764, %v508, %v1020
      %v1277 = vsel %vm765, %v509, %v1021
      %v1278 = vsel %vm766, %v510, %v1022
      %v1279 = vsel %vm767, %v511, %v1023
      %v1280 = vsel %vm768, %v512, %v1024
      %v1281 = vsel %vm769, %v513, %v1025
      %v1282 = vsel %vm770, %v514, %v1026
      %v1283 = vsel %vm771, %v515, %v1027
      %v1284 = vsel %vm772, %v516, %v1028
      %v1285 = vsel %vm773, %v517, %v1029
      %v1286 = vsel %vm774, %v518, %v1030
      %v1287 = vsel %vm775, %v519, %v1031
      %v1288 = vsel %vm776, %v520, %v1032
      %v1289 = vsel %vm777, %v521, %v1033
      %v1290 = vsel %vm778, %v522, %v1034
      %v1291 = vsel %vm779, %v523, %v1035
      %v1292 = vsel %vm780, %v524, %v1036
      %v1293 = vsel %vm781, %v525, %v1037
      %v1294 = vsel %vm782, %v526, %v1038
      %v1295 = vsel %vm783, %v527, %v1039
      %v1296 = vsel %vm784, %v528, %v1040
      %v1297 = vsel %vm785, %v529, %v1041
      %v1298 = vsel %vm786, %v530, %v1042
      %v1299 = vsel %vm787, %v531, %v1043
      %v1300 = vsel %vm788, %v532, %v1044
      %v1301 = vsel %vm789, %v533, %v1045
      %v1302 = vsel %vm790, %v534, %v1046
      %v1303 = vsel %vm791, %v535, %v1047
      %v1304 = vsel %vm792, %v536, %v1048
      %v1305 = vsel %vm793, %v537, %v1049
      %v1306 = vsel %vm794, %v538, %v1050
      %v1307 = vsel %vm795, %v539, %v1051
      %v1308 = vsel %vm796, %v540, %v1052
      %v1309 = vsel %vm797, %v541, %v1053
      %v1310 = vsel %vm798, %v542, %v1054
      %v1311 = vsel %vm799, %v543, %v1055
      %v1312 = vsel %vm800, %v544, %v1056
      %v1313 = vsel %vm801, %v545, %v1057
      %v1314 = vsel %vm802, %v546, %v1058
      %v1315 = vsel %vm803, %v547, %v1059
      %v1316 = vsel %vm804, %v548, %v1060
      %v1317 = vsel %vm805, %v549, %v1061
      %v1318 = vsel %vm806, %v550, %v1062
      %v1319 = vsel %vm807, %v551, %v1063
      %v1320 = vsel %vm808, %v552, %v1064
      %v1321 = vsel %vm809, %v553, %v1065
      %v1322 = vsel %vm810, %v554, %v1066
      %v1323 = vsel %vm811, %v555, %v1067
      %v1324 = vsel %vm812, %v556, %v1068
      %v1325 = vsel %vm813, %v557, %v1069
      %v1326 = vsel %vm814, %v558, %v1070
      %v1327 = vsel %vm815, %v559, %v1071
      %v1328 = vsel %vm816, %v560, %v1072
      %v1329 = vsel %vm817, %v561, %v1073
      %v1330 = vsel %vm818, %v562, %v1074
      %v1331 = vsel %vm819, %v563, %v1075
      %v1332 = vsel %vm820, %v564, %v1076
      %v1333 = vsel %vm821, %v565, %v1077
      %v1334 = vsel %vm822, %v566, %v1078
      %v1335 = vsel %vm823, %v567, %v1079
      %v1336 = vsel %vm824, %v568, %v1080
      %v1337 = vsel %vm825, %v569, %v1081
      %v1338 = vsel %vm826, %v570, %v1082
      %v1339 = vsel %vm827, %v571, %v1083
      %v1340 = vsel %vm828, %v572, %v1084
      %v1341 = vsel %vm829, %v573, %v1085
      %v1342 = vpack.c.bf16 %v1088, %v1086
      %v1343 = vpack.c.bf16 %v1089, %v1087
      %v1344 = vpack.c.bf16 %v1092, %v1090
      %v1345 = vpack.c.bf16 %v1093, %v1091
      %v1346 = vpack.c.bf16 %v1096, %v1094
      %v1347 = vpack.c.bf16 %v1097, %v1095
      %v1348 = vpack.c.bf16 %v1100, %v1098
      %v1349 = vpack.c.bf16 %v1101, %v1099
      %v1350 = vpack.c.bf16 %v1104, %v1102
      %v1351 = vpack.c.bf16 %v1105, %v1103
      %v1352 = vpack.c.bf16 %v1108, %v1106
      %v1353 = vpack.c.bf16 %v1109, %v1107
      %v1354 = vpack.c.bf16 %v1112, %v1110
      %v1355 = vpack.c.bf16 %v1113, %v1111
      %v1356 = vpack.c.bf16 %v1116, %v1114
      %v1357 = vpack.c.bf16 %v1117, %v1115
      %v1358 = vpack.c.bf16 %v1120, %v1118
      %v1359 = vpack.c.bf16 %v1121, %v1119
      %v1360 = vpack.c.bf16 %v1124, %v1122
      %v1361 = vpack.c.bf16 %v1125, %v1123
      %v1362 = vpack.c.bf16 %v1128, %v1126
      %v1363 = vpack.c.bf16 %v1129, %v1127
      %v1364 = vpack.c.bf16 %v1132, %v1130
      %v1365 = vpack.c.bf16 %v1133, %v1131
      %v1366 = vpack.c.bf16 %v1136, %v1134
      %v1367 = vpack.c.bf16 %v1137, %v1135
      %v1368 = vpack.c.bf16 %v1140, %v1138
      %v1369 = vpack.c.bf16 %v1141, %v1139
      %v1370 = vpack.c.bf16 %v1144, %v1142
      %v1371 = vpack.c.bf16 %v1145, %v1143
      %v1372 = vpack.c.bf16 %v1148, %v1146
      %v1373 = vpack.c.bf16 %v1149, %v1147
      %v1374 = vpack.c.bf16 %v1152, %v1150
      %v1375 = vpack.c.bf16 %v1153, %v1151
      %v1376 = vpack.c.bf16 %v1156, %v1154
      %v1377 = vpack.c.bf16 %v1157, %v1155
      %v1378 = vpack.c.bf16 %v1160, %v1158
      %v1379 = vpack.c.bf16 %v1161, %v1159
      %v1380 = vpack.c.bf16 %v1164, %v1162
      %v1381 = vpack.c.bf16 %v1165, %v1163
      %v1382 = vpack.c.bf16 %v1168, %v1166
      %v1383 = vpack.c.bf16 %v1169, %v1167
      %v1384 = vpack.c.bf16 %v1172, %v1170
      %v1385 = vpack.c.bf16 %v1173, %v1171
      %v1386 = vpack.c.bf16 %v1176, %v1174
      %v1387 = vpack.c.bf16 %v1177, %v1175
      %v1388 = vpack.c.bf16 %v1180, %v1178
      %v1389 = vpack.c.bf16 %v1181, %v1179
      %v1390 = vpack.c.bf16 %v1184, %v1182
      %v1391 = vpack.c.bf16 %v1185, %v1183
      %v1392 = vpack.c.bf16 %v1188, %v1186
      %v1393 = vpack.c.bf16 %v1189, %v1187
      %v1394 = vpack.c.bf16 %v1192, %v1190
      %v1395 = vpack.c.bf16 %v1193, %v1191
      %v1396 = vpack.c.bf16 %v1196, %v1194
      %v1397 = vpack.c.bf16 %v1197, %v1195
      %v1398 = vpack.c.bf16 %v1200, %v1198
      %v1399 = vpack.c.bf16 %v1201, %v1199
      %v1400 = vpack.c.bf16 %v1204, %v1202
      %v1401 = vpack.c.bf16 %v1205, %v1203
      %v1402 = vpack.c.bf16 %v1208, %v1206
      %v1403 = vpack.c.bf16 %v1209, %v1207
      %v1404 = vpack.c.bf16 %v1212, %v1210
      %v1405 = vpack.c.bf16 %v1213, %v1211
      %v1406 = vpack.c.bf16 %v1216, %v1214
      %v1407 = vpack.c.bf16 %v1217, %v1215
      %v1408 = vpack.c.bf16 %v1220, %v1218
      %v1409 = vpack.c.bf16 %v1221, %v1219
      %v1410 = vpack.c.bf16 %v1224, %v1222
      %v1411 = vpack.c.bf16 %v1225, %v1223
      %v1412 = vpack.c.bf16 %v1228, %v1226
      %v1413 = vpack.c.bf16 %v1229, %v1227
      %v1414 = vpack.c.bf16 %v1232, %v1230
      %v1415 = vpack.c.bf16 %v1233, %v1231
      %v1416 = vpack.c.bf16 %v1236, %v1234
      %v1417 = vpack.c.bf16 %v1237, %v1235
      %v1418 = vpack.c.bf16 %v1240, %v1238
      %v1419 = vpack.c.bf16 %v1241, %v1239
      %v1420 = vpack.c.bf16 %v1244, %v1242
      %v1421 = vpack.c.bf16 %v1245, %v1243
      %v1422 = vpack.c.bf16 %v1248, %v1246
      %v1423 = vpack.c.bf16 %v1249, %v1247
      %v1424 = vpack.c.bf16 %v1252, %v1250
      %v1425 = vpack.c.bf16 %v1253, %v1251
      %v1426 = vpack.c.bf16 %v1256, %v1254
      %v1427 = vpack.c.bf16 %v1257, %v1255
      %v1428 = vpack.c.bf16 %v1260, %v1258
      %v1429 = vpack.c.bf16 %v1261, %v1259
      %v1430 = vpack.c.bf16 %v1264, %v1262
      %v1431 = vpack.c.bf16 %v1265, %v1263
      %v1432 = vpack.c.bf16 %v1268, %v1266
      %v1433 = vpack.c.bf16 %v1269, %v1267
      %v1434 = vpack.c.bf16 %v1272, %v1270
      %v1435 = vpack.c.bf16 %v1273, %v1271
      %v1436 = vpack.c.bf16 %v1276, %v1274
      %v1437 = vpack.c.bf16 %v1277, %v1275
      %v1438 = vpack.c.bf16 %v1280, %v1278
      %v1439 = vpack.c.bf16 %v1281, %v1279
      %v1440 = vpack.c.bf16 %v1284, %v1282
      %v1441 = vpack.c.bf16 %v1285, %v1283
      %v1442 = vpack.c.bf16 %v1288, %v1286
      %v1443 = vpack.c.bf16 %v1289, %v1287
      %v1444 = vpack.c.bf16 %v1292, %v1290
      %v1445 = vpack.c.bf16 %v1293, %v1291
      %v1446 = vpack.c.bf16 %v1296, %v1294
      %v1447 = vpack.c.bf16 %v1297, %v1295
      %v1448 = vpack.c.bf16 %v1300, %v1298
      %v1449 = vpack.c.bf16 %v1301, %v1299
      %v1450 = vpack.c.bf16 %v1304, %v1302
      %v1451 = vpack.c.bf16 %v1305, %v1303
      %v1452 = vpack.c.bf16 %v1308, %v1306
      %v1453 = vpack.c.bf16 %v1309, %v1307
      %v1454 = vpack.c.bf16 %v1312, %v1310
      %v1455 = vpack.c.bf16 %v1313, %v1311
      %v1456 = vpack.c.bf16 %v1316, %v1314
      %v1457 = vpack.c.bf16 %v1317, %v1315
      %v1458 = vpack.c.bf16 %v1320, %v1318
      %v1459 = vpack.c.bf16 %v1321, %v1319
      %v1460 = vpack.c.bf16 %v1324, %v1322
      %v1461 = vpack.c.bf16 %v1325, %v1323
      %v1462 = vpack.c.bf16 %v1328, %v1326
      %v1463 = vpack.c.bf16 %v1329, %v1327
      %v1464 = vpack.c.bf16 %v1332, %v1330
      %v1465 = vpack.c.bf16 %v1333, %v1331
      %v1466 = vpack.c.bf16 %v1336, %v1334
      %v1467 = vpack.c.bf16 %v1337, %v1335
      %v1468 = vpack.c.bf16 %v1340, %v1338
      %v1469 = vpack.c.bf16 %v1341, %v1339
      %v1470 = vld [vmem:[%s1] sm:$0xff]
      %v1471 = vld [vmem:[%s1 + $0x8] sm:$0xff]
      %v1472 = vld [vmem:[%s1 + $0x10] sm:$0xff]
      %v1473 = vld [vmem:[%s1 + $0x18] sm:$0xff]
      %v1474 = vld [vmem:[%s1 + $0x20] sm:$0xff]
      %v1475 = vld [vmem:[%s1 + $0x28] sm:$0xff]
      %v1476 = vld [vmem:[%s1 + $0x30] sm:$0xff]
      %v1477 = vld [vmem:[%s1 + $0x38] sm:$0xff]
      %v1478 = vld [vmem:[%s1 + $0x40] sm:$0xff]
      %v1479 = vld [vmem:[%s1 + $0x48] sm:$0xff]
      %v1480 = vld [vmem:[%s1 + $0x50] sm:$0xff]
      %v1481 = vld [vmem:[%s1 + $0x58] sm:$0xff]
      %v1482 = vld [vmem:[%s1 + $0x60] sm:$0xff]
      %v1483 = vld [vmem:[%s1 + $0x68] sm:$0xff]
      %v1484 = vld [vmem:[%s1 + $0x70] sm:$0xff]
      %v1485 = vld [vmem:[%s1 + $0x78] sm:$0xff]
      %v1486 = vld [vmem:[%s1 + $0x80] sm:$0xff]
      %v1487 = vld [vmem:[%s1 + $0x88] sm:$0xff]
      %v1488 = vld [vmem:[%s1 + $0x90] sm:$0xff]
      %v1489 = vld [vmem:[%s1 + $0x98] sm:$0xff]
      %v1490 = vld [vmem:[%s1 + $0xa0] sm:$0xff]
      %v1491 = vld [vmem:[%s1 + $0xa8] sm:$0xff]
      %v1492 = vld [vmem:[%s1 + $0xb0] sm:$0xff]
      %v1493 = vld [vmem:[%s1 + $0xb8] sm:$0xff]
      %v1494 = vld [vmem:[%s1 + $0xc0] sm:$0xff]
      %v1495 = vld [vmem:[%s1 + $0xc8] sm:$0xff]
      %v1496 = vld [vmem:[%s1 + $0xd0] sm:$0xff]
      %v1497 = vld [vmem:[%s1 + $0xd8] sm:$0xff]
      %v1498 = vld [vmem:[%s1 + $0xe0] sm:$0xff]
      %v1499 = vld [vmem:[%s1 + $0xe8] sm:$0xff]
      %v1500 = vld [vmem:[%s1 + $0xf0] sm:$0xff]
      %v1501 = vld [vmem:[%s1 + $0xf8] sm:$0xff]
      %v1502 = vld [vmem:[%s1 + $0x100] sm:$0xff]
      %v1503 = vld [vmem:[%s1 + $0x108] sm:$0xff]
      %v1504 = vld [vmem:[%s1 + $0x110] sm:$0xff]
      %v1505 = vld [vmem:[%s1 + $0x118] sm:$0xff]
      %v1506 = vld [vmem:[%s1 + $0x120] sm:$0xff]
      %v1507 = vld [vmem:[%s1 + $0x128] sm:$0xff]
      %v1508 = vld [vmem:[%s1 + $0x130] sm:$0xff]
      %v1509 = vld [vmem:[%s1 + $0x138] sm:$0xff]
      %v1510 = vld [vmem:[%s1 + $0x140] sm:$0xff]
      %v1511 = vld [vmem:[%s1 + $0x148] sm:$0xff]
      %v1512 = vld [vmem:[%s1 + $0x150] sm:$0xff]
      %v1513 = vld [vmem:[%s1 + $0x158] sm:$0xff]
      %v1514 = vld [vmem:[%s1 + $0x160] sm:$0xff]
      %v1515 = vld [vmem:[%s1 + $0x168] sm:$0xff]
      %v1516 = vld [vmem:[%s1 + $0x170] sm:$0xff]
      %v1517 = vld [vmem:[%s1 + $0x178] sm:$0xff]
      %v1518 = vld [vmem:[%s1 + $0x180] sm:$0xff]
      %v1519 = vld [vmem:[%s1 + $0x188] sm:$0xff]
      %v1520 = vld [vmem:[%s1 + $0x190] sm:$0xff]
      %v1521 = vld [vmem:[%s1 + $0x198] sm:$0xff]
      %v1522 = vld [vmem:[%s1 + $0x1a0] sm:$0xff]
      %v1523 = vld [vmem:[%s1 + $0x1a8] sm:$0xff]
      %v1524 = vld [vmem:[%s1 + $0x1b0] sm:$0xff]
      %v1525 = vld [vmem:[%s1 + $0x1b8] sm:$0xff]
      %v1526 = vld [vmem:[%s1 + $0x1c0] sm:$0xff]
      %v1527 = vld [vmem:[%s1 + $0x1c8] sm:$0xff]
      %v1528 = vld [vmem:[%s1 + $0x1d0] sm:$0xff]
      %v1529 = vld [vmem:[%s1 + $0x1d8] sm:$0xff]
      %v1530 = vld [vmem:[%s1 + $0x1e0] sm:$0xff]
      %v1531 = vld [vmem:[%s1 + $0x1e8] sm:$0xff]
      %v1532 = vld [vmem:[%s1 + $0x1f0] sm:$0xff]
      %v1533 = vld [vmem:[%s1 + $0x1f8] sm:$0xff]
      %v1534 = vld [vmem:[%s1 + $0x200] sm:$0xff]
      %v1535 = vld [vmem:[%s1 + $0x208] sm:$0xff]
      %v1536 = vld [vmem:[%s1 + $0x210] sm:$0xff]
      %v1537 = vld [vmem:[%s1 + $0x218] sm:$0xff]
      %v1538 = vld [vmem:[%s1 + $0x220] sm:$0xff]
      %v1539 = vld [vmem:[%s1 + $0x228] sm:$0xff]
      %v1540 = vld [vmem:[%s1 + $0x230] sm:$0xff]
      %v1541 = vld [vmem:[%s1 + $0x238] sm:$0xff]
      %v1542 = vld [vmem:[%s1 + $0x240] sm:$0xff]
      %v1543 = vld [vmem:[%s1 + $0x248] sm:$0xff]
      %v1544 = vld [vmem:[%s1 + $0x250] sm:$0xff]
      %v1545 = vld [vmem:[%s1 + $0x258] sm:$0xff]
      %v1546 = vld [vmem:[%s1 + $0x260] sm:$0xff]
      %v1547 = vld [vmem:[%s1 + $0x268] sm:$0xff]
      %v1548 = vld [vmem:[%s1 + $0x270] sm:$0xff]
      %v1549 = vld [vmem:[%s1 + $0x278] sm:$0xff]
      %v1550 = vld [vmem:[%s1 + $0x280] sm:$0xff]
      %v1551 = vld [vmem:[%s1 + $0x288] sm:$0xff]
      %v1552 = vld [vmem:[%s1 + $0x290] sm:$0xff]
      %v1553 = vld [vmem:[%s1 + $0x298] sm:$0xff]
      %v1554 = vld [vmem:[%s1 + $0x2a0] sm:$0xff]
      %v1555 = vld [vmem:[%s1 + $0x2a8] sm:$0xff]
      %v1556 = vld [vmem:[%s1 + $0x2b0] sm:$0xff]
      %v1557 = vld [vmem:[%s1 + $0x2b8] sm:$0xff]
      %v1558 = vld [vmem:[%s1 + $0x2c0] sm:$0xff]
      %v1559 = vld [vmem:[%s1 + $0x2c8] sm:$0xff]
      %v1560 = vld [vmem:[%s1 + $0x2d0] sm:$0xff]
      %v1561 = vld [vmem:[%s1 + $0x2d8] sm:$0xff]
      %v1562 = vld [vmem:[%s1 + $0x2e0] sm:$0xff]
      %v1563 = vld [vmem:[%s1 + $0x2e8] sm:$0xff]
      %v1564 = vld [vmem:[%s1 + $0x2f0] sm:$0xff]
      %v1565 = vld [vmem:[%s1 + $0x2f8] sm:$0xff]
      %v1566 = vld [vmem:[%s1 + $0x300] sm:$0xff]
      %v1567 = vld [vmem:[%s1 + $0x308] sm:$0xff]
      %v1568 = vld [vmem:[%s1 + $0x310] sm:$0xff]
      %v1569 = vld [vmem:[%s1 + $0x318] sm:$0xff]
      %v1570 = vld [vmem:[%s1 + $0x320] sm:$0xff]
      %v1571 = vld [vmem:[%s1 + $0x328] sm:$0xff]
      %v1572 = vld [vmem:[%s1 + $0x330] sm:$0xff]
      %v1573 = vld [vmem:[%s1 + $0x338] sm:$0xff]
      %v1574 = vld [vmem:[%s1 + $0x340] sm:$0xff]
      %v1575 = vld [vmem:[%s1 + $0x348] sm:$0xff]
      %v1576 = vld [vmem:[%s1 + $0x350] sm:$0xff]
      %v1577 = vld [vmem:[%s1 + $0x358] sm:$0xff]
      %v1578 = vld [vmem:[%s1 + $0x360] sm:$0xff]
      %v1579 = vld [vmem:[%s1 + $0x368] sm:$0xff]
      %v1580 = vld [vmem:[%s1 + $0x370] sm:$0xff]
      %v1581 = vld [vmem:[%s1 + $0x378] sm:$0xff]
      %v1582 = vld [vmem:[%s1 + $0x380] sm:$0xff]
      %v1583 = vld [vmem:[%s1 + $0x388] sm:$0xff]
      %v1584 = vld [vmem:[%s1 + $0x390] sm:$0xff]
      %v1585 = vld [vmem:[%s1 + $0x398] sm:$0xff]
      %v1586 = vld [vmem:[%s1 + $0x3a0] sm:$0xff]
      %v1587 = vld [vmem:[%s1 + $0x3a8] sm:$0xff]
      %v1588 = vld [vmem:[%s1 + $0x3b0] sm:$0xff]
      %v1589 = vld [vmem:[%s1 + $0x3b8] sm:$0xff]
      %v1590 = vld [vmem:[%s1 + $0x3c0] sm:$0xff]
      %v1591 = vld [vmem:[%s1 + $0x3c8] sm:$0xff]
      %v1592 = vld [vmem:[%s1 + $0x3d0] sm:$0xff]
      %v1593 = vld [vmem:[%s1 + $0x3d8] sm:$0xff]
      %v1594 = vld [vmem:[%s1 + $0x3e0] sm:$0xff]
      %v1595 = vld [vmem:[%s1 + $0x3e8] sm:$0xff]
      %v1596 = vld [vmem:[%s1 + $0x3f0] sm:$0xff]
      %v1597 = vld [vmem:[%s1 + $0x3f8] sm:$0xff]
      %v1598 = vld [vmem:[%s1 + $0x400] sm:$0xff]
      %v1599 = vld [vmem:[%s1 + $0x408] sm:$0xff]
      %v1600 = vld [vmem:[%s1 + $0x410] sm:$0xff]
      %v1601 = vld [vmem:[%s1 + $0x418] sm:$0xff]
      %v1602 = vld [vmem:[%s1 + $0x420] sm:$0xff]
      %v1603 = vld [vmem:[%s1 + $0x428] sm:$0xff]
      %v1604 = vld [vmem:[%s1 + $0x430] sm:$0xff]
      %v1605 = vld [vmem:[%s1 + $0x438] sm:$0xff]
      %v1606 = vld [vmem:[%s1 + $0x440] sm:$0xff]
      %v1607 = vld [vmem:[%s1 + $0x448] sm:$0xff]
      %v1608 = vld [vmem:[%s1 + $0x450] sm:$0xff]
      %v1609 = vld [vmem:[%s1 + $0x458] sm:$0xff]
      %v1610 = vld [vmem:[%s1 + $0x460] sm:$0xff]
      %v1611 = vld [vmem:[%s1 + $0x468] sm:$0xff]
      %v1612 = vld [vmem:[%s1 + $0x470] sm:$0xff]
      %v1613 = vld [vmem:[%s1 + $0x478] sm:$0xff]
      %v1614 = vld [vmem:[%s1 + $0x480] sm:$0xff]
      %v1615 = vld [vmem:[%s1 + $0x488] sm:$0xff]
      %v1616 = vld [vmem:[%s1 + $0x490] sm:$0xff]
      %v1617 = vld [vmem:[%s1 + $0x498] sm:$0xff]
      %v1618 = vld [vmem:[%s1 + $0x4a0] sm:$0xff]
      %v1619 = vld [vmem:[%s1 + $0x4a8] sm:$0xff]
      %v1620 = vld [vmem:[%s1 + $0x4b0] sm:$0xff]
      %v1621 = vld [vmem:[%s1 + $0x4b8] sm:$0xff]
      %v1622 = vld [vmem:[%s1 + $0x4c0] sm:$0xff]
      %v1623 = vld [vmem:[%s1 + $0x4c8] sm:$0xff]
      %v1624 = vld [vmem:[%s1 + $0x4d0] sm:$0xff]
      %v1625 = vld [vmem:[%s1 + $0x4d8] sm:$0xff]
      %v1626 = vld [vmem:[%s1 + $0x4e0] sm:$0xff]
      %v1627 = vld [vmem:[%s1 + $0x4e8] sm:$0xff]
      %v1628 = vld [vmem:[%s1 + $0x4f0] sm:$0xff]
      %v1629 = vld [vmem:[%s1 + $0x4f8] sm:$0xff]
      %v1630 = vld [vmem:[%s1 + $0x500] sm:$0xff]
      %v1631 = vld [vmem:[%s1 + $0x508] sm:$0xff]
      %v1632 = vld [vmem:[%s1 + $0x510] sm:$0xff]
      %v1633 = vld [vmem:[%s1 + $0x518] sm:$0xff]
      %v1634 = vld [vmem:[%s1 + $0x520] sm:$0xff]
      %v1635 = vld [vmem:[%s1 + $0x528] sm:$0xff]
      %v1636 = vld [vmem:[%s1 + $0x530] sm:$0xff]
      %v1637 = vld [vmem:[%s1 + $0x538] sm:$0xff]
      %v1638 = vld [vmem:[%s1 + $0x540] sm:$0xff]
      %v1639 = vld [vmem:[%s1 + $0x548] sm:$0xff]
      %v1640 = vld [vmem:[%s1 + $0x550] sm:$0xff]
      %v1641 = vld [vmem:[%s1 + $0x558] sm:$0xff]
      %v1642 = vld [vmem:[%s1 + $0x560] sm:$0xff]
      %v1643 = vld [vmem:[%s1 + $0x568] sm:$0xff]
      %v1644 = vld [vmem:[%s1 + $0x570] sm:$0xff]
      %v1645 = vld [vmem:[%s1 + $0x578] sm:$0xff]
      %v1646 = vld [vmem:[%s1 + $0x580] sm:$0xff]
      %v1647 = vld [vmem:[%s1 + $0x588] sm:$0xff]
      %v1648 = vld [vmem:[%s1 + $0x590] sm:$0xff]
      %v1649 = vld [vmem:[%s1 + $0x598] sm:$0xff]
      %v1650 = vld [vmem:[%s1 + $0x5a0] sm:$0xff]
      %v1651 = vld [vmem:[%s1 + $0x5a8] sm:$0xff]
      %v1652 = vld [vmem:[%s1 + $0x5b0] sm:$0xff]
      %v1653 = vld [vmem:[%s1 + $0x5b8] sm:$0xff]
      %v1654 = vld [vmem:[%s1 + $0x5c0] sm:$0xff]
      %v1655 = vld [vmem:[%s1 + $0x5c8] sm:$0xff]
      %v1656 = vld [vmem:[%s1 + $0x5d0] sm:$0xff]
      %v1657 = vld [vmem:[%s1 + $0x5d8] sm:$0xff]
      %v1658 = vld [vmem:[%s1 + $0x5e0] sm:$0xff]
      %v1659 = vld [vmem:[%s1 + $0x5e8] sm:$0xff]
      %v1660 = vld [vmem:[%s1 + $0x5f0] sm:$0xff]
      %v1661 = vld [vmem:[%s1 + $0x5f8] sm:$0xff]
      %v1662 = vld [vmem:[%s1 + $0x600] sm:$0xff]
      %v1663 = vld [vmem:[%s1 + $0x608] sm:$0xff]
      %v1664 = vld [vmem:[%s1 + $0x610] sm:$0xff]
      %v1665 = vld [vmem:[%s1 + $0x618] sm:$0xff]
      %v1666 = vld [vmem:[%s1 + $0x620] sm:$0xff]
      %v1667 = vld [vmem:[%s1 + $0x628] sm:$0xff]
      %v1668 = vld [vmem:[%s1 + $0x630] sm:$0xff]
      %v1669 = vld [vmem:[%s1 + $0x638] sm:$0xff]
      %v1670 = vld [vmem:[%s1 + $0x640] sm:$0xff]
      %v1671 = vld [vmem:[%s1 + $0x648] sm:$0xff]
      %v1672 = vld [vmem:[%s1 + $0x650] sm:$0xff]
      %v1673 = vld [vmem:[%s1 + $0x658] sm:$0xff]
      %v1674 = vld [vmem:[%s1 + $0x660] sm:$0xff]
      %v1675 = vld [vmem:[%s1 + $0x668] sm:$0xff]
      %v1676 = vld [vmem:[%s1 + $0x670] sm:$0xff]
      %v1677 = vld [vmem:[%s1 + $0x678] sm:$0xff]
      %v1678 = vld [vmem:[%s1 + $0x680] sm:$0xff]
      %v1679 = vld [vmem:[%s1 + $0x688] sm:$0xff]
      %v1680 = vld [vmem:[%s1 + $0x690] sm:$0xff]
      %v1681 = vld [vmem:[%s1 + $0x698] sm:$0xff]
      %v1682 = vld [vmem:[%s1 + $0x6a0] sm:$0xff]
      %v1683 = vld [vmem:[%s1 + $0x6a8] sm:$0xff]
      %v1684 = vld [vmem:[%s1 + $0x6b0] sm:$0xff]
      %v1685 = vld [vmem:[%s1 + $0x6b8] sm:$0xff]
      %v1686 = vld [vmem:[%s1 + $0x6c0] sm:$0xff]
      %v1687 = vld [vmem:[%s1 + $0x6c8] sm:$0xff]
      %v1688 = vld [vmem:[%s1 + $0x6d0] sm:$0xff]
      %v1689 = vld [vmem:[%s1 + $0x6d8] sm:$0xff]
      %v1690 = vld [vmem:[%s1 + $0x6e0] sm:$0xff]
      %v1691 = vld [vmem:[%s1 + $0x6e8] sm:$0xff]
      %v1692 = vld [vmem:[%s1 + $0x6f0] sm:$0xff]
      %v1693 = vld [vmem:[%s1 + $0x6f8] sm:$0xff]
      %v1694 = vld [vmem:[%s1 + $0x700] sm:$0xff]
      %v1695 = vld [vmem:[%s1 + $0x708] sm:$0xff]
      %v1696 = vld [vmem:[%s1 + $0x710] sm:$0xff]
      %v1697 = vld [vmem:[%s1 + $0x718] sm:$0xff]
      %v1698 = vld [vmem:[%s1 + $0x720] sm:$0xff]
      %v1699 = vld [vmem:[%s1 + $0x728] sm:$0xff]
      %v1700 = vld [vmem:[%s1 + $0x730] sm:$0xff]
      %v1701 = vld [vmem:[%s1 + $0x738] sm:$0xff]
      %v1702 = vld [vmem:[%s1 + $0x740] sm:$0xff]
      %v1703 = vld [vmem:[%s1 + $0x748] sm:$0xff]
      %v1704 = vld [vmem:[%s1 + $0x750] sm:$0xff]
      %v1705 = vld [vmem:[%s1 + $0x758] sm:$0xff]
      %v1706 = vld [vmem:[%s1 + $0x760] sm:$0xff]
      %v1707 = vld [vmem:[%s1 + $0x768] sm:$0xff]
      %v1708 = vld [vmem:[%s1 + $0x770] sm:$0xff]
      %v1709 = vld [vmem:[%s1 + $0x778] sm:$0xff]
      %v1710 = vld [vmem:[%s1 + $0x780] sm:$0xff]
      %v1711 = vld [vmem:[%s1 + $0x788] sm:$0xff]
      %v1712 = vld [vmem:[%s1 + $0x790] sm:$0xff]
      %v1713 = vld [vmem:[%s1 + $0x798] sm:$0xff]
      %v1714 = vld [vmem:[%s1 + $0x7a0] sm:$0xff]
      %v1715 = vld [vmem:[%s1 + $0x7a8] sm:$0xff]
      %v1716 = vld [vmem:[%s1 + $0x7b0] sm:$0xff]
      %v1717 = vld [vmem:[%s1 + $0x7b8] sm:$0xff]
      %v1718 = vld [vmem:[%s1 + $0x7c0] sm:$0xff]
      %v1719 = vld [vmem:[%s1 + $0x7c8] sm:$0xff]
      %v1720 = vld [vmem:[%s1 + $0x7d0] sm:$0xff]
      %v1721 = vld [vmem:[%s1 + $0x7d8] sm:$0xff]
      %v1722 = vld [vmem:[%s1 + $0x7e0] sm:$0xff]
      %v1723 = vld [vmem:[%s1 + $0x7e8] sm:$0xff]
      %v1724 = vld [vmem:[%s1 + $0x7f0] sm:$0xff]
      %v1725 = vld [vmem:[%s1 + $0x7f8] sm:$0xff]
      %v1726 = vld [vmem:[%s2] sm:$0xff]
      %v1727 = vld [vmem:[%s2 + $0x8] sm:$0xff]
      %v1728 = vld [vmem:[%s2 + $0x10] sm:$0xff]
      %v1729 = vld [vmem:[%s2 + $0x18] sm:$0xff]
      %v1730 = vld [vmem:[%s2 + $0x20] sm:$0xff]
      %v1731 = vld [vmem:[%s2 + $0x28] sm:$0xff]
      %v1732 = vld [vmem:[%s2 + $0x30] sm:$0xff]
      %v1733 = vld [vmem:[%s2 + $0x38] sm:$0xff]
      %v1734 = vld [vmem:[%s2 + $0x40] sm:$0xff]
      %v1735 = vld [vmem:[%s2 + $0x48] sm:$0xff]
      %v1736 = vld [vmem:[%s2 + $0x50] sm:$0xff]
      %v1737 = vld [vmem:[%s2 + $0x58] sm:$0xff]
      %v1738 = vld [vmem:[%s2 + $0x60] sm:$0xff]
      %v1739 = vld [vmem:[%s2 + $0x68] sm:$0xff]
      %v1740 = vld [vmem:[%s2 + $0x70] sm:$0xff]
      %v1741 = vld [vmem:[%s2 + $0x78] sm:$0xff]
      %v1742 = vld [vmem:[%s2 + $0x80] sm:$0xff]
      %v1743 = vld [vmem:[%s2 + $0x88] sm:$0xff]
      %v1744 = vld [vmem:[%s2 + $0x90] sm:$0xff]
      %v1745 = vld [vmem:[%s2 + $0x98] sm:$0xff]
      %v1746 = vld [vmem:[%s2 + $0xa0] sm:$0xff]
      %v1747 = vld [vmem:[%s2 + $0xa8] sm:$0xff]
      %v1748 = vld [vmem:[%s2 + $0xb0] sm:$0xff]
      %v1749 = vld [vmem:[%s2 + $0xb8] sm:$0xff]
      %v1750 = vld [vmem:[%s2 + $0xc0] sm:$0xff]
      %v1751 = vld [vmem:[%s2 + $0xc8] sm:$0xff]
      %v1752 = vld [vmem:[%s2 + $0xd0] sm:$0xff]
      %v1753 = vld [vmem:[%s2 + $0xd8] sm:$0xff]
      %v1754 = vld [vmem:[%s2 + $0xe0] sm:$0xff]
      %v1755 = vld [vmem:[%s2 + $0xe8] sm:$0xff]
      %v1756 = vld [vmem:[%s2 + $0xf0] sm:$0xff]
      %v1757 = vld [vmem:[%s2 + $0xf8] sm:$0xff]
      %v1758 = vld [vmem:[%s2 + $0x100] sm:$0xff]
      %v1759 = vld [vmem:[%s2 + $0x108] sm:$0xff]
      %v1760 = vld [vmem:[%s2 + $0x110] sm:$0xff]
      %v1761 = vld [vmem:[%s2 + $0x118] sm:$0xff]
      %v1762 = vld [vmem:[%s2 + $0x120] sm:$0xff]
      %v1763 = vld [vmem:[%s2 + $0x128] sm:$0xff]
      %v1764 = vld [vmem:[%s2 + $0x130] sm:$0xff]
      %v1765 = vld [vmem:[%s2 + $0x138] sm:$0xff]
      %v1766 = vld [vmem:[%s2 + $0x140] sm:$0xff]
      %v1767 = vld [vmem:[%s2 + $0x148] sm:$0xff]
      %v1768 = vld [vmem:[%s2 + $0x150] sm:$0xff]
      %v1769 = vld [vmem:[%s2 + $0x158] sm:$0xff]
      %v1770 = vld [vmem:[%s2 + $0x160] sm:$0xff]
      %v1771 = vld [vmem:[%s2 + $0x168] sm:$0xff]
      %v1772 = vld [vmem:[%s2 + $0x170] sm:$0xff]
      %v1773 = vld [vmem:[%s2 + $0x178] sm:$0xff]
      %v1774 = vld [vmem:[%s2 + $0x180] sm:$0xff]
      %v1775 = vld [vmem:[%s2 + $0x188] sm:$0xff]
      %v1776 = vld [vmem:[%s2 + $0x190] sm:$0xff]
      %v1777 = vld [vmem:[%s2 + $0x198] sm:$0xff]
      %v1778 = vld [vmem:[%s2 + $0x1a0] sm:$0xff]
      %v1779 = vld [vmem:[%s2 + $0x1a8] sm:$0xff]
      %v1780 = vld [vmem:[%s2 + $0x1b0] sm:$0xff]
      %v1781 = vld [vmem:[%s2 + $0x1b8] sm:$0xff]
      %v1782 = vld [vmem:[%s2 + $0x1c0] sm:$0xff]
      %v1783 = vld [vmem:[%s2 + $0x1c8] sm:$0xff]
      %v1784 = vld [vmem:[%s2 + $0x1d0] sm:$0xff]
      %v1785 = vld [vmem:[%s2 + $0x1d8] sm:$0xff]
      %v1786 = vld [vmem:[%s2 + $0x1e0] sm:$0xff]
      %v1787 = vld [vmem:[%s2 + $0x1e8] sm:$0xff]
      %v1788 = vld [vmem:[%s2 + $0x1f0] sm:$0xff]
      %v1789 = vld [vmem:[%s2 + $0x1f8] sm:$0xff]
      %1791 = vset.pattern.permute.xlu0 0
      %1792 = vperm.xlu0 %1791, %v1726
      %v1793 = vpop.permute.xlu0 %1792
      %1796 = vset.pattern.permute.xlu0 0
      %1797 = vperm.xlu0 %1796, %v1727
      %v1798 = vpop.permute.xlu0 %1797
      %1801 = vset.pattern.permute.xlu0 0
      %1802 = vperm.xlu0 %1801, %v1728
      %v1803 = vpop.permute.xlu0 %1802
      %1806 = vset.pattern.permute.xlu0 0
      %1807 = vperm.xlu0 %1806, %v1729
      %v1808 = vpop.permute.xlu0 %1807
      %1811 = vset.pattern.permute.xlu0 0
      %1812 = vperm.xlu0 %1811, %v1730
      %v1813 = vpop.permute.xlu0 %1812
      %1816 = vset.pattern.permute.xlu0 0
      %1817 = vperm.xlu0 %1816, %v1731
      %v1818 = vpop.permute.xlu0 %1817
      %1821 = vset.pattern.permute.xlu0 0
      %1822 = vperm.xlu0 %1821, %v1732
      %v1823 = vpop.permute.xlu0 %1822
      %1826 = vset.pattern.permute.xlu0 0
      %1827 = vperm.xlu0 %1826, %v1733
      %v1828 = vpop.permute.xlu0 %1827
      %1831 = vset.pattern.permute.xlu0 0
      %1832 = vperm.xlu0 %1831, %v1734
      %v1833 = vpop.permute.xlu0 %1832
      %1836 = vset.pattern.permute.xlu0 0
      %1837 = vperm.xlu0 %1836, %v1735
      %v1838 = vpop.permute.xlu0 %1837
      %1841 = vset.pattern.permute.xlu0 0
      %1842 = vperm.xlu0 %1841, %v1736
      %v1843 = vpop.permute.xlu0 %1842
      %1846 = vset.pattern.permute.xlu0 0
      %1847 = vperm.xlu0 %1846, %v1737
      %v1848 = vpop.permute.xlu0 %1847
      %1851 = vset.pattern.permute.xlu0 0
      %1852 = vperm.xlu0 %1851, %v1738
      %v1853 = vpop.permute.xlu0 %1852
      %1856 = vset.pattern.permute.xlu0 0
      %1857 = vperm.xlu0 %1856, %v1739
      %v1858 = vpop.permute.xlu0 %1857
      %1861 = vset.pattern.permute.xlu0 0
      %1862 = vperm.xlu0 %1861, %v1740
      %v1863 = vpop.permute.xlu0 %1862
      %1866 = vset.pattern.permute.xlu0 0
      %1867 = vperm.xlu0 %1866, %v1741
      %v1868 = vpop.permute.xlu0 %1867
      %1871 = vset.pattern.permute.xlu0 0
      %1872 = vperm.xlu0 %1871, %v1742
      %v1873 = vpop.permute.xlu0 %1872
      %1876 = vset.pattern.permute.xlu0 0
      %1877 = vperm.xlu0 %1876, %v1743
      %v1878 = vpop.permute.xlu0 %1877
      %1881 = vset.pattern.permute.xlu0 0
      %1882 = vperm.xlu0 %1881, %v1744
      %v1883 = vpop.permute.xlu0 %1882
      %1886 = vset.pattern.permute.xlu0 0
      %1887 = vperm.xlu0 %1886, %v1745
      %v1888 = vpop.permute.xlu0 %1887
      %1891 = vset.pattern.permute.xlu0 0
      %1892 = vperm.xlu0 %1891, %v1746
      %v1893 = vpop.permute.xlu0 %1892
      %1896 = vset.pattern.permute.xlu0 0
      %1897 = vperm.xlu0 %1896, %v1747
      %v1898 = vpop.permute.xlu0 %1897
      %1901 = vset.pattern.permute.xlu0 0
      %1902 = vperm.xlu0 %1901, %v1748
      %v1903 = vpop.permute.xlu0 %1902
      %1906 = vset.pattern.permute.xlu0 0
      %1907 = vperm.xlu0 %1906, %v1749
      %v1908 = vpop.permute.xlu0 %1907
      %1911 = vset.pattern.permute.xlu0 0
      %1912 = vperm.xlu0 %1911, %v1750
      %v1913 = vpop.permute.xlu0 %1912
      %1916 = vset.pattern.permute.xlu0 0
      %1917 = vperm.xlu0 %1916, %v1751
      %v1918 = vpop.permute.xlu0 %1917
      %1921 = vset.pattern.permute.xlu0 0
      %1922 = vperm.xlu0 %1921, %v1752
      %v1923 = vpop.permute.xlu0 %1922
      %1926 = vset.pattern.permute.xlu0 0
      %1927 = vperm.xlu0 %1926, %v1753
      %v1928 = vpop.permute.xlu0 %1927
      %1931 = vset.pattern.permute.xlu0 0
      %1932 = vperm.xlu0 %1931, %v1754
      %v1933 = vpop.permute.xlu0 %1932
      %1936 = vset.pattern.permute.xlu0 0
      %1937 = vperm.xlu0 %1936, %v1755
      %v1938 = vpop.permute.xlu0 %1937
      %1941 = vset.pattern.permute.xlu0 0
      %1942 = vperm.xlu0 %1941, %v1756
      %v1943 = vpop.permute.xlu0 %1942
      %1946 = vset.pattern.permute.xlu0 0
      %1947 = vperm.xlu0 %1946, %v1757
      %v1948 = vpop.permute.xlu0 %1947
      %1951 = vset.pattern.permute.xlu0 0
      %1952 = vperm.xlu0 %1951, %v1758
      %v1953 = vpop.permute.xlu0 %1952
      %1956 = vset.pattern.permute.xlu0 0
      %1957 = vperm.xlu0 %1956, %v1759
      %v1958 = vpop.permute.xlu0 %1957
      %1961 = vset.pattern.permute.xlu0 0
      %1962 = vperm.xlu0 %1961, %v1760
      %v1963 = vpop.permute.xlu0 %1962
      %1966 = vset.pattern.permute.xlu0 0
      %1967 = vperm.xlu0 %1966, %v1761
      %v1968 = vpop.permute.xlu0 %1967
      %1971 = vset.pattern.permute.xlu0 0
      %1972 = vperm.xlu0 %1971, %v1762
      %v1973 = vpop.permute.xlu0 %1972
      %1976 = vset.pattern.permute.xlu0 0
      %1977 = vperm.xlu0 %1976, %v1763
      %v1978 = vpop.permute.xlu0 %1977
      %1981 = vset.pattern.permute.xlu0 0
      %1982 = vperm.xlu0 %1981, %v1764
      %v1983 = vpop.permute.xlu0 %1982
      %1986 = vset.pattern.permute.xlu0 0
      %1987 = vperm.xlu0 %1986, %v1765
      %v1988 = vpop.permute.xlu0 %1987
      %1991 = vset.pattern.permute.xlu0 0
      %1992 = vperm.xlu0 %1991, %v1766
      %v1993 = vpop.permute.xlu0 %1992
      %1996 = vset.pattern.permute.xlu0 0
      %1997 = vperm.xlu0 %1996, %v1767
      %v1998 = vpop.permute.xlu0 %1997
      %2001 = vset.pattern.permute.xlu0 0
      %2002 = vperm.xlu0 %2001, %v1768
      %v2003 = vpop.permute.xlu0 %2002
      %2006 = vset.pattern.permute.xlu0 0
      %2007 = vperm.xlu0 %2006, %v1769
      %v2008 = vpop.permute.xlu0 %2007
      %2011 = vset.pattern.permute.xlu0 0
      %2012 = vperm.xlu0 %2011, %v1770
      %v2013 = vpop.permute.xlu0 %2012
      %2016 = vset.pattern.permute.xlu0 0
      %2017 = vperm.xlu0 %2016, %v1771
      %v2018 = vpop.permute.xlu0 %2017
      %2021 = vset.pattern.permute.xlu0 0
      %2022 = vperm.xlu0 %2021, %v1772
      %v2023 = vpop.permute.xlu0 %2022
      %2026 = vset.pattern.permute.xlu0 0
      %2027 = vperm.xlu0 %2026, %v1773
      %v2028 = vpop.permute.xlu0 %2027
      %2031 = vset.pattern.permute.xlu0 0
      %2032 = vperm.xlu0 %2031, %v1774
      %v2033 = vpop.permute.xlu0 %2032
      %2036 = vset.pattern.permute.xlu0 0
      %2037 = vperm.xlu0 %2036, %v1775
      %v2038 = vpop.permute.xlu0 %2037
      %2041 = vset.pattern.permute.xlu0 0
      %2042 = vperm.xlu0 %2041, %v1776
      %v2043 = vpop.permute.xlu0 %2042
      %2046 = vset.pattern.permute.xlu0 0
      %2047 = vperm.xlu0 %2046, %v1777
      %v2048 = vpop.permute.xlu0 %2047
      %2051 = vset.pattern.permute.xlu0 0
      %2052 = vperm.xlu0 %2051, %v1778
      %v2053 = vpop.permute.xlu0 %2052
      %2056 = vset.pattern.permute.xlu0 0
      %2057 = vperm.xlu0 %2056, %v1779
      %v2058 = vpop.permute.xlu0 %2057
      %2061 = vset.pattern.permute.xlu0 0
      %2062 = vperm.xlu0 %2061, %v1780
      %v2063 = vpop.permute.xlu0 %2062
      %2066 = vset.pattern.permute.xlu0 0
      %2067 = vperm.xlu0 %2066, %v1781
      %v2068 = vpop.permute.xlu0 %2067
      %2071 = vset.pattern.permute.xlu0 0
      %2072 = vperm.xlu0 %2071, %v1782
      %v2073 = vpop.permute.xlu0 %2072
      %2076 = vset.pattern.permute.xlu0 0
      %2077 = vperm.xlu0 %2076, %v1783
      %v2078 = vpop.permute.xlu0 %2077
      %2081 = vset.pattern.permute.xlu0 0
      %2082 = vperm.xlu0 %2081, %v1784
      %v2083 = vpop.permute.xlu0 %2082
      %2086 = vset.pattern.permute.xlu0 0
      %2087 = vperm.xlu0 %2086, %v1785
      %v2088 = vpop.permute.xlu0 %2087
      %2091 = vset.pattern.permute.xlu0 0
      %2092 = vperm.xlu0 %2091, %v1786
      %v2093 = vpop.permute.xlu0 %2092
      %2096 = vset.pattern.permute.xlu0 0
      %2097 = vperm.xlu0 %2096, %v1787
      %v2098 = vpop.permute.xlu0 %2097
      %2101 = vset.pattern.permute.xlu0 0
      %2102 = vperm.xlu0 %2101, %v1788
      %v2103 = vpop.permute.xlu0 %2102
      %2106 = vset.pattern.permute.xlu0 0
      %2107 = vperm.xlu0 %2106, %v1789
      %v2108 = vpop.permute.xlu0 %2107
      %v2366 = vunpack.c.l.b16 %v1470
      %v2367 = vunpack.c.h.b16 %v1470
      %v2368 = vunpack.c.l.b16 %v1471
      %v2369 = vunpack.c.h.b16 %v1471
      %v2370 = vunpack.c.l.b16 %v1472
      %v2371 = vunpack.c.h.b16 %v1472
      %v2372 = vunpack.c.l.b16 %v1473
      %v2373 = vunpack.c.h.b16 %v1473
      %v2374 = vunpack.c.l.b16 %v1474
      %v2375 = vunpack.c.h.b16 %v1474
      %v2376 = vunpack.c.l.b16 %v1475
      %v2377 = vunpack.c.h.b16 %v1475
      %v2378 = vunpack.c.l.b16 %v1476
      %v2379 = vunpack.c.h.b16 %v1476
      %v2380 = vunpack.c.l.b16 %v1477
      %v2381 = vunpack.c.h.b16 %v1477
      %v2382 = vunpack.c.l.b16 %v1478
      %v2383 = vunpack.c.h.b16 %v1478
      %v2384 = vunpack.c.l.b16 %v1479
      %v2385 = vunpack.c.h.b16 %v1479
      %v2386 = vunpack.c.l.b16 %v1480
      %v2387 = vunpack.c.h.b16 %v1480
      %v2388 = vunpack.c.l.b16 %v1481
      %v2389 = vunpack.c.h.b16 %v1481
      %v2390 = vunpack.c.l.b16 %v1482
      %v2391 = vunpack.c.h.b16 %v1482
      %v2392 = vunpack.c.l.b16 %v1483
      %v2393 = vunpack.c.h.b16 %v1483
      %v2394 = vunpack.c.l.b16 %v1484
      %v2395 = vunpack.c.h.b16 %v1484
      %v2396 = vunpack.c.l.b16 %v1485
      %v2397 = vunpack.c.h.b16 %v1485
      %v2398 = vunpack.c.l.b16 %v1486
      %v2399 = vunpack.c.h.b16 %v1486
      %v2400 = vunpack.c.l.b16 %v1487
      %v2401 = vunpack.c.h.b16 %v1487
      %v2402 = vunpack.c.l.b16 %v1488
      %v2403 = vunpack.c.h.b16 %v1488
      %v2404 = vunpack.c.l.b16 %v1489
      %v2405 = vunpack.c.h.b16 %v1489
      %v2406 = vunpack.c.l.b16 %v1490
      %v2407 = vunpack.c.h.b16 %v1490
      %v2408 = vunpack.c.l.b16 %v1491
      %v2409 = vunpack.c.h.b16 %v1491
      %v2410 = vunpack.c.l.b16 %v1492
      %v2411 = vunpack.c.h.b16 %v1492
      %v2412 = vunpack.c.l.b16 %v1493
      %v2413 = vunpack.c.h.b16 %v1493
      %v2414 = vunpack.c.l.b16 %v1494
      %v2415 = vunpack.c.h.b16 %v1494
      %v2416 = vunpack.c.l.b16 %v1495
      %v2417 = vunpack.c.h.b16 %v1495
      %v2418 = vunpack.c.l.b16 %v1496
      %v2419 = vunpack.c.h.b16 %v1496
      %v2420 = vunpack.c.l.b16 %v1497
      %v2421 = vunpack.c.h.b16 %v1497
      %v2422 = vunpack.c.l.b16 %v1498
      %v2423 = vunpack.c.h.b16 %v1498
      %v2424 = vunpack.c.l.b16 %v1499
      %v2425 = vunpack.c.h.b16 %v1499
      %v2426 = vunpack.c.l.b16 %v1500
      %v2427 = vunpack.c.h.b16 %v1500
      %v2428 = vunpack.c.l.b16 %v1501
      %v2429 = vunpack.c.h.b16 %v1501
      %v2430 = vunpack.c.l.b16 %v1502
      %v2431 = vunpack.c.h.b16 %v1502
      %v2432 = vunpack.c.l.b16 %v1503
      %v2433 = vunpack.c.h.b16 %v1503
      %v2434 = vunpack.c.l.b16 %v1504
      %v2435 = vunpack.c.h.b16 %v1504
      %v2436 = vunpack.c.l.b16 %v1505
      %v2437 = vunpack.c.h.b16 %v1505
      %v2438 = vunpack.c.l.b16 %v1506
      %v2439 = vunpack.c.h.b16 %v1506
      %v2440 = vunpack.c.l.b16 %v1507
      %v2441 = vunpack.c.h.b16 %v1507
      %v2442 = vunpack.c.l.b16 %v1508
      %v2443 = vunpack.c.h.b16 %v1508
      %v2444 = vunpack.c.l.b16 %v1509
      %v2445 = vunpack.c.h.b16 %v1509
      %v2446 = vunpack.c.l.b16 %v1510
      %v2447 = vunpack.c.h.b16 %v1510
      %v2448 = vunpack.c.l.b16 %v1511
      %v2449 = vunpack.c.h.b16 %v1511
      %v2450 = vunpack.c.l.b16 %v1512
      %v2451 = vunpack.c.h.b16 %v1512
      %v2452 = vunpack.c.l.b16 %v1513
      %v2453 = vunpack.c.h.b16 %v1513
      %v2454 = vunpack.c.l.b16 %v1514
      %v2455 = vunpack.c.h.b16 %v1514
      %v2456 = vunpack.c.l.b16 %v1515
      %v2457 = vunpack.c.h.b16 %v1515
      %v2458 = vunpack.c.l.b16 %v1516
      %v2459 = vunpack.c.h.b16 %v1516
      %v2460 = vunpack.c.l.b16 %v1517
      %v2461 = vunpack.c.h.b16 %v1517
      %v2462 = vunpack.c.l.b16 %v1518
      %v2463 = vunpack.c.h.b16 %v1518
      %v2464 = vunpack.c.l.b16 %v1519
      %v2465 = vunpack.c.h.b16 %v1519
      %v2466 = vunpack.c.l.b16 %v1520
      %v2467 = vunpack.c.h.b16 %v1520
      %v2468 = vunpack.c.l.b16 %v1521
      %v2469 = vunpack.c.h.b16 %v1521
      %v2470 = vunpack.c.l.b16 %v1522
      %v2471 = vunpack.c.h.b16 %v1522
      %v2472 = vunpack.c.l.b16 %v1523
      %v2473 = vunpack.c.h.b16 %v1523
      %v2474 = vunpack.c.l.b16 %v1524
      %v2475 = vunpack.c.h.b16 %v1524
      %v2476 = vunpack.c.l.b16 %v1525
      %v2477 = vunpack.c.h.b16 %v1525
      %v2478 = vunpack.c.l.b16 %v1526
      %v2479 = vunpack.c.h.b16 %v1526
      %v2480 = vunpack.c.l.b16 %v1527
      %v2481 = vunpack.c.h.b16 %v1527
      %v2482 = vunpack.c.l.b16 %v1528
      %v2483 = vunpack.c.h.b16 %v1528
      %v2484 = vunpack.c.l.b16 %v1529
      %v2485 = vunpack.c.h.b16 %v1529
      %v2486 = vunpack.c.l.b16 %v1530
      %v2487 = vunpack.c.h.b16 %v1530
      %v2488 = vunpack.c.l.b16 %v1531
      %v2489 = vunpack.c.h.b16 %v1531
      %v2490 = vunpack.c.l.b16 %v1532
      %v2491 = vunpack.c.h.b16 %v1532
      %v2492 = vunpack.c.l.b16 %v1533
      %v2493 = vunpack.c.h.b16 %v1533
      %v2494 = vunpack.c.l.b16 %v1534
      %v2495 = vunpack.c.h.b16 %v1534
      %v2496 = vunpack.c.l.b16 %v1535
      %v2497 = vunpack.c.h.b16 %v1535
      %v2498 = vunpack.c.l.b16 %v1536
      %v2499 = vunpack.c.h.b16 %v1536
      %v2500 = vunpack.c.l.b16 %v1537
      %v2501 = vunpack.c.h.b16 %v1537
      %v2502 = vunpack.c.l.b16 %v1538
      %v2503 = vunpack.c.h.b16 %v1538
      %v2504 = vunpack.c.l.b16 %v1539
      %v2505 = vunpack.c.h.b16 %v1539
      %v2506 = vunpack.c.l.b16 %v1540
      %v2507 = vunpack.c.h.b16 %v1540
      %v2508 = vunpack.c.l.b16 %v1541
      %v2509 = vunpack.c.h.b16 %v1541
      %v2510 = vunpack.c.l.b16 %v1542
      %v2511 = vunpack.c.h.b16 %v1542
      %v2512 = vunpack.c.l.b16 %v1543
      %v2513 = vunpack.c.h.b16 %v1543
      %v2514 = vunpack.c.l.b16 %v1544
      %v2515 = vunpack.c.h.b16 %v1544
      %v2516 = vunpack.c.l.b16 %v1545
      %v2517 = vunpack.c.h.b16 %v1545
      %v2518 = vunpack.c.l.b16 %v1546
      %v2519 = vunpack.c.h.b16 %v1546
      %v2520 = vunpack.c.l.b16 %v1547
      %v2521 = vunpack.c.h.b16 %v1547
      %v2522 = vunpack.c.l.b16 %v1548
      %v2523 = vunpack.c.h.b16 %v1548
      %v2524 = vunpack.c.l.b16 %v1549
      %v2525 = vunpack.c.h.b16 %v1549
      %v2526 = vunpack.c.l.b16 %v1550
      %v2527 = vunpack.c.h.b16 %v1550
      %v2528 = vunpack.c.l.b16 %v1551
      %v2529 = vunpack.c.h.b16 %v1551
      %v2530 = vunpack.c.l.b16 %v1552
      %v2531 = vunpack.c.h.b16 %v1552
      %v2532 = vunpack.c.l.b16 %v1553
      %v2533 = vunpack.c.h.b16 %v1553
      %v2534 = vunpack.c.l.b16 %v1554
      %v2535 = vunpack.c.h.b16 %v1554
      %v2536 = vunpack.c.l.b16 %v1555
      %v2537 = vunpack.c.h.b16 %v1555
      %v2538 = vunpack.c.l.b16 %v1556
      %v2539 = vunpack.c.h.b16 %v1556
      %v2540 = vunpack.c.l.b16 %v1557
      %v2541 = vunpack.c.h.b16 %v1557
      %v2542 = vunpack.c.l.b16 %v1558
      %v2543 = vunpack.c.h.b16 %v1558
      %v2544 = vunpack.c.l.b16 %v1559
      %v2545 = vunpack.c.h.b16 %v1559
      %v2546 = vunpack.c.l.b16 %v1560
      %v2547 = vunpack.c.h.b16 %v1560
      %v2548 = vunpack.c.l.b16 %v1561
      %v2549 = vunpack.c.h.b16 %v1561
      %v2550 = vunpack.c.l.b16 %v1562
      %v2551 = vunpack.c.h.b16 %v1562
      %v2552 = vunpack.c.l.b16 %v1563
      %v2553 = vunpack.c.h.b16 %v1563
      %v2554 = vunpack.c.l.b16 %v1564
      %v2555 = vunpack.c.h.b16 %v1564
      %v2556 = vunpack.c.l.b16 %v1565
      %v2557 = vunpack.c.h.b16 %v1565
      %v2558 = vunpack.c.l.b16 %v1566
      %v2559 = vunpack.c.h.b16 %v1566
      %v2560 = vunpack.c.l.b16 %v1567
      %v2561 = vunpack.c.h.b16 %v1567
      %v2562 = vunpack.c.l.b16 %v1568
      %v2563 = vunpack.c.h.b16 %v1568
      %v2564 = vunpack.c.l.b16 %v1569
      %v2565 = vunpack.c.h.b16 %v1569
      %v2566 = vunpack.c.l.b16 %v1570
      %v2567 = vunpack.c.h.b16 %v1570
      %v2568 = vunpack.c.l.b16 %v1571
      %v2569 = vunpack.c.h.b16 %v1571
      %v2570 = vunpack.c.l.b16 %v1572
      %v2571 = vunpack.c.h.b16 %v1572
      %v2572 = vunpack.c.l.b16 %v1573
      %v2573 = vunpack.c.h.b16 %v1573
      %v2574 = vunpack.c.l.b16 %v1574
      %v2575 = vunpack.c.h.b16 %v1574
      %v2576 = vunpack.c.l.b16 %v1575
      %v2577 = vunpack.c.h.b16 %v1575
      %v2578 = vunpack.c.l.b16 %v1576
      %v2579 = vunpack.c.h.b16 %v1576
      %v2580 = vunpack.c.l.b16 %v1577
      %v2581 = vunpack.c.h.b16 %v1577
      %v2582 = vunpack.c.l.b16 %v1578
      %v2583 = vunpack.c.h.b16 %v1578
      %v2584 = vunpack.c.l.b16 %v1579
      %v2585 = vunpack.c.h.b16 %v1579
      %v2586 = vunpack.c.l.b16 %v1580
      %v2587 = vunpack.c.h.b16 %v1580
      %v2588 = vunpack.c.l.b16 %v1581
      %v2589 = vunpack.c.h.b16 %v1581
      %v2590 = vunpack.c.l.b16 %v1582
      %v2591 = vunpack.c.h.b16 %v1582
      %v2592 = vunpack.c.l.b16 %v1583
      %v2593 = vunpack.c.h.b16 %v1583
      %v2594 = vunpack.c.l.b16 %v1584
      %v2595 = vunpack.c.h.b16 %v1584
      %v2596 = vunpack.c.l.b16 %v1585
      %v2597 = vunpack.c.h.b16 %v1585
      %v2598 = vunpack.c.l.b16 %v1586
      %v2599 = vunpack.c.h.b16 %v1586
      %v2600 = vunpack.c.l.b16 %v1587
      %v2601 = vunpack.c.h.b16 %v1587
      %v2602 = vunpack.c.l.b16 %v1588
      %v2603 = vunpack.c.h.b16 %v1588
      %v2604 = vunpack.c.l.b16 %v1589
      %v2605 = vunpack.c.h.b16 %v1589
      %v2606 = vunpack.c.l.b16 %v1590
      %v2607 = vunpack.c.h.b16 %v1590
      %v2608 = vunpack.c.l.b16 %v1591
      %v2609 = vunpack.c.h.b16 %v1591
      %v2610 = vunpack.c.l.b16 %v1592
      %v2611 = vunpack.c.h.b16 %v1592
      %v2612 = vunpack.c.l.b16 %v1593
      %v2613 = vunpack.c.h.b16 %v1593
      %v2614 = vunpack.c.l.b16 %v1594
      %v2615 = vunpack.c.h.b16 %v1594
      %v2616 = vunpack.c.l.b16 %v1595
      %v2617 = vunpack.c.h.b16 %v1595
      %v2618 = vunpack.c.l.b16 %v1596
      %v2619 = vunpack.c.h.b16 %v1596
      %v2620 = vunpack.c.l.b16 %v1597
      %v2621 = vunpack.c.h.b16 %v1597
      %v2622 = vunpack.c.l.b16 %v1598
      %v2623 = vunpack.c.h.b16 %v1598
      %v2624 = vunpack.c.l.b16 %v1599
      %v2625 = vunpack.c.h.b16 %v1599
      %v2626 = vunpack.c.l.b16 %v1600
      %v2627 = vunpack.c.h.b16 %v1600
      %v2628 = vunpack.c.l.b16 %v1601
      %v2629 = vunpack.c.h.b16 %v1601
      %v2630 = vunpack.c.l.b16 %v1602
      %v2631 = vunpack.c.h.b16 %v1602
      %v2632 = vunpack.c.l.b16 %v1603
      %v2633 = vunpack.c.h.b16 %v1603
      %v2634 = vunpack.c.l.b16 %v1604
      %v2635 = vunpack.c.h.b16 %v1604
      %v2636 = vunpack.c.l.b16 %v1605
      %v2637 = vunpack.c.h.b16 %v1605
      %v2638 = vunpack.c.l.b16 %v1606
      %v2639 = vunpack.c.h.b16 %v1606
      %v2640 = vunpack.c.l.b16 %v1607
      %v2641 = vunpack.c.h.b16 %v1607
      %v2642 = vunpack.c.l.b16 %v1608
      %v2643 = vunpack.c.h.b16 %v1608
      %v2644 = vunpack.c.l.b16 %v1609
      %v2645 = vunpack.c.h.b16 %v1609
      %v2646 = vunpack.c.l.b16 %v1610
      %v2647 = vunpack.c.h.b16 %v1610
      %v2648 = vunpack.c.l.b16 %v1611
      %v2649 = vunpack.c.h.b16 %v1611
      %v2650 = vunpack.c.l.b16 %v1612
      %v2651 = vunpack.c.h.b16 %v1612
      %v2652 = vunpack.c.l.b16 %v1613
      %v2653 = vunpack.c.h.b16 %v1613
      %v2654 = vunpack.c.l.b16 %v1614
      %v2655 = vunpack.c.h.b16 %v1614
      %v2656 = vunpack.c.l.b16 %v1615
      %v2657 = vunpack.c.h.b16 %v1615
      %v2658 = vunpack.c.l.b16 %v1616
      %v2659 = vunpack.c.h.b16 %v1616
      %v2660 = vunpack.c.l.b16 %v1617
      %v2661 = vunpack.c.h.b16 %v1617
      %v2662 = vunpack.c.l.b16 %v1618
      %v2663 = vunpack.c.h.b16 %v1618
      %v2664 = vunpack.c.l.b16 %v1619
      %v2665 = vunpack.c.h.b16 %v1619
      %v2666 = vunpack.c.l.b16 %v1620
      %v2667 = vunpack.c.h.b16 %v1620
      %v2668 = vunpack.c.l.b16 %v1621
      %v2669 = vunpack.c.h.b16 %v1621
      %v2670 = vunpack.c.l.b16 %v1622
      %v2671 = vunpack.c.h.b16 %v1622
      %v2672 = vunpack.c.l.b16 %v1623
      %v2673 = vunpack.c.h.b16 %v1623
      %v2674 = vunpack.c.l.b16 %v1624
      %v2675 = vunpack.c.h.b16 %v1624
      %v2676 = vunpack.c.l.b16 %v1625
      %v2677 = vunpack.c.h.b16 %v1625
      %v2678 = vunpack.c.l.b16 %v1626
      %v2679 = vunpack.c.h.b16 %v1626
      %v2680 = vunpack.c.l.b16 %v1627
      %v2681 = vunpack.c.h.b16 %v1627
      %v2682 = vunpack.c.l.b16 %v1628
      %v2683 = vunpack.c.h.b16 %v1628
      %v2684 = vunpack.c.l.b16 %v1629
      %v2685 = vunpack.c.h.b16 %v1629
      %v2686 = vunpack.c.l.b16 %v1630
      %v2687 = vunpack.c.h.b16 %v1630
      %v2688 = vunpack.c.l.b16 %v1631
      %v2689 = vunpack.c.h.b16 %v1631
      %v2690 = vunpack.c.l.b16 %v1632
      %v2691 = vunpack.c.h.b16 %v1632
      %v2692 = vunpack.c.l.b16 %v1633
      %v2693 = vunpack.c.h.b16 %v1633
      %v2694 = vunpack.c.l.b16 %v1634
      %v2695 = vunpack.c.h.b16 %v1634
      %v2696 = vunpack.c.l.b16 %v1635
      %v2697 = vunpack.c.h.b16 %v1635
      %v2698 = vunpack.c.l.b16 %v1636
      %v2699 = vunpack.c.h.b16 %v1636
      %v2700 = vunpack.c.l.b16 %v1637
      %v2701 = vunpack.c.h.b16 %v1637
      %v2702 = vunpack.c.l.b16 %v1638
      %v2703 = vunpack.c.h.b16 %v1638
      %v2704 = vunpack.c.l.b16 %v1639
      %v2705 = vunpack.c.h.b16 %v1639
      %v2706 = vunpack.c.l.b16 %v1640
      %v2707 = vunpack.c.h.b16 %v1640
      %v2708 = vunpack.c.l.b16 %v1641
      %v2709 = vunpack.c.h.b16 %v1641
      %v2710 = vunpack.c.l.b16 %v1642
      %v2711 = vunpack.c.h.b16 %v1642
      %v2712 = vunpack.c.l.b16 %v1643
      %v2713 = vunpack.c.h.b16 %v1643
      %v2714 = vunpack.c.l.b16 %v1644
      %v2715 = vunpack.c.h.b16 %v1644
      %v2716 = vunpack.c.l.b16 %v1645
      %v2717 = vunpack.c.h.b16 %v1645
      %v2718 = vunpack.c.l.b16 %v1646
      %v2719 = vunpack.c.h.b16 %v1646
      %v2720 = vunpack.c.l.b16 %v1647
      %v2721 = vunpack.c.h.b16 %v1647
      %v2722 = vunpack.c.l.b16 %v1648
      %v2723 = vunpack.c.h.b16 %v1648
      %v2724 = vunpack.c.l.b16 %v1649
      %v2725 = vunpack.c.h.b16 %v1649
      %v2726 = vunpack.c.l.b16 %v1650
      %v2727 = vunpack.c.h.b16 %v1650
      %v2728 = vunpack.c.l.b16 %v1651
      %v2729 = vunpack.c.h.b16 %v1651
      %v2730 = vunpack.c.l.b16 %v1652
      %v2731 = vunpack.c.h.b16 %v1652
      %v2732 = vunpack.c.l.b16 %v1653
      %v2733 = vunpack.c.h.b16 %v1653
      %v2734 = vunpack.c.l.b16 %v1654
      %v2735 = vunpack.c.h.b16 %v1654
      %v2736 = vunpack.c.l.b16 %v1655
      %v2737 = vunpack.c.h.b16 %v1655
      %v2738 = vunpack.c.l.b16 %v1656
      %v2739 = vunpack.c.h.b16 %v1656
      %v2740 = vunpack.c.l.b16 %v1657
      %v2741 = vunpack.c.h.b16 %v1657
      %v2742 = vunpack.c.l.b16 %v1658
      %v2743 = vunpack.c.h.b16 %v1658
      %v2744 = vunpack.c.l.b16 %v1659
      %v2745 = vunpack.c.h.b16 %v1659
      %v2746 = vunpack.c.l.b16 %v1660
      %v2747 = vunpack.c.h.b16 %v1660
      %v2748 = vunpack.c.l.b16 %v1661
      %v2749 = vunpack.c.h.b16 %v1661
      %v2750 = vunpack.c.l.b16 %v1662
      %v2751 = vunpack.c.h.b16 %v1662
      %v2752 = vunpack.c.l.b16 %v1663
      %v2753 = vunpack.c.h.b16 %v1663
      %v2754 = vunpack.c.l.b16 %v1664
      %v2755 = vunpack.c.h.b16 %v1664
      %v2756 = vunpack.c.l.b16 %v1665
      %v2757 = vunpack.c.h.b16 %v1665
      %v2758 = vunpack.c.l.b16 %v1666
      %v2759 = vunpack.c.h.b16 %v1666
      %v2760 = vunpack.c.l.b16 %v1667
      %v2761 = vunpack.c.h.b16 %v1667
      %v2762 = vunpack.c.l.b16 %v1668
      %v2763 = vunpack.c.h.b16 %v1668
      %v2764 = vunpack.c.l.b16 %v1669
      %v2765 = vunpack.c.h.b16 %v1669
      %v2766 = vunpack.c.l.b16 %v1670
      %v2767 = vunpack.c.h.b16 %v1670
      %v2768 = vunpack.c.l.b16 %v1671
      %v2769 = vunpack.c.h.b16 %v1671
      %v2770 = vunpack.c.l.b16 %v1672
      %v2771 = vunpack.c.h.b16 %v1672
      %v2772 = vunpack.c.l.b16 %v1673
      %v2773 = vunpack.c.h.b16 %v1673
      %v2774 = vunpack.c.l.b16 %v1674
      %v2775 = vunpack.c.h.b16 %v1674
      %v2776 = vunpack.c.l.b16 %v1675
      %v2777 = vunpack.c.h.b16 %v1675
      %v2778 = vunpack.c.l.b16 %v1676
      %v2779 = vunpack.c.h.b16 %v1676
      %v2780 = vunpack.c.l.b16 %v1677
      %v2781 = vunpack.c.h.b16 %v1677
      %v2782 = vunpack.c.l.b16 %v1678
      %v2783 = vunpack.c.h.b16 %v1678
      %v2784 = vunpack.c.l.b16 %v1679
      %v2785 = vunpack.c.h.b16 %v1679
      %v2786 = vunpack.c.l.b16 %v1680
      %v2787 = vunpack.c.h.b16 %v1680
      %v2788 = vunpack.c.l.b16 %v1681
      %v2789 = vunpack.c.h.b16 %v1681
      %v2790 = vunpack.c.l.b16 %v1682
      %v2791 = vunpack.c.h.b16 %v1682
      %v2792 = vunpack.c.l.b16 %v1683
      %v2793 = vunpack.c.h.b16 %v1683
      %v2794 = vunpack.c.l.b16 %v1684
      %v2795 = vunpack.c.h.b16 %v1684
      %v2796 = vunpack.c.l.b16 %v1685
      %v2797 = vunpack.c.h.b16 %v1685
      %v2798 = vunpack.c.l.b16 %v1686
      %v2799 = vunpack.c.h.b16 %v1686
      %v2800 = vunpack.c.l.b16 %v1687
      %v2801 = vunpack.c.h.b16 %v1687
      %v2802 = vunpack.c.l.b16 %v1688
      %v2803 = vunpack.c.h.b16 %v1688
      %v2804 = vunpack.c.l.b16 %v1689
      %v2805 = vunpack.c.h.b16 %v1689
      %v2806 = vunpack.c.l.b16 %v1690
      %v2807 = vunpack.c.h.b16 %v1690
      %v2808 = vunpack.c.l.b16 %v1691
      %v2809 = vunpack.c.h.b16 %v1691
      %v2810 = vunpack.c.l.b16 %v1692
      %v2811 = vunpack.c.h.b16 %v1692
      %v2812 = vunpack.c.l.b16 %v1693
      %v2813 = vunpack.c.h.b16 %v1693
      %v2814 = vunpack.c.l.b16 %v1694
      %v2815 = vunpack.c.h.b16 %v1694
      %v2816 = vunpack.c.l.b16 %v1695
      %v2817 = vunpack.c.h.b16 %v1695
      %v2818 = vunpack.c.l.b16 %v1696
      %v2819 = vunpack.c.h.b16 %v1696
      %v2820 = vunpack.c.l.b16 %v1697
      %v2821 = vunpack.c.h.b16 %v1697
      %v2822 = vunpack.c.l.b16 %v1698
      %v2823 = vunpack.c.h.b16 %v1698
      %v2824 = vunpack.c.l.b16 %v1699
      %v2825 = vunpack.c.h.b16 %v1699
      %v2826 = vunpack.c.l.b16 %v1700
      %v2827 = vunpack.c.h.b16 %v1700
      %v2828 = vunpack.c.l.b16 %v1701
      %v2829 = vunpack.c.h.b16 %v1701
      %v2830 = vunpack.c.l.b16 %v1702
      %v2831 = vunpack.c.h.b16 %v1702
      %v2832 = vunpack.c.l.b16 %v1703
      %v2833 = vunpack.c.h.b16 %v1703
      %v2834 = vunpack.c.l.b16 %v1704
      %v2835 = vunpack.c.h.b16 %v1704
      %v2836 = vunpack.c.l.b16 %v1705
      %v2837 = vunpack.c.h.b16 %v1705
      %v2838 = vunpack.c.l.b16 %v1706
      %v2839 = vunpack.c.h.b16 %v1706
      %v2840 = vunpack.c.l.b16 %v1707
      %v2841 = vunpack.c.h.b16 %v1707
      %v2842 = vunpack.c.l.b16 %v1708
      %v2843 = vunpack.c.h.b16 %v1708
      %v2844 = vunpack.c.l.b16 %v1709
      %v2845 = vunpack.c.h.b16 %v1709
      %v2846 = vunpack.c.l.b16 %v1710
      %v2847 = vunpack.c.h.b16 %v1710
      %v2848 = vunpack.c.l.b16 %v1711
      %v2849 = vunpack.c.h.b16 %v1711
      %v2850 = vunpack.c.l.b16 %v1712
      %v2851 = vunpack.c.h.b16 %v1712
      %v2852 = vunpack.c.l.b16 %v1713
      %v2853 = vunpack.c.h.b16 %v1713
      %v2854 = vunpack.c.l.b16 %v1714
      %v2855 = vunpack.c.h.b16 %v1714
      %v2856 = vunpack.c.l.b16 %v1715
      %v2857 = vunpack.c.h.b16 %v1715
      %v2858 = vunpack.c.l.b16 %v1716
      %v2859 = vunpack.c.h.b16 %v1716
      %v2860 = vunpack.c.l.b16 %v1717
      %v2861 = vunpack.c.h.b16 %v1717
      %v2862 = vunpack.c.l.b16 %v1718
      %v2863 = vunpack.c.h.b16 %v1718
      %v2864 = vunpack.c.l.b16 %v1719
      %v2865 = vunpack.c.h.b16 %v1719
      %v2866 = vunpack.c.l.b16 %v1720
      %v2867 = vunpack.c.h.b16 %v1720
      %v2868 = vunpack.c.l.b16 %v1721
      %v2869 = vunpack.c.h.b16 %v1721
      %v2870 = vunpack.c.l.b16 %v1722
      %v2871 = vunpack.c.h.b16 %v1722
      %v2872 = vunpack.c.l.b16 %v1723
      %v2873 = vunpack.c.h.b16 %v1723
      %v2874 = vunpack.c.l.b16 %v1724
      %v2875 = vunpack.c.h.b16 %v1724
      %v2876 = vunpack.c.l.b16 %v1725
      %v2877 = vunpack.c.h.b16 %v1725
      %v2878 = vpack.c.b16 %v2374, %v2366
      %v2879 = vpack.c.b16 %v2375, %v2367
      %v2880 = vpack.c.b16 %v2376, %v2368
      %v2881 = vpack.c.b16 %v2377, %v2369
      %v2882 = vpack.c.b16 %v2378, %v2370
      %v2883 = vpack.c.b16 %v2379, %v2371
      %v2884 = vpack.c.b16 %v2380, %v2372
      %v2885 = vpack.c.b16 %v2381, %v2373
      %v2886 = vpack.c.b16 %v2390, %v2382
      %v2887 = vpack.c.b16 %v2391, %v2383
      %v2888 = vpack.c.b16 %v2392, %v2384
      %v2889 = vpack.c.b16 %v2393, %v2385
      %v2890 = vpack.c.b16 %v2394, %v2386
      %v2891 = vpack.c.b16 %v2395, %v2387
      %v2892 = vpack.c.b16 %v2396, %v2388
      %v2893 = vpack.c.b16 %v2397, %v2389
      %v2894 = vpack.c.b16 %v2406, %v2398
      %v2895 = vpack.c.b16 %v2407, %v2399
      %v2896 = vpack.c.b16 %v2408, %v2400
      %v2897 = vpack.c.b16 %v2409, %v2401
      %v2898 = vpack.c.b16 %v2410, %v2402
      %v2899 = vpack.c.b16 %v2411, %v2403
      %v2900 = vpack.c.b16 %v2412, %v2404
      %v2901 = vpack.c.b16 %v2413, %v2405
      %v2902 = vpack.c.b16 %v2422, %v2414
      %v2903 = vpack.c.b16 %v2423, %v2415
      %v2904 = vpack.c.b16 %v2424, %v2416
      %v2905 = vpack.c.b16 %v2425, %v2417
      %v2906 = vpack.c.b16 %v2426, %v2418
      %v2907 = vpack.c.b16 %v2427, %v2419
      %v2908 = vpack.c.b16 %v2428, %v2420
      %v2909 = vpack.c.b16 %v2429, %v2421
      %v2910 = vpack.c.b16 %v2438, %v2430
      %v2911 = vpack.c.b16 %v2439, %v2431
      %v2912 = vpack.c.b16 %v2440, %v2432
      %v2913 = vpack.c.b16 %v2441, %v2433
      %v2914 = vpack.c.b16 %v2442, %v2434
      %v2915 = vpack.c.b16 %v2443, %v2435
      %v2916 = vpack.c.b16 %v2444, %v2436
      %v2917 = vpack.c.b16 %v2445, %v2437
      %v2918 = vpack.c.b16 %v2454, %v2446
      %v2919 = vpack.c.b16 %v2455, %v2447
      %v2920 = vpack.c.b16 %v2456, %v2448
      %v2921 = vpack.c.b16 %v2457, %v2449
      %v2922 = vpack.c.b16 %v2458, %v2450
      %v2923 = vpack.c.b16 %v2459, %v2451
      %v2924 = vpack.c.b16 %v2460, %v2452
      %v2925 = vpack.c.b16 %v2461, %v2453
      %v2926 = vpack.c.b16 %v2470, %v2462
      %v2927 = vpack.c.b16 %v2471, %v2463
      %v2928 = vpack.c.b16 %v2472, %v2464
      %v2929 = vpack.c.b16 %v2473, %v2465
      %v2930 = vpack.c.b16 %v2474, %v2466
      %v2931 = vpack.c.b16 %v2475, %v2467
      %v2932 = vpack.c.b16 %v2476, %v2468
      %v2933 = vpack.c.b16 %v2477, %v2469
      %v2934 = vpack.c.b16 %v2486, %v2478
      %v2935 = vpack.c.b16 %v2487, %v2479
      %v2936 = vpack.c.b16 %v2488, %v2480
      %v2937 = vpack.c.b16 %v2489, %v2481
      %v2938 = vpack.c.b16 %v2490, %v2482
      %v2939 = vpack.c.b16 %v2491, %v2483
      %v2940 = vpack.c.b16 %v2492, %v2484
      %v2941 = vpack.c.b16 %v2493, %v2485
      %v2942 = vpack.c.b16 %v2502, %v2494
      %v2943 = vpack.c.b16 %v2503, %v2495
      %v2944 = vpack.c.b16 %v2504, %v2496
      %v2945 = vpack.c.b16 %v2505, %v2497
      %v2946 = vpack.c.b16 %v2506, %v2498
      %v2947 = vpack.c.b16 %v2507, %v2499
      %v2948 = vpack.c.b16 %v2508, %v2500
      %v2949 = vpack.c.b16 %v2509, %v2501
      %v2950 = vpack.c.b16 %v2518, %v2510
      %v2951 = vpack.c.b16 %v2519, %v2511
      %v2952 = vpack.c.b16 %v2520, %v2512
      %v2953 = vpack.c.b16 %v2521, %v2513
      %v2954 = vpack.c.b16 %v2522, %v2514
      %v2955 = vpack.c.b16 %v2523, %v2515
      %v2956 = vpack.c.b16 %v2524, %v2516
      %v2957 = vpack.c.b16 %v2525, %v2517
      %v2958 = vpack.c.b16 %v2534, %v2526
      %v2959 = vpack.c.b16 %v2535, %v2527
      %v2960 = vpack.c.b16 %v2536, %v2528
      %v2961 = vpack.c.b16 %v2537, %v2529
      %v2962 = vpack.c.b16 %v2538, %v2530
      %v2963 = vpack.c.b16 %v2539, %v2531
      %v2964 = vpack.c.b16 %v2540, %v2532
      %v2965 = vpack.c.b16 %v2541, %v2533
      %v2966 = vpack.c.b16 %v2550, %v2542
      %v2967 = vpack.c.b16 %v2551, %v2543
      %v2968 = vpack.c.b16 %v2552, %v2544
      %v2969 = vpack.c.b16 %v2553, %v2545
      %v2970 = vpack.c.b16 %v2554, %v2546
      %v2971 = vpack.c.b16 %v2555, %v2547
      %v2972 = vpack.c.b16 %v2556, %v2548
      %v2973 = vpack.c.b16 %v2557, %v2549
      %v2974 = vpack.c.b16 %v2566, %v2558
      %v2975 = vpack.c.b16 %v2567, %v2559
      %v2976 = vpack.c.b16 %v2568, %v2560
      %v2977 = vpack.c.b16 %v2569, %v2561
      %v2978 = vpack.c.b16 %v2570, %v2562
      %v2979 = vpack.c.b16 %v2571, %v2563
      %v2980 = vpack.c.b16 %v2572, %v2564
      %v2981 = vpack.c.b16 %v2573, %v2565
      %v2982 = vpack.c.b16 %v2582, %v2574
      %v2983 = vpack.c.b16 %v2583, %v2575
      %v2984 = vpack.c.b16 %v2584, %v2576
      %v2985 = vpack.c.b16 %v2585, %v2577
      %v2986 = vpack.c.b16 %v2586, %v2578
      %v2987 = vpack.c.b16 %v2587, %v2579
      %v2988 = vpack.c.b16 %v2588, %v2580
      %v2989 = vpack.c.b16 %v2589, %v2581
      %v2990 = vpack.c.b16 %v2598, %v2590
      %v2991 = vpack.c.b16 %v2599, %v2591
      %v2992 = vpack.c.b16 %v2600, %v2592
      %v2993 = vpack.c.b16 %v2601, %v2593
      %v2994 = vpack.c.b16 %v2602, %v2594
      %v2995 = vpack.c.b16 %v2603, %v2595
      %v2996 = vpack.c.b16 %v2604, %v2596
      %v2997 = vpack.c.b16 %v2605, %v2597
      %v2998 = vpack.c.b16 %v2614, %v2606
      %v2999 = vpack.c.b16 %v2615, %v2607
      %v3000 = vpack.c.b16 %v2616, %v2608
      %v3001 = vpack.c.b16 %v2617, %v2609
      %v3002 = vpack.c.b16 %v2618, %v2610
      %v3003 = vpack.c.b16 %v2619, %v2611
      %v3004 = vpack.c.b16 %v2620, %v2612
      %v3005 = vpack.c.b16 %v2621, %v2613
      %v3006 = vpack.c.b16 %v2630, %v2622
      %v3007 = vpack.c.b16 %v2631, %v2623
      %v3008 = vpack.c.b16 %v2632, %v2624
      %v3009 = vpack.c.b16 %v2633, %v2625
      %v3010 = vpack.c.b16 %v2634, %v2626
      %v3011 = vpack.c.b16 %v2635, %v2627
      %v3012 = vpack.c.b16 %v2636, %v2628
      %v3013 = vpack.c.b16 %v2637, %v2629
      %v3014 = vpack.c.b16 %v2646, %v2638
      %v3015 = vpack.c.b16 %v2647, %v2639
      %v3016 = vpack.c.b16 %v2648, %v2640
      %v3017 = vpack.c.b16 %v2649, %v2641
      %v3018 = vpack.c.b16 %v2650, %v2642
      %v3019 = vpack.c.b16 %v2651, %v2643
      %v3020 = vpack.c.b16 %v2652, %v2644
      %v3021 = vpack.c.b16 %v2653, %v2645
      %v3022 = vpack.c.b16 %v2662, %v2654
      %v3023 = vpack.c.b16 %v2663, %v2655
      %v3024 = vpack.c.b16 %v2664, %v2656
      %v3025 = vpack.c.b16 %v2665, %v2657
      %v3026 = vpack.c.b16 %v2666, %v2658
      %v3027 = vpack.c.b16 %v2667, %v2659
      %v3028 = vpack.c.b16 %v2668, %v2660
      %v3029 = vpack.c.b16 %v2669, %v2661
      %v3030 = vpack.c.b16 %v2678, %v2670
      %v3031 = vpack.c.b16 %v2679, %v2671
      %v3032 = vpack.c.b16 %v2680, %v2672
      %v3033 = vpack.c.b16 %v2681, %v2673
      %v3034 = vpack.c.b16 %v2682, %v2674
      %v3035 = vpack.c.b16 %v2683, %v2675
      %v3036 = vpack.c.b16 %v2684, %v2676
      %v3037 = vpack.c.b16 %v2685, %v2677
      %v3038 = vpack.c.b16 %v2694, %v2686
      %v3039 = vpack.c.b16 %v2695, %v2687
      %v3040 = vpack.c.b16 %v2696, %v2688
      %v3041 = vpack.c.b16 %v2697, %v2689
      %v3042 = vpack.c.b16 %v2698, %v2690
      %v3043 = vpack.c.b16 %v2699, %v2691
      %v3044 = vpack.c.b16 %v2700, %v2692
      %v3045 = vpack.c.b16 %v2701, %v2693
      %v3046 = vpack.c.b16 %v2710, %v2702
      %v3047 = vpack.c.b16 %v2711, %v2703
      %v3048 = vpack.c.b16 %v2712, %v2704
      %v3049 = vpack.c.b16 %v2713, %v2705
      %v3050 = vpack.c.b16 %v2714, %v2706
      %v3051 = vpack.c.b16 %v2715, %v2707
      %v3052 = vpack.c.b16 %v2716, %v2708
      %v3053 = vpack.c.b16 %v2717, %v2709
      %v3054 = vpack.c.b16 %v2726, %v2718
      %v3055 = vpack.c.b16 %v2727, %v2719
      %v3056 = vpack.c.b16 %v2728, %v2720
      %v3057 = vpack.c.b16 %v2729, %v2721
      %v3058 = vpack.c.b16 %v2730, %v2722
      %v3059 = vpack.c.b16 %v2731, %v2723
      %v3060 = vpack.c.b16 %v2732, %v2724
      %v3061 = vpack.c.b16 %v2733, %v2725
      %v3062 = vpack.c.b16 %v2742, %v2734
      %v3063 = vpack.c.b16 %v2743, %v2735
      %v3064 = vpack.c.b16 %v2744, %v2736
      %v3065 = vpack.c.b16 %v2745, %v2737
      %v3066 = vpack.c.b16 %v2746, %v2738
      %v3067 = vpack.c.b16 %v2747, %v2739
      %v3068 = vpack.c.b16 %v2748, %v2740
      %v3069 = vpack.c.b16 %v2749, %v2741
      %v3070 = vpack.c.b16 %v2758, %v2750
      %v3071 = vpack.c.b16 %v2759, %v2751
      %v3072 = vpack.c.b16 %v2760, %v2752
      %v3073 = vpack.c.b16 %v2761, %v2753
      %v3074 = vpack.c.b16 %v2762, %v2754
      %v3075 = vpack.c.b16 %v2763, %v2755
      %v3076 = vpack.c.b16 %v2764, %v2756
      %v3077 = vpack.c.b16 %v2765, %v2757
      %v3078 = vpack.c.b16 %v2774, %v2766
      %v3079 = vpack.c.b16 %v2775, %v2767
      %v3080 = vpack.c.b16 %v2776, %v2768
      %v3081 = vpack.c.b16 %v2777, %v2769
      %v3082 = vpack.c.b16 %v2778, %v2770
      %v3083 = vpack.c.b16 %v2779, %v2771
      %v3084 = vpack.c.b16 %v2780, %v2772
      %v3085 = vpack.c.b16 %v2781, %v2773
      %v3086 = vpack.c.b16 %v2790, %v2782
      %v3087 = vpack.c.b16 %v2791, %v2783
      %v3088 = vpack.c.b16 %v2792, %v2784
      %v3089 = vpack.c.b16 %v2793, %v2785
      %v3090 = vpack.c.b16 %v2794, %v2786
      %v3091 = vpack.c.b16 %v2795, %v2787
      %v3092 = vpack.c.b16 %v2796, %v2788
      %v3093 = vpack.c.b16 %v2797, %v2789
      %v3094 = vpack.c.b16 %v2806, %v2798
      %v3095 = vpack.c.b16 %v2807, %v2799
      %v3096 = vpack.c.b16 %v2808, %v2800
      %v3097 = vpack.c.b16 %v2809, %v2801
      %v3098 = vpack.c.b16 %v2810, %v2802
      %v3099 = vpack.c.b16 %v2811, %v2803
      %v3100 = vpack.c.b16 %v2812, %v2804
      %v3101 = vpack.c.b16 %v2813, %v2805
      %v3102 = vpack.c.b16 %v2822, %v2814
      %v3103 = vpack.c.b16 %v2823, %v2815
      %v3104 = vpack.c.b16 %v2824, %v2816
      %v3105 = vpack.c.b16 %v2825, %v2817
      %v3106 = vpack.c.b16 %v2826, %v2818
      %v3107 = vpack.c.b16 %v2827, %v2819
      %v3108 = vpack.c.b16 %v2828, %v2820
      %v3109 = vpack.c.b16 %v2829, %v2821
      %v3110 = vpack.c.b16 %v2838, %v2830
      %v3111 = vpack.c.b16 %v2839, %v2831
      %v3112 = vpack.c.b16 %v2840, %v2832
      %v3113 = vpack.c.b16 %v2841, %v2833
      %v3114 = vpack.c.b16 %v2842, %v2834
      %v3115 = vpack.c.b16 %v2843, %v2835
      %v3116 = vpack.c.b16 %v2844, %v2836
      %v3117 = vpack.c.b16 %v2845, %v2837
      %v3118 = vpack.c.b16 %v2854, %v2846
      %v3119 = vpack.c.b16 %v2855, %v2847
      %v3120 = vpack.c.b16 %v2856, %v2848
      %v3121 = vpack.c.b16 %v2857, %v2849
      %v3122 = vpack.c.b16 %v2858, %v2850
      %v3123 = vpack.c.b16 %v2859, %v2851
      %v3124 = vpack.c.b16 %v2860, %v2852
      %v3125 = vpack.c.b16 %v2861, %v2853
      %v3126 = vpack.c.b16 %v2870, %v2862
      %v3127 = vpack.c.b16 %v2871, %v2863
      %v3128 = vpack.c.b16 %v2872, %v2864
      %v3129 = vpack.c.b16 %v2873, %v2865
      %v3130 = vpack.c.b16 %v2874, %v2866
      %v3131 = vpack.c.b16 %v2875, %v2867
      %v3132 = vpack.c.b16 %v2876, %v2868
      %v3133 = vpack.c.b16 %v2877, %v2869
      %3390 = vmatprep.subr.bf16.mxu0 %v1357
      %3391 = vmatpush1.bf16.msra.mxu0 %v1356
      %3392 = vmatprep.subr.bf16.mxu0 %v1355
      %3393 = vmatpush1.bf16.msra.mxu0 %v1354
      %3394 = vmatprep.subr.bf16.mxu0 %v1353
      %3395 = vmatpush1.bf16.msra.mxu0 %v1352
      %3396 = vmatprep.subr.bf16.mxu0 %v1351
      %3397 = vmatpush1.bf16.msra.mxu0 %v1350
      %3398 = vmatprep.subr.bf16.mxu0 %v1349
      %3399 = vmatpush1.bf16.msra.mxu0 %v1348
      %3400 = vmatprep.subr.bf16.mxu0 %v1347
      %3401 = vmatpush1.bf16.msra.mxu0 %v1346
      %3402 = vmatprep.subr.bf16.mxu0 %v1345
      %3403 = vmatpush1.bf16.msra.mxu0 %v1344
      %3404 = vmatprep.subr.bf16.mxu0 %v1343
      %3405 = vmatpush1.bf16.msra.mxu0 %v1342
      %3406 = vmatprep.subr.bf16.mxu0 %v1373
      %3407 = vmatpush2.bf16.msra.mxu0 %v1372
      %3408 = vmatprep.subr.bf16.mxu0 %v1371
      %3409 = vmatpush2.bf16.msra.mxu0 %v1370
      %3410 = vmatprep.subr.bf16.mxu0 %v1369
      %3411 = vmatpush2.bf16.msra.mxu0 %v1368
      %3412 = vmatprep.subr.bf16.mxu0 %v1367
      %3413 = vmatpush2.bf16.msra.mxu0 %v1366
      %3414 = vmatprep.subr.bf16.mxu0 %v1365
      %3415 = vmatpush2.bf16.msra.mxu0 %v1364
      %3416 = vmatprep.subr.bf16.mxu0 %v1363
      %3417 = vmatpush2.bf16.msra.mxu0 %v1362
      %3418 = vmatprep.subr.bf16.mxu0 %v1361
      %3419 = vmatpush2.bf16.msra.mxu0 %v1360
      %3420 = vmatprep.subr.bf16.mxu0 %v1359
      %3421 = vmatpush2.bf16.msra.mxu0 %v1358
      %3422 = vmatprep.mubr.bf16.mxu0 %v2879
      %3423 = vmatmul.mubr.bf16.gmra.mxu0 %v2878
      %v3424 = vpop.f32.mrf.mxu0
      %v3425 = vadd.f32 %v1793, %v3424
      %v3426 = vpop.f32.mrf.mxu0
      %v3427 = vadd.f32 %v1793, %v3426
      %v3428 = vpop.f32.mrf.mxu0
      %v3429 = vadd.f32 %v1798, %v3428
      %v3430 = vpop.f32.mrf.mxu0
      %v3431 = vadd.f32 %v1798, %v3430
      %3432 = vmatprep.mubr.bf16.mxu0 %v2887
      %3433 = vmatmul.mubr.bf16.gmra.mxu0 %v2886
      %v3434 = vpop.f32.mrf.mxu0
      %v3435 = vadd.f32 %v1803, %v3434
      %v3436 = vpop.f32.mrf.mxu0
      %v3437 = vadd.f32 %v1803, %v3436
      %v3438 = vpop.f32.mrf.mxu0
      %v3439 = vadd.f32 %v1808, %v3438
      %v3440 = vpop.f32.mrf.mxu0
      %v3441 = vadd.f32 %v1808, %v3440
      %3442 = vmatprep.mubr.bf16.mxu0 %v2895
      %3443 = vmatmul.mubr.bf16.gmra.mxu0 %v2894
      %v3444 = vpop.f32.mrf.mxu0
      %v3445 = vadd.f32 %v1813, %v3444
      %v3446 = vpop.f32.mrf.mxu0
      %v3447 = vadd.f32 %v1813, %v3446
      %v3448 = vpop.f32.mrf.mxu0
      %v3449 = vadd.f32 %v1818, %v3448
      %v3450 = vpop.f32.mrf.mxu0
      %v3451 = vadd.f32 %v1818, %v3450
      %3452 = vmatprep.mubr.bf16.mxu0 %v2903
      %3453 = vmatmul.mubr.bf16.gmra.mxu0 %v2902
      %v3454 = vpop.f32.mrf.mxu0
      %v3455 = vadd.f32 %v1823, %v3454
      %v3456 = vpop.f32.mrf.mxu0
      %v3457 = vadd.f32 %v1823, %v3456
      %v3458 = vpop.f32.mrf.mxu0
      %v3459 = vadd.f32 %v1828, %v3458
      %v3460 = vpop.f32.mrf.mxu0
      %v3461 = vadd.f32 %v1828, %v3460
      %3462 = vmatprep.mubr.bf16.mxu0 %v2911
      %3463 = vmatmul.mubr.bf16.gmra.mxu0 %v2910
      %v3464 = vpop.f32.mrf.mxu0
      %v3465 = vadd.f32 %v1833, %v3464
      %v3466 = vpop.f32.mrf.mxu0
      %v3467 = vadd.f32 %v1833, %v3466
      %v3468 = vpop.f32.mrf.mxu0
      %v3469 = vadd.f32 %v1838, %v3468
      %v3470 = vpop.f32.mrf.mxu0
      %v3471 = vadd.f32 %v1838, %v3470
      %3472 = vmatprep.mubr.bf16.mxu0 %v2919
      %3473 = vmatmul.mubr.bf16.gmra.mxu0 %v2918
      %v3474 = vpop.f32.mrf.mxu0
      %v3475 = vadd.f32 %v1843, %v3474
      %v3476 = vpop.f32.mrf.mxu0
      %v3477 = vadd.f32 %v1843, %v3476
      %v3478 = vpop.f32.mrf.mxu0
      %v3479 = vadd.f32 %v1848, %v3478
      %v3480 = vpop.f32.mrf.mxu0
      %v3481 = vadd.f32 %v1848, %v3480
      %3482 = vmatprep.mubr.bf16.mxu0 %v2927
      %3483 = vmatmul.mubr.bf16.gmra.mxu0 %v2926
      %v3484 = vpop.f32.mrf.mxu0
      %v3485 = vadd.f32 %v1853, %v3484
      %v3486 = vpop.f32.mrf.mxu0
      %v3487 = vadd.f32 %v1853, %v3486
      %v3488 = vpop.f32.mrf.mxu0
      %v3489 = vadd.f32 %v1858, %v3488
      %v3490 = vpop.f32.mrf.mxu0
      %v3491 = vadd.f32 %v1858, %v3490
      %3492 = vmatprep.mubr.bf16.mxu0 %v2935
      %3493 = vmatmul.mubr.bf16.gmra.mxu0 %v2934
      %v3494 = vpop.f32.mrf.mxu0
      %v3495 = vadd.f32 %v1863, %v3494
      %v3496 = vpop.f32.mrf.mxu0
      %v3497 = vadd.f32 %v1863, %v3496
      %v3498 = vpop.f32.mrf.mxu0
      %v3499 = vadd.f32 %v1868, %v3498
      %v3500 = vpop.f32.mrf.mxu0
      %v3501 = vadd.f32 %v1868, %v3500
      %3502 = vmatprep.mubr.bf16.mxu0 %v2943
      %3503 = vmatmul.mubr.bf16.gmra.mxu0 %v2942
      %v3504 = vpop.f32.mrf.mxu0
      %v3505 = vadd.f32 %v1873, %v3504
      %v3506 = vpop.f32.mrf.mxu0
      %v3507 = vadd.f32 %v1873, %v3506
      %v3508 = vpop.f32.mrf.mxu0
      %v3509 = vadd.f32 %v1878, %v3508
      %v3510 = vpop.f32.mrf.mxu0
      %v3511 = vadd.f32 %v1878, %v3510
      %3512 = vmatprep.mubr.bf16.mxu0 %v2951
      %3513 = vmatmul.mubr.bf16.gmra.mxu0 %v2950
      %v3514 = vpop.f32.mrf.mxu0
      %v3515 = vadd.f32 %v1883, %v3514
      %v3516 = vpop.f32.mrf.mxu0
      %v3517 = vadd.f32 %v1883, %v3516
      %v3518 = vpop.f32.mrf.mxu0
      %v3519 = vadd.f32 %v1888, %v3518
      %v3520 = vpop.f32.mrf.mxu0
      %v3521 = vadd.f32 %v1888, %v3520
      %3522 = vmatprep.mubr.bf16.mxu0 %v2959
      %3523 = vmatmul.mubr.bf16.gmra.mxu0 %v2958
      %v3524 = vpop.f32.mrf.mxu0
      %v3525 = vadd.f32 %v1893, %v3524
      %v3526 = vpop.f32.mrf.mxu0
      %v3527 = vadd.f32 %v1893, %v3526
      %v3528 = vpop.f32.mrf.mxu0
      %v3529 = vadd.f32 %v1898, %v3528
      %v3530 = vpop.f32.mrf.mxu0
      %v3531 = vadd.f32 %v1898, %v3530
      %3532 = vmatprep.mubr.bf16.mxu0 %v2967
      %3533 = vmatmul.mubr.bf16.gmra.mxu0 %v2966
      %v3534 = vpop.f32.mrf.mxu0
      %v3535 = vadd.f32 %v1903, %v3534
      %v3536 = vpop.f32.mrf.mxu0
      %v3537 = vadd.f32 %v1903, %v3536
      %v3538 = vpop.f32.mrf.mxu0
      %v3539 = vadd.f32 %v1908, %v3538
      %v3540 = vpop.f32.mrf.mxu0
      %v3541 = vadd.f32 %v1908, %v3540
      %3542 = vmatprep.mubr.bf16.mxu0 %v2975
      %3543 = vmatmul.mubr.bf16.gmra.mxu0 %v2974
      %v3544 = vpop.f32.mrf.mxu0
      %v3545 = vadd.f32 %v1913, %v3544
      %v3546 = vpop.f32.mrf.mxu0
      %v3547 = vadd.f32 %v1913, %v3546
      %v3548 = vpop.f32.mrf.mxu0
      %v3549 = vadd.f32 %v1918, %v3548
      %v3550 = vpop.f32.mrf.mxu0
      %v3551 = vadd.f32 %v1918, %v3550
      %3552 = vmatprep.mubr.bf16.mxu0 %v2983
      %3553 = vmatmul.mubr.bf16.gmra.mxu0 %v2982
      %v3554 = vpop.f32.mrf.mxu0
      %v3555 = vadd.f32 %v1923, %v3554
      %v3556 = vpop.f32.mrf.mxu0
      %v3557 = vadd.f32 %v1923, %v3556
      %v3558 = vpop.f32.mrf.mxu0
      %v3559 = vadd.f32 %v1928, %v3558
      %v3560 = vpop.f32.mrf.mxu0
      %v3561 = vadd.f32 %v1928, %v3560
      %3562 = vmatprep.mubr.bf16.mxu0 %v2991
      %3563 = vmatmul.mubr.bf16.gmra.mxu0 %v2990
      %v3564 = vpop.f32.mrf.mxu0
      %v3565 = vadd.f32 %v1933, %v3564
      %v3566 = vpop.f32.mrf.mxu0
      %v3567 = vadd.f32 %v1933, %v3566
      %v3568 = vpop.f32.mrf.mxu0
      %v3569 = vadd.f32 %v1938, %v3568
      %v3570 = vpop.f32.mrf.mxu0
      %v3571 = vadd.f32 %v1938, %v3570
      %3572 = vmatprep.mubr.bf16.mxu0 %v2999
      %3573 = vmatmul.mubr.bf16.gmra.mxu0 %v2998
      %v3574 = vpop.f32.mrf.mxu0
      %v3575 = vadd.f32 %v1943, %v3574
      %v3576 = vpop.f32.mrf.mxu0
      %v3577 = vadd.f32 %v1943, %v3576
      %v3578 = vpop.f32.mrf.mxu0
      %v3579 = vadd.f32 %v1948, %v3578
      %v3580 = vpop.f32.mrf.mxu0
      %v3581 = vadd.f32 %v1948, %v3580
      %3582 = vmatprep.mubr.bf16.mxu0 %v3007
      %3583 = vmatmul.mubr.bf16.gmra.mxu0 %v3006
      %v3584 = vpop.f32.mrf.mxu0
      %v3585 = vadd.f32 %v1953, %v3584
      %v3586 = vpop.f32.mrf.mxu0
      %v3587 = vadd.f32 %v1953, %v3586
      %v3588 = vpop.f32.mrf.mxu0
      %v3589 = vadd.f32 %v1958, %v3588
      %v3590 = vpop.f32.mrf.mxu0
      %v3591 = vadd.f32 %v1958, %v3590
      %3592 = vmatprep.mubr.bf16.mxu0 %v3015
      %3593 = vmatmul.mubr.bf16.gmra.mxu0 %v3014
      %v3594 = vpop.f32.mrf.mxu0
      %v3595 = vadd.f32 %v1963, %v3594
      %v3596 = vpop.f32.mrf.mxu0
      %v3597 = vadd.f32 %v1963, %v3596
      %v3598 = vpop.f32.mrf.mxu0
      %v3599 = vadd.f32 %v1968, %v3598
      %v3600 = vpop.f32.mrf.mxu0
      %v3601 = vadd.f32 %v1968, %v3600
      %3602 = vmatprep.mubr.bf16.mxu0 %v3023
      %3603 = vmatmul.mubr.bf16.gmra.mxu0 %v3022
      %v3604 = vpop.f32.mrf.mxu0
      %v3605 = vadd.f32 %v1973, %v3604
      %v3606 = vpop.f32.mrf.mxu0
      %v3607 = vadd.f32 %v1973, %v3606
      %v3608 = vpop.f32.mrf.mxu0
      %v3609 = vadd.f32 %v1978, %v3608
      %v3610 = vpop.f32.mrf.mxu0
      %v3611 = vadd.f32 %v1978, %v3610
      %3612 = vmatprep.mubr.bf16.mxu0 %v3031
      %3613 = vmatmul.mubr.bf16.gmra.mxu0 %v3030
      %v3614 = vpop.f32.mrf.mxu0
      %v3615 = vadd.f32 %v1983, %v3614
      %v3616 = vpop.f32.mrf.mxu0
      %v3617 = vadd.f32 %v1983, %v3616
      %v3618 = vpop.f32.mrf.mxu0
      %v3619 = vadd.f32 %v1988, %v3618
      %v3620 = vpop.f32.mrf.mxu0
      %v3621 = vadd.f32 %v1988, %v3620
      %3622 = vmatprep.mubr.bf16.mxu0 %v3039
      %3623 = vmatmul.mubr.bf16.gmra.mxu0 %v3038
      %v3624 = vpop.f32.mrf.mxu0
      %v3625 = vadd.f32 %v1993, %v3624
      %v3626 = vpop.f32.mrf.mxu0
      %v3627 = vadd.f32 %v1993, %v3626
      %v3628 = vpop.f32.mrf.mxu0
      %v3629 = vadd.f32 %v1998, %v3628
      %v3630 = vpop.f32.mrf.mxu0
      %v3631 = vadd.f32 %v1998, %v3630
      %3632 = vmatprep.mubr.bf16.mxu0 %v3047
      %3633 = vmatmul.mubr.bf16.gmra.mxu0 %v3046
      %v3634 = vpop.f32.mrf.mxu0
      %v3635 = vadd.f32 %v2003, %v3634
      %v3636 = vpop.f32.mrf.mxu0
      %v3637 = vadd.f32 %v2003, %v3636
      %v3638 = vpop.f32.mrf.mxu0
      %v3639 = vadd.f32 %v2008, %v3638
      %v3640 = vpop.f32.mrf.mxu0
      %v3641 = vadd.f32 %v2008, %v3640
      %3642 = vmatprep.mubr.bf16.mxu0 %v3055
      %3643 = vmatmul.mubr.bf16.gmra.mxu0 %v3054
      %v3644 = vpop.f32.mrf.mxu0
      %v3645 = vadd.f32 %v2013, %v3644
      %v3646 = vpop.f32.mrf.mxu0
      %v3647 = vadd.f32 %v2013, %v3646
      %v3648 = vpop.f32.mrf.mxu0
      %v3649 = vadd.f32 %v2018, %v3648
      %v3650 = vpop.f32.mrf.mxu0
      %v3651 = vadd.f32 %v2018, %v3650
      %3652 = vmatprep.mubr.bf16.mxu0 %v3063
      %3653 = vmatmul.mubr.bf16.gmra.mxu0 %v3062
      %v3654 = vpop.f32.mrf.mxu0
      %v3655 = vadd.f32 %v2023, %v3654
      %v3656 = vpop.f32.mrf.mxu0
      %v3657 = vadd.f32 %v2023, %v3656
      %v3658 = vpop.f32.mrf.mxu0
      %v3659 = vadd.f32 %v2028, %v3658
      %v3660 = vpop.f32.mrf.mxu0
      %v3661 = vadd.f32 %v2028, %v3660
      %3662 = vmatprep.mubr.bf16.mxu0 %v3071
      %3663 = vmatmul.mubr.bf16.gmra.mxu0 %v3070
      %v3664 = vpop.f32.mrf.mxu0
      %v3665 = vadd.f32 %v2033, %v3664
      %v3666 = vpop.f32.mrf.mxu0
      %v3667 = vadd.f32 %v2033, %v3666
      %v3668 = vpop.f32.mrf.mxu0
      %v3669 = vadd.f32 %v2038, %v3668
      %v3670 = vpop.f32.mrf.mxu0
      %v3671 = vadd.f32 %v2038, %v3670
      %3672 = vmatprep.mubr.bf16.mxu0 %v3079
      %3673 = vmatmul.mubr.bf16.gmra.mxu0 %v3078
      %v3674 = vpop.f32.mrf.mxu0
      %v3675 = vadd.f32 %v2043, %v3674
      %v3676 = vpop.f32.mrf.mxu0
      %v3677 = vadd.f32 %v2043, %v3676
      %v3678 = vpop.f32.mrf.mxu0
      %v3679 = vadd.f32 %v2048, %v3678
      %v3680 = vpop.f32.mrf.mxu0
      %v3681 = vadd.f32 %v2048, %v3680
      %3682 = vmatprep.mubr.bf16.mxu0 %v3087
      %3683 = vmatmul.mubr.bf16.gmra.mxu0 %v3086
      %v3684 = vpop.f32.mrf.mxu0
      %v3685 = vadd.f32 %v2053, %v3684
      %v3686 = vpop.f32.mrf.mxu0
      %v3687 = vadd.f32 %v2053, %v3686
      %v3688 = vpop.f32.mrf.mxu0
      %v3689 = vadd.f32 %v2058, %v3688
      %v3690 = vpop.f32.mrf.mxu0
      %v3691 = vadd.f32 %v2058, %v3690
      %3692 = vmatprep.mubr.bf16.mxu0 %v3095
      %3693 = vmatmul.mubr.bf16.gmra.mxu0 %v3094
      %v3694 = vpop.f32.mrf.mxu0
      %v3695 = vadd.f32 %v2063, %v3694
      %v3696 = vpop.f32.mrf.mxu0
      %v3697 = vadd.f32 %v2063, %v3696
      %v3698 = vpop.f32.mrf.mxu0
      %v3699 = vadd.f32 %v2068, %v3698
      %v3700 = vpop.f32.mrf.mxu0
      %v3701 = vadd.f32 %v2068, %v3700
      %3702 = vmatprep.mubr.bf16.mxu0 %v3103
      %3703 = vmatmul.mubr.bf16.gmra.mxu0 %v3102
      %v3704 = vpop.f32.mrf.mxu0
      %v3705 = vadd.f32 %v2073, %v3704
      %v3706 = vpop.f32.mrf.mxu0
      %v3707 = vadd.f32 %v2073, %v3706
      %v3708 = vpop.f32.mrf.mxu0
      %v3709 = vadd.f32 %v2078, %v3708
      %v3710 = vpop.f32.mrf.mxu0
      %v3711 = vadd.f32 %v2078, %v3710
      %3712 = vmatprep.mubr.bf16.mxu0 %v3111
      %3713 = vmatmul.mubr.bf16.gmra.mxu0 %v3110
      %v3714 = vpop.f32.mrf.mxu0
      %v3715 = vadd.f32 %v2083, %v3714
      %v3716 = vpop.f32.mrf.mxu0
      %v3717 = vadd.f32 %v2083, %v3716
      %v3718 = vpop.f32.mrf.mxu0
      %v3719 = vadd.f32 %v2088, %v3718
      %v3720 = vpop.f32.mrf.mxu0
      %v3721 = vadd.f32 %v2088, %v3720
      %3722 = vmatprep.mubr.bf16.mxu0 %v3119
      %3723 = vmatmul.mubr.bf16.gmra.mxu0 %v3118
      %v3724 = vpop.f32.mrf.mxu0
      %v3725 = vadd.f32 %v2093, %v3724
      %v3726 = vpop.f32.mrf.mxu0
      %v3727 = vadd.f32 %v2093, %v3726
      %v3728 = vpop.f32.mrf.mxu0
      %v3729 = vadd.f32 %v2098, %v3728
      %v3730 = vpop.f32.mrf.mxu0
      %v3731 = vadd.f32 %v2098, %v3730
      %3732 = vmatprep.mubr.bf16.mxu0 %v3127
      %3733 = vmatmul.mubr.bf16.gmra.mxu0 %v3126
      %v3734 = vpop.f32.mrf.mxu0
      %v3735 = vadd.f32 %v2103, %v3734
      %v3736 = vpop.f32.mrf.mxu0
      %v3737 = vadd.f32 %v2103, %v3736
      %v3738 = vpop.f32.mrf.mxu0
      %v3739 = vadd.f32 %v2108, %v3738
      %v3740 = vpop.f32.mrf.mxu0
      %v3741 = vadd.f32 %v2108, %v3740
      %3742 = vdwg.mxu0
      %3743 = vmatprep.subr.bf16.mxu0 %v1389
      %3744 = vmatpush1.bf16.msra.mxu0 %v1388
      %3745 = vmatprep.subr.bf16.mxu0 %v1387
      %3746 = vmatpush1.bf16.msra.mxu0 %v1386
      %3747 = vmatprep.subr.bf16.mxu0 %v1385
      %3748 = vmatpush1.bf16.msra.mxu0 %v1384
      %3749 = vmatprep.subr.bf16.mxu0 %v1383
      %3750 = vmatpush1.bf16.msra.mxu0 %v1382
      %3751 = vmatprep.subr.bf16.mxu0 %v1381
      %3752 = vmatpush1.bf16.msra.mxu0 %v1380
      %3753 = vmatprep.subr.bf16.mxu0 %v1379
      %3754 = vmatpush1.bf16.msra.mxu0 %v1378
      %3755 = vmatprep.subr.bf16.mxu0 %v1377
      %3756 = vmatpush1.bf16.msra.mxu0 %v1376
      %3757 = vmatprep.subr.bf16.mxu0 %v1375
      %3758 = vmatpush1.bf16.msra.mxu0 %v1374
      %3759 = vmatprep.subr.bf16.mxu0 %v1405
      %3760 = vmatpush2.bf16.msra.mxu0 %v1404
      %3761 = vmatprep.subr.bf16.mxu0 %v1403
      %3762 = vmatpush2.bf16.msra.mxu0 %v1402
      %3763 = vmatprep.subr.bf16.mxu0 %v1401
      %3764 = vmatpush2.bf16.msra.mxu0 %v1400
      %3765 = vmatprep.subr.bf16.mxu0 %v1399
      %3766 = vmatpush2.bf16.msra.mxu0 %v1398
      %3767 = vmatprep.subr.bf16.mxu0 %v1397
      %3768 = vmatpush2.bf16.msra.mxu0 %v1396
      %3769 = vmatprep.subr.bf16.mxu0 %v1395
      %3770 = vmatpush2.bf16.msra.mxu0 %v1394
      %3771 = vmatprep.subr.bf16.mxu0 %v1393
      %3772 = vmatpush2.bf16.msra.mxu0 %v1392
      %3773 = vmatprep.subr.bf16.mxu0 %v1391
      %3774 = vmatpush2.bf16.msra.mxu0 %v1390
      %3775 = vmatprep.mubr.bf16.mxu0 %v2881
      %3776 = vmatmul.mubr.bf16.gmra.mxu0 %v2880
      %v3777 = vpop.f32.mrf.mxu0
      %v3778 = vadd.f32 %v3425, %v3777
      %v3779 = vpop.f32.mrf.mxu0
      %v3780 = vadd.f32 %v3427, %v3779
      %v3781 = vpop.f32.mrf.mxu0
      %v3782 = vadd.f32 %v3429, %v3781
      %v3783 = vpop.f32.mrf.mxu0
      %v3784 = vadd.f32 %v3431, %v3783
      %3785 = vmatprep.mubr.bf16.mxu0 %v2889
      %3786 = vmatmul.mubr.bf16.gmra.mxu0 %v2888
      %v3787 = vpop.f32.mrf.mxu0
      %v3788 = vadd.f32 %v3435, %v3787
      %v3789 = vpop.f32.mrf.mxu0
      %v3790 = vadd.f32 %v3437, %v3789
      %v3791 = vpop.f32.mrf.mxu0
      %v3792 = vadd.f32 %v3439, %v3791
      %v3793 = vpop.f32.mrf.mxu0
      %v3794 = vadd.f32 %v3441, %v3793
      %3795 = vmatprep.mubr.bf16.mxu0 %v2897
      %3796 = vmatmul.mubr.bf16.gmra.mxu0 %v2896
      %v3797 = vpop.f32.mrf.mxu0
      %v3798 = vadd.f32 %v3445, %v3797
      %v3799 = vpop.f32.mrf.mxu0
      %v3800 = vadd.f32 %v3447, %v3799
      %v3801 = vpop.f32.mrf.mxu0
      %v3802 = vadd.f32 %v3449, %v3801
      %v3803 = vpop.f32.mrf.mxu0
      %v3804 = vadd.f32 %v3451, %v3803
      %3805 = vmatprep.mubr.bf16.mxu0 %v2905
      %3806 = vmatmul.mubr.bf16.gmra.mxu0 %v2904
      %v3807 = vpop.f32.mrf.mxu0
      %v3808 = vadd.f32 %v3455, %v3807
      %v3809 = vpop.f32.mrf.mxu0
      %v3810 = vadd.f32 %v3457, %v3809
      %v3811 = vpop.f32.mrf.mxu0
      %v3812 = vadd.f32 %v3459, %v3811
      %v3813 = vpop.f32.mrf.mxu0
      %v3814 = vadd.f32 %v3461, %v3813
      %3815 = vmatprep.mubr.bf16.mxu0 %v2913
      %3816 = vmatmul.mubr.bf16.gmra.mxu0 %v2912
      %v3817 = vpop.f32.mrf.mxu0
      %v3818 = vadd.f32 %v3465, %v3817
      %v3819 = vpop.f32.mrf.mxu0
      %v3820 = vadd.f32 %v3467, %v3819
      %v3821 = vpop.f32.mrf.mxu0
      %v3822 = vadd.f32 %v3469, %v3821
      %v3823 = vpop.f32.mrf.mxu0
      %v3824 = vadd.f32 %v3471, %v3823
      %3825 = vmatprep.mubr.bf16.mxu0 %v2921
      %3826 = vmatmul.mubr.bf16.gmra.mxu0 %v2920
      %v3827 = vpop.f32.mrf.mxu0
      %v3828 = vadd.f32 %v3475, %v3827
      %v3829 = vpop.f32.mrf.mxu0
      %v3830 = vadd.f32 %v3477, %v3829
      %v3831 = vpop.f32.mrf.mxu0
      %v3832 = vadd.f32 %v3479, %v3831
      %v3833 = vpop.f32.mrf.mxu0
      %v3834 = vadd.f32 %v3481, %v3833
      %3835 = vmatprep.mubr.bf16.mxu0 %v2929
      %3836 = vmatmul.mubr.bf16.gmra.mxu0 %v2928
      %v3837 = vpop.f32.mrf.mxu0
      %v3838 = vadd.f32 %v3485, %v3837
      %v3839 = vpop.f32.mrf.mxu0
      %v3840 = vadd.f32 %v3487, %v3839
      %v3841 = vpop.f32.mrf.mxu0
      %v3842 = vadd.f32 %v3489, %v3841
      %v3843 = vpop.f32.mrf.mxu0
      %v3844 = vadd.f32 %v3491, %v3843
      %3845 = vmatprep.mubr.bf16.mxu0 %v2937
      %3846 = vmatmul.mubr.bf16.gmra.mxu0 %v2936
      %v3847 = vpop.f32.mrf.mxu0
      %v3848 = vadd.f32 %v3495, %v3847
      %v3849 = vpop.f32.mrf.mxu0
      %v3850 = vadd.f32 %v3497, %v3849
      %v3851 = vpop.f32.mrf.mxu0
      %v3852 = vadd.f32 %v3499, %v3851
      %v3853 = vpop.f32.mrf.mxu0
      %v3854 = vadd.f32 %v3501, %v3853
      %3855 = vmatprep.mubr.bf16.mxu0 %v2945
      %3856 = vmatmul.mubr.bf16.gmra.mxu0 %v2944
      %v3857 = vpop.f32.mrf.mxu0
      %v3858 = vadd.f32 %v3505, %v3857
      %v3859 = vpop.f32.mrf.mxu0
      %v3860 = vadd.f32 %v3507, %v3859
      %v3861 = vpop.f32.mrf.mxu0
      %v3862 = vadd.f32 %v3509, %v3861
      %v3863 = vpop.f32.mrf.mxu0
      %v3864 = vadd.f32 %v3511, %v3863
      %3865 = vmatprep.mubr.bf16.mxu0 %v2953
      %3866 = vmatmul.mubr.bf16.gmra.mxu0 %v2952
      %v3867 = vpop.f32.mrf.mxu0
      %v3868 = vadd.f32 %v3515, %v3867
      %v3869 = vpop.f32.mrf.mxu0
      %v3870 = vadd.f32 %v3517, %v3869
      %v3871 = vpop.f32.mrf.mxu0
      %v3872 = vadd.f32 %v3519, %v3871
      %v3873 = vpop.f32.mrf.mxu0
      %v3874 = vadd.f32 %v3521, %v3873
      %3875 = vmatprep.mubr.bf16.mxu0 %v2961
      %3876 = vmatmul.mubr.bf16.gmra.mxu0 %v2960
      %v3877 = vpop.f32.mrf.mxu0
      %v3878 = vadd.f32 %v3525, %v3877
      %v3879 = vpop.f32.mrf.mxu0
      %v3880 = vadd.f32 %v3527, %v3879
      %v3881 = vpop.f32.mrf.mxu0
      %v3882 = vadd.f32 %v3529, %v3881
      %v3883 = vpop.f32.mrf.mxu0
      %v3884 = vadd.f32 %v3531, %v3883
      %3885 = vmatprep.mubr.bf16.mxu0 %v2969
      %3886 = vmatmul.mubr.bf16.gmra.mxu0 %v2968
      %v3887 = vpop.f32.mrf.mxu0
      %v3888 = vadd.f32 %v3535, %v3887
      %v3889 = vpop.f32.mrf.mxu0
      %v3890 = vadd.f32 %v3537, %v3889
      %v3891 = vpop.f32.mrf.mxu0
      %v3892 = vadd.f32 %v3539, %v3891
      %v3893 = vpop.f32.mrf.mxu0
      %v3894 = vadd.f32 %v3541, %v3893
      %3895 = vmatprep.mubr.bf16.mxu0 %v2977
      %3896 = vmatmul.mubr.bf16.gmra.mxu0 %v2976
      %v3897 = vpop.f32.mrf.mxu0
      %v3898 = vadd.f32 %v3545, %v3897
      %v3899 = vpop.f32.mrf.mxu0
      %v3900 = vadd.f32 %v3547, %v3899
      %v3901 = vpop.f32.mrf.mxu0
      %v3902 = vadd.f32 %v3549, %v3901
      %v3903 = vpop.f32.mrf.mxu0
      %v3904 = vadd.f32 %v3551, %v3903
      %3905 = vmatprep.mubr.bf16.mxu0 %v2985
      %3906 = vmatmul.mubr.bf16.gmra.mxu0 %v2984
      %v3907 = vpop.f32.mrf.mxu0
      %v3908 = vadd.f32 %v3555, %v3907
      %v3909 = vpop.f32.mrf.mxu0
      %v3910 = vadd.f32 %v3557, %v3909
      %v3911 = vpop.f32.mrf.mxu0
      %v3912 = vadd.f32 %v3559, %v3911
      %v3913 = vpop.f32.mrf.mxu0
      %v3914 = vadd.f32 %v3561, %v3913
      %3915 = vmatprep.mubr.bf16.mxu0 %v2993
      %3916 = vmatmul.mubr.bf16.gmra.mxu0 %v2992
      %v3917 = vpop.f32.mrf.mxu0
      %v3918 = vadd.f32 %v3565, %v3917
      %v3919 = vpop.f32.mrf.mxu0
      %v3920 = vadd.f32 %v3567, %v3919
      %v3921 = vpop.f32.mrf.mxu0
      %v3922 = vadd.f32 %v3569, %v3921
      %v3923 = vpop.f32.mrf.mxu0
      %v3924 = vadd.f32 %v3571, %v3923
      %3925 = vmatprep.mubr.bf16.mxu0 %v3001
      %3926 = vmatmul.mubr.bf16.gmra.mxu0 %v3000
      %v3927 = vpop.f32.mrf.mxu0
      %v3928 = vadd.f32 %v3575, %v3927
      %v3929 = vpop.f32.mrf.mxu0
      %v3930 = vadd.f32 %v3577, %v3929
      %v3931 = vpop.f32.mrf.mxu0
      %v3932 = vadd.f32 %v3579, %v3931
      %v3933 = vpop.f32.mrf.mxu0
      %v3934 = vadd.f32 %v3581, %v3933
      %3935 = vmatprep.mubr.bf16.mxu0 %v3009
      %3936 = vmatmul.mubr.bf16.gmra.mxu0 %v3008
      %v3937 = vpop.f32.mrf.mxu0
      %v3938 = vadd.f32 %v3585, %v3937
      %v3939 = vpop.f32.mrf.mxu0
      %v3940 = vadd.f32 %v3587, %v3939
      %v3941 = vpop.f32.mrf.mxu0
      %v3942 = vadd.f32 %v3589, %v3941
      %v3943 = vpop.f32.mrf.mxu0
      %v3944 = vadd.f32 %v3591, %v3943
      %3945 = vmatprep.mubr.bf16.mxu0 %v3017
      %3946 = vmatmul.mubr.bf16.gmra.mxu0 %v3016
      %v3947 = vpop.f32.mrf.mxu0
      %v3948 = vadd.f32 %v3595, %v3947
      %v3949 = vpop.f32.mrf.mxu0
      %v3950 = vadd.f32 %v3597, %v3949
      %v3951 = vpop.f32.mrf.mxu0
      %v3952 = vadd.f32 %v3599, %v3951
      %v3953 = vpop.f32.mrf.mxu0
      %v3954 = vadd.f32 %v3601, %v3953
      %3955 = vmatprep.mubr.bf16.mxu0 %v3025
      %3956 = vmatmul.mubr.bf16.gmra.mxu0 %v3024
      %v3957 = vpop.f32.mrf.mxu0
      %v3958 = vadd.f32 %v3605, %v3957
      %v3959 = vpop.f32.mrf.mxu0
      %v3960 = vadd.f32 %v3607, %v3959
      %v3961 = vpop.f32.mrf.mxu0
      %v3962 = vadd.f32 %v3609, %v3961
      %v3963 = vpop.f32.mrf.mxu0
      %v3964 = vadd.f32 %v3611, %v3963
      %3965 = vmatprep.mubr.bf16.mxu0 %v3033
      %3966 = vmatmul.mubr.bf16.gmra.mxu0 %v3032
      %v3967 = vpop.f32.mrf.mxu0
      %v3968 = vadd.f32 %v3615, %v3967
      %v3969 = vpop.f32.mrf.mxu0
      %v3970 = vadd.f32 %v3617, %v3969
      %v3971 = vpop.f32.mrf.mxu0
      %v3972 = vadd.f32 %v3619, %v3971
      %v3973 = vpop.f32.mrf.mxu0
      %v3974 = vadd.f32 %v3621, %v3973
      %3975 = vmatprep.mubr.bf16.mxu0 %v3041
      %3976 = vmatmul.mubr.bf16.gmra.mxu0 %v3040
      %v3977 = vpop.f32.mrf.mxu0
      %v3978 = vadd.f32 %v3625, %v3977
      %v3979 = vpop.f32.mrf.mxu0
      %v3980 = vadd.f32 %v3627, %v3979
      %v3981 = vpop.f32.mrf.mxu0
      %v3982 = vadd.f32 %v3629, %v3981
      %v3983 = vpop.f32.mrf.mxu0
      %v3984 = vadd.f32 %v3631, %v3983
      %3985 = vmatprep.mubr.bf16.mxu0 %v3049
      %3986 = vmatmul.mubr.bf16.gmra.mxu0 %v3048
      %v3987 = vpop.f32.mrf.mxu0
      %v3988 = vadd.f32 %v3635, %v3987
      %v3989 = vpop.f32.mrf.mxu0
      %v3990 = vadd.f32 %v3637, %v3989
      %v3991 = vpop.f32.mrf.mxu0
      %v3992 = vadd.f32 %v3639, %v3991
      %v3993 = vpop.f32.mrf.mxu0
      %v3994 = vadd.f32 %v3641, %v3993
      %3995 = vmatprep.mubr.bf16.mxu0 %v3057
      %3996 = vmatmul.mubr.bf16.gmra.mxu0 %v3056
      %v3997 = vpop.f32.mrf.mxu0
      %v3998 = vadd.f32 %v3645, %v3997
      %v3999 = vpop.f32.mrf.mxu0
      %v4000 = vadd.f32 %v3647, %v3999
      %v4001 = vpop.f32.mrf.mxu0
      %v4002 = vadd.f32 %v3649, %v4001
      %v4003 = vpop.f32.mrf.mxu0
      %v4004 = vadd.f32 %v3651, %v4003
      %4005 = vmatprep.mubr.bf16.mxu0 %v3065
      %4006 = vmatmul.mubr.bf16.gmra.mxu0 %v3064
      %v4007 = vpop.f32.mrf.mxu0
      %v4008 = vadd.f32 %v3655, %v4007
      %v4009 = vpop.f32.mrf.mxu0
      %v4010 = vadd.f32 %v3657, %v4009
      %v4011 = vpop.f32.mrf.mxu0
      %v4012 = vadd.f32 %v3659, %v4011
      %v4013 = vpop.f32.mrf.mxu0
      %v4014 = vadd.f32 %v3661, %v4013
      %4015 = vmatprep.mubr.bf16.mxu0 %v3073
      %4016 = vmatmul.mubr.bf16.gmra.mxu0 %v3072
      %v4017 = vpop.f32.mrf.mxu0
      %v4018 = vadd.f32 %v3665, %v4017
      %v4019 = vpop.f32.mrf.mxu0
      %v4020 = vadd.f32 %v3667, %v4019
      %v4021 = vpop.f32.mrf.mxu0
      %v4022 = vadd.f32 %v3669, %v4021
      %v4023 = vpop.f32.mrf.mxu0
      %v4024 = vadd.f32 %v3671, %v4023
      %4025 = vmatprep.mubr.bf16.mxu0 %v3081
      %4026 = vmatmul.mubr.bf16.gmra.mxu0 %v3080
      %v4027 = vpop.f32.mrf.mxu0
      %v4028 = vadd.f32 %v3675, %v4027
      %v4029 = vpop.f32.mrf.mxu0
      %v4030 = vadd.f32 %v3677, %v4029
      %v4031 = vpop.f32.mrf.mxu0
      %v4032 = vadd.f32 %v3679, %v4031
      %v4033 = vpop.f32.mrf.mxu0
      %v4034 = vadd.f32 %v3681, %v4033
      %4035 = vmatprep.mubr.bf16.mxu0 %v3089
      %4036 = vmatmul.mubr.bf16.gmra.mxu0 %v3088
      %v4037 = vpop.f32.mrf.mxu0
      %v4038 = vadd.f32 %v3685, %v4037
      %v4039 = vpop.f32.mrf.mxu0
      %v4040 = vadd.f32 %v3687, %v4039
      %v4041 = vpop.f32.mrf.mxu0
      %v4042 = vadd.f32 %v3689, %v4041
      %v4043 = vpop.f32.mrf.mxu0
      %v4044 = vadd.f32 %v3691, %v4043
      %4045 = vmatprep.mubr.bf16.mxu0 %v3097
      %4046 = vmatmul.mubr.bf16.gmra.mxu0 %v3096
      %v4047 = vpop.f32.mrf.mxu0
      %v4048 = vadd.f32 %v3695, %v4047
      %v4049 = vpop.f32.mrf.mxu0
      %v4050 = vadd.f32 %v3697, %v4049
      %v4051 = vpop.f32.mrf.mxu0
      %v4052 = vadd.f32 %v3699, %v4051
      %v4053 = vpop.f32.mrf.mxu0
      %v4054 = vadd.f32 %v3701, %v4053
      %4055 = vmatprep.mubr.bf16.mxu0 %v3105
      %4056 = vmatmul.mubr.bf16.gmra.mxu0 %v3104
      %v4057 = vpop.f32.mrf.mxu0
      %v4058 = vadd.f32 %v3705, %v4057
      %v4059 = vpop.f32.mrf.mxu0
      %v4060 = vadd.f32 %v3707, %v4059
      %v4061 = vpop.f32.mrf.mxu0
      %v4062 = vadd.f32 %v3709, %v4061
      %v4063 = vpop.f32.mrf.mxu0
      %v4064 = vadd.f32 %v3711, %v4063
      %4065 = vmatprep.mubr.bf16.mxu0 %v3113
      %4066 = vmatmul.mubr.bf16.gmra.mxu0 %v3112
      %v4067 = vpop.f32.mrf.mxu0
      %v4068 = vadd.f32 %v3715, %v4067
      %v4069 = vpop.f32.mrf.mxu0
      %v4070 = vadd.f32 %v3717, %v4069
      %v4071 = vpop.f32.mrf.mxu0
      %v4072 = vadd.f32 %v3719, %v4071
      %v4073 = vpop.f32.mrf.mxu0
      %v4074 = vadd.f32 %v3721, %v4073
      %4075 = vmatprep.mubr.bf16.mxu0 %v3121
      %4076 = vmatmul.mubr.bf16.gmra.mxu0 %v3120
      %v4077 = vpop.f32.mrf.mxu0
      %v4078 = vadd.f32 %v3725, %v4077
      %v4079 = vpop.f32.mrf.mxu0
      %v4080 = vadd.f32 %v3727, %v4079
      %v4081 = vpop.f32.mrf.mxu0
      %v4082 = vadd.f32 %v3729, %v4081
      %v4083 = vpop.f32.mrf.mxu0
      %v4084 = vadd.f32 %v3731, %v4083
      %4085 = vmatprep.mubr.bf16.mxu0 %v3129
      %4086 = vmatmul.mubr.bf16.gmra.mxu0 %v3128
      %v4087 = vpop.f32.mrf.mxu0
      %v4088 = vadd.f32 %v3735, %v4087
      %v4089 = vpop.f32.mrf.mxu0
      %v4090 = vadd.f32 %v3737, %v4089
      %v4091 = vpop.f32.mrf.mxu0
      %v4092 = vadd.f32 %v3739, %v4091
      %v4093 = vpop.f32.mrf.mxu0
      %v4094 = vadd.f32 %v3741, %v4093
      %4095 = vdwg.mxu0
      %4096 = vmatprep.subr.bf16.mxu0 %v1421
      %4097 = vmatpush1.bf16.msra.mxu0 %v1420
      %4098 = vmatprep.subr.bf16.mxu0 %v1419
      %4099 = vmatpush1.bf16.msra.mxu0 %v1418
      %4100 = vmatprep.subr.bf16.mxu0 %v1417
      %4101 = vmatpush1.bf16.msra.mxu0 %v1416
      %4102 = vmatprep.subr.bf16.mxu0 %v1415
      %4103 = vmatpush1.bf16.msra.mxu0 %v1414
      %4104 = vmatprep.subr.bf16.mxu0 %v1413
      %4105 = vmatpush1.bf16.msra.mxu0 %v1412
      %4106 = vmatprep.subr.bf16.mxu0 %v1411
      %4107 = vmatpush1.bf16.msra.mxu0 %v1410
      %4108 = vmatprep.subr.bf16.mxu0 %v1409
      %4109 = vmatpush1.bf16.msra.mxu0 %v1408
      %4110 = vmatprep.subr.bf16.mxu0 %v1407
      %4111 = vmatpush1.bf16.msra.mxu0 %v1406
      %4112 = vmatprep.subr.bf16.mxu0 %v1437
      %4113 = vmatpush2.bf16.msra.mxu0 %v1436
      %4114 = vmatprep.subr.bf16.mxu0 %v1435
      %4115 = vmatpush2.bf16.msra.mxu0 %v1434
      %4116 = vmatprep.subr.bf16.mxu0 %v1433
      %4117 = vmatpush2.bf16.msra.mxu0 %v1432
      %4118 = vmatprep.subr.bf16.mxu0 %v1431
      %4119 = vmatpush2.bf16.msra.mxu0 %v1430
      %4120 = vmatprep.subr.bf16.mxu0 %v1429
      %4121 = vmatpush2.bf16.msra.mxu0 %v1428
      %4122 = vmatprep.subr.bf16.mxu0 %v1427
      %4123 = vmatpush2.bf16.msra.mxu0 %v1426
      %4124 = vmatprep.subr.bf16.mxu0 %v1425
      %4125 = vmatpush2.bf16.msra.mxu0 %v1424
      %4126 = vmatprep.subr.bf16.mxu0 %v1423
      %4127 = vmatpush2.bf16.msra.mxu0 %v1422
      %4128 = vmatprep.mubr.bf16.mxu0 %v2883
      %4129 = vmatmul.mubr.bf16.gmra.mxu0 %v2882
      %v4130 = vpop.f32.mrf.mxu0
      %v4131 = vadd.f32 %v3778, %v4130
      %v4132 = vpop.f32.mrf.mxu0
      %v4133 = vadd.f32 %v3780, %v4132
      %v4134 = vpop.f32.mrf.mxu0
      %v4135 = vadd.f32 %v3782, %v4134
      %v4136 = vpop.f32.mrf.mxu0
      %v4137 = vadd.f32 %v3784, %v4136
      %4138 = vmatprep.mubr.bf16.mxu0 %v2891
      %4139 = vmatmul.mubr.bf16.gmra.mxu0 %v2890
      %v4140 = vpop.f32.mrf.mxu0
      %v4141 = vadd.f32 %v3788, %v4140
      %v4142 = vpop.f32.mrf.mxu0
      %v4143 = vadd.f32 %v3790, %v4142
      %v4144 = vpop.f32.mrf.mxu0
      %v4145 = vadd.f32 %v3792, %v4144
      %v4146 = vpop.f32.mrf.mxu0
      %v4147 = vadd.f32 %v3794, %v4146
      %4148 = vmatprep.mubr.bf16.mxu0 %v2899
      %4149 = vmatmul.mubr.bf16.gmra.mxu0 %v2898
      %v4150 = vpop.f32.mrf.mxu0
      %v4151 = vadd.f32 %v3798, %v4150
      %v4152 = vpop.f32.mrf.mxu0
      %v4153 = vadd.f32 %v3800, %v4152
      %v4154 = vpop.f32.mrf.mxu0
      %v4155 = vadd.f32 %v3802, %v4154
      %v4156 = vpop.f32.mrf.mxu0
      %v4157 = vadd.f32 %v3804, %v4156
      %4158 = vmatprep.mubr.bf16.mxu0 %v2907
      %4159 = vmatmul.mubr.bf16.gmra.mxu0 %v2906
      %v4160 = vpop.f32.mrf.mxu0
      %v4161 = vadd.f32 %v3808, %v4160
      %v4162 = vpop.f32.mrf.mxu0
      %v4163 = vadd.f32 %v3810, %v4162
      %v4164 = vpop.f32.mrf.mxu0
      %v4165 = vadd.f32 %v3812, %v4164
      %v4166 = vpop.f32.mrf.mxu0
      %v4167 = vadd.f32 %v3814, %v4166
      %4168 = vmatprep.mubr.bf16.mxu0 %v2915
      %4169 = vmatmul.mubr.bf16.gmra.mxu0 %v2914
      %v4170 = vpop.f32.mrf.mxu0
      %v4171 = vadd.f32 %v3818, %v4170
      %v4172 = vpop.f32.mrf.mxu0
      %v4173 = vadd.f32 %v3820, %v4172
      %v4174 = vpop.f32.mrf.mxu0
      %v4175 = vadd.f32 %v3822, %v4174
      %v4176 = vpop.f32.mrf.mxu0
      %v4177 = vadd.f32 %v3824, %v4176
      %4178 = vmatprep.mubr.bf16.mxu0 %v2923
      %4179 = vmatmul.mubr.bf16.gmra.mxu0 %v2922
      %v4180 = vpop.f32.mrf.mxu0
      %v4181 = vadd.f32 %v3828, %v4180
      %v4182 = vpop.f32.mrf.mxu0
      %v4183 = vadd.f32 %v3830, %v4182
      %v4184 = vpop.f32.mrf.mxu0
      %v4185 = vadd.f32 %v3832, %v4184
      %v4186 = vpop.f32.mrf.mxu0
      %v4187 = vadd.f32 %v3834, %v4186
      %4188 = vmatprep.mubr.bf16.mxu0 %v2931
      %4189 = vmatmul.mubr.bf16.gmra.mxu0 %v2930
      %v4190 = vpop.f32.mrf.mxu0
      %v4191 = vadd.f32 %v3838, %v4190
      %v4192 = vpop.f32.mrf.mxu0
      %v4193 = vadd.f32 %v3840, %v4192
      %v4194 = vpop.f32.mrf.mxu0
      %v4195 = vadd.f32 %v3842, %v4194
      %v4196 = vpop.f32.mrf.mxu0
      %v4197 = vadd.f32 %v3844, %v4196
      %4198 = vmatprep.mubr.bf16.mxu0 %v2939
      %4199 = vmatmul.mubr.bf16.gmra.mxu0 %v2938
      %v4200 = vpop.f32.mrf.mxu0
      %v4201 = vadd.f32 %v3848, %v4200
      %v4202 = vpop.f32.mrf.mxu0
      %v4203 = vadd.f32 %v3850, %v4202
      %v4204 = vpop.f32.mrf.mxu0
      %v4205 = vadd.f32 %v3852, %v4204
      %v4206 = vpop.f32.mrf.mxu0
      %v4207 = vadd.f32 %v3854, %v4206
      %4208 = vmatprep.mubr.bf16.mxu0 %v2947
      %4209 = vmatmul.mubr.bf16.gmra.mxu0 %v2946
      %v4210 = vpop.f32.mrf.mxu0
      %v4211 = vadd.f32 %v3858, %v4210
      %v4212 = vpop.f32.mrf.mxu0
      %v4213 = vadd.f32 %v3860, %v4212
      %v4214 = vpop.f32.mrf.mxu0
      %v4215 = vadd.f32 %v3862, %v4214
      %v4216 = vpop.f32.mrf.mxu0
      %v4217 = vadd.f32 %v3864, %v4216
      %4218 = vmatprep.mubr.bf16.mxu0 %v2955
      %4219 = vmatmul.mubr.bf16.gmra.mxu0 %v2954
      %v4220 = vpop.f32.mrf.mxu0
      %v4221 = vadd.f32 %v3868, %v4220
      %v4222 = vpop.f32.mrf.mxu0
      %v4223 = vadd.f32 %v3870, %v4222
      %v4224 = vpop.f32.mrf.mxu0
      %v4225 = vadd.f32 %v3872, %v4224
      %v4226 = vpop.f32.mrf.mxu0
      %v4227 = vadd.f32 %v3874, %v4226
      %4228 = vmatprep.mubr.bf16.mxu0 %v2963
      %4229 = vmatmul.mubr.bf16.gmra.mxu0 %v2962
      %v4230 = vpop.f32.mrf.mxu0
      %v4231 = vadd.f32 %v3878, %v4230
      %v4232 = vpop.f32.mrf.mxu0
      %v4233 = vadd.f32 %v3880, %v4232
      %v4234 = vpop.f32.mrf.mxu0
      %v4235 = vadd.f32 %v3882, %v4234
      %v4236 = vpop.f32.mrf.mxu0
      %v4237 = vadd.f32 %v3884, %v4236
      %4238 = vmatprep.mubr.bf16.mxu0 %v2971
      %4239 = vmatmul.mubr.bf16.gmra.mxu0 %v2970
      %v4240 = vpop.f32.mrf.mxu0
      %v4241 = vadd.f32 %v3888, %v4240
      %v4242 = vpop.f32.mrf.mxu0
      %v4243 = vadd.f32 %v3890, %v4242
      %v4244 = vpop.f32.mrf.mxu0
      %v4245 = vadd.f32 %v3892, %v4244
      %v4246 = vpop.f32.mrf.mxu0
      %v4247 = vadd.f32 %v3894, %v4246
      %4248 = vmatprep.mubr.bf16.mxu0 %v2979
      %4249 = vmatmul.mubr.bf16.gmra.mxu0 %v2978
      %v4250 = vpop.f32.mrf.mxu0
      %v4251 = vadd.f32 %v3898, %v4250
      %v4252 = vpop.f32.mrf.mxu0
      %v4253 = vadd.f32 %v3900, %v4252
      %v4254 = vpop.f32.mrf.mxu0
      %v4255 = vadd.f32 %v3902, %v4254
      %v4256 = vpop.f32.mrf.mxu0
      %v4257 = vadd.f32 %v3904, %v4256
      %4258 = vmatprep.mubr.bf16.mxu0 %v2987
      %4259 = vmatmul.mubr.bf16.gmra.mxu0 %v2986
      %v4260 = vpop.f32.mrf.mxu0
      %v4261 = vadd.f32 %v3908, %v4260
      %v4262 = vpop.f32.mrf.mxu0
      %v4263 = vadd.f32 %v3910, %v4262
      %v4264 = vpop.f32.mrf.mxu0
      %v4265 = vadd.f32 %v3912, %v4264
      %v4266 = vpop.f32.mrf.mxu0
      %v4267 = vadd.f32 %v3914, %v4266
      %4268 = vmatprep.mubr.bf16.mxu0 %v2995
      %4269 = vmatmul.mubr.bf16.gmra.mxu0 %v2994
      %v4270 = vpop.f32.mrf.mxu0
      %v4271 = vadd.f32 %v3918, %v4270
      %v4272 = vpop.f32.mrf.mxu0
      %v4273 = vadd.f32 %v3920, %v4272
      %v4274 = vpop.f32.mrf.mxu0
      %v4275 = vadd.f32 %v3922, %v4274
      %v4276 = vpop.f32.mrf.mxu0
      %v4277 = vadd.f32 %v3924, %v4276
      %4278 = vmatprep.mubr.bf16.mxu0 %v3003
      %4279 = vmatmul.mubr.bf16.gmra.mxu0 %v3002
      %v4280 = vpop.f32.mrf.mxu0
      %v4281 = vadd.f32 %v3928, %v4280
      %v4282 = vpop.f32.mrf.mxu0
      %v4283 = vadd.f32 %v3930, %v4282
      %v4284 = vpop.f32.mrf.mxu0
      %v4285 = vadd.f32 %v3932, %v4284
      %v4286 = vpop.f32.mrf.mxu0
      %v4287 = vadd.f32 %v3934, %v4286
      %4288 = vmatprep.mubr.bf16.mxu0 %v3011
      %4289 = vmatmul.mubr.bf16.gmra.mxu0 %v3010
      %v4290 = vpop.f32.mrf.mxu0
      %v4291 = vadd.f32 %v3938, %v4290
      %v4292 = vpop.f32.mrf.mxu0
      %v4293 = vadd.f32 %v3940, %v4292
      %v4294 = vpop.f32.mrf.mxu0
      %v4295 = vadd.f32 %v3942, %v4294
      %v4296 = vpop.f32.mrf.mxu0
      %v4297 = vadd.f32 %v3944, %v4296
      %4298 = vmatprep.mubr.bf16.mxu0 %v3019
      %4299 = vmatmul.mubr.bf16.gmra.mxu0 %v3018
      %v4300 = vpop.f32.mrf.mxu0
      %v4301 = vadd.f32 %v3948, %v4300
      %v4302 = vpop.f32.mrf.mxu0
      %v4303 = vadd.f32 %v3950, %v4302
      %v4304 = vpop.f32.mrf.mxu0
      %v4305 = vadd.f32 %v3952, %v4304
      %v4306 = vpop.f32.mrf.mxu0
      %v4307 = vadd.f32 %v3954, %v4306
      %4308 = vmatprep.mubr.bf16.mxu0 %v3027
      %4309 = vmatmul.mubr.bf16.gmra.mxu0 %v3026
      %v4310 = vpop.f32.mrf.mxu0
      %v4311 = vadd.f32 %v3958, %v4310
      %v4312 = vpop.f32.mrf.mxu0
      %v4313 = vadd.f32 %v3960, %v4312
      %v4314 = vpop.f32.mrf.mxu0
      %v4315 = vadd.f32 %v3962, %v4314
      %v4316 = vpop.f32.mrf.mxu0
      %v4317 = vadd.f32 %v3964, %v4316
      %4318 = vmatprep.mubr.bf16.mxu0 %v3035
      %4319 = vmatmul.mubr.bf16.gmra.mxu0 %v3034
      %v4320 = vpop.f32.mrf.mxu0
      %v4321 = vadd.f32 %v3968, %v4320
      %v4322 = vpop.f32.mrf.mxu0
      %v4323 = vadd.f32 %v3970, %v4322
      %v4324 = vpop.f32.mrf.mxu0
      %v4325 = vadd.f32 %v3972, %v4324
      %v4326 = vpop.f32.mrf.mxu0
      %v4327 = vadd.f32 %v3974, %v4326
      %4328 = vmatprep.mubr.bf16.mxu0 %v3043
      %4329 = vmatmul.mubr.bf16.gmra.mxu0 %v3042
      %v4330 = vpop.f32.mrf.mxu0
      %v4331 = vadd.f32 %v3978, %v4330
      %v4332 = vpop.f32.mrf.mxu0
      %v4333 = vadd.f32 %v3980, %v4332
      %v4334 = vpop.f32.mrf.mxu0
      %v4335 = vadd.f32 %v3982, %v4334
      %v4336 = vpop.f32.mrf.mxu0
      %v4337 = vadd.f32 %v3984, %v4336
      %4338 = vmatprep.mubr.bf16.mxu0 %v3051
      %4339 = vmatmul.mubr.bf16.gmra.mxu0 %v3050
      %v4340 = vpop.f32.mrf.mxu0
      %v4341 = vadd.f32 %v3988, %v4340
      %v4342 = vpop.f32.mrf.mxu0
      %v4343 = vadd.f32 %v3990, %v4342
      %v4344 = vpop.f32.mrf.mxu0
      %v4345 = vadd.f32 %v3992, %v4344
      %v4346 = vpop.f32.mrf.mxu0
      %v4347 = vadd.f32 %v3994, %v4346
      %4348 = vmatprep.mubr.bf16.mxu0 %v3059
      %4349 = vmatmul.mubr.bf16.gmra.mxu0 %v3058
      %v4350 = vpop.f32.mrf.mxu0
      %v4351 = vadd.f32 %v3998, %v4350
      %v4352 = vpop.f32.mrf.mxu0
      %v4353 = vadd.f32 %v4000, %v4352
      %v4354 = vpop.f32.mrf.mxu0
      %v4355 = vadd.f32 %v4002, %v4354
      %v4356 = vpop.f32.mrf.mxu0
      %v4357 = vadd.f32 %v4004, %v4356
      %4358 = vmatprep.mubr.bf16.mxu0 %v3067
      %4359 = vmatmul.mubr.bf16.gmra.mxu0 %v3066
      %v4360 = vpop.f32.mrf.mxu0
      %v4361 = vadd.f32 %v4008, %v4360
      %v4362 = vpop.f32.mrf.mxu0
      %v4363 = vadd.f32 %v4010, %v4362
      %v4364 = vpop.f32.mrf.mxu0
      %v4365 = vadd.f32 %v4012, %v4364
      %v4366 = vpop.f32.mrf.mxu0
      %v4367 = vadd.f32 %v4014, %v4366
      %4368 = vmatprep.mubr.bf16.mxu0 %v3075
      %4369 = vmatmul.mubr.bf16.gmra.mxu0 %v3074
      %v4370 = vpop.f32.mrf.mxu0
      %v4371 = vadd.f32 %v4018, %v4370
      %v4372 = vpop.f32.mrf.mxu0
      %v4373 = vadd.f32 %v4020, %v4372
      %v4374 = vpop.f32.mrf.mxu0
      %v4375 = vadd.f32 %v4022, %v4374
      %v4376 = vpop.f32.mrf.mxu0
      %v4377 = vadd.f32 %v4024, %v4376
      %4378 = vmatprep.mubr.bf16.mxu0 %v3083
      %4379 = vmatmul.mubr.bf16.gmra.mxu0 %v3082
      %v4380 = vpop.f32.mrf.mxu0
      %v4381 = vadd.f32 %v4028, %v4380
      %v4382 = vpop.f32.mrf.mxu0
      %v4383 = vadd.f32 %v4030, %v4382
      %v4384 = vpop.f32.mrf.mxu0
      %v4385 = vadd.f32 %v4032, %v4384
      %v4386 = vpop.f32.mrf.mxu0
      %v4387 = vadd.f32 %v4034, %v4386
      %4388 = vmatprep.mubr.bf16.mxu0 %v3091
      %4389 = vmatmul.mubr.bf16.gmra.mxu0 %v3090
      %v4390 = vpop.f32.mrf.mxu0
      %v4391 = vadd.f32 %v4038, %v4390
      %v4392 = vpop.f32.mrf.mxu0
      %v4393 = vadd.f32 %v4040, %v4392
      %v4394 = vpop.f32.mrf.mxu0
      %v4395 = vadd.f32 %v4042, %v4394
      %v4396 = vpop.f32.mrf.mxu0
      %v4397 = vadd.f32 %v4044, %v4396
      %4398 = vmatprep.mubr.bf16.mxu0 %v3099
      %4399 = vmatmul.mubr.bf16.gmra.mxu0 %v3098
      %v4400 = vpop.f32.mrf.mxu0
      %v4401 = vadd.f32 %v4048, %v4400
      %v4402 = vpop.f32.mrf.mxu0
      %v4403 = vadd.f32 %v4050, %v4402
      %v4404 = vpop.f32.mrf.mxu0
      %v4405 = vadd.f32 %v4052, %v4404
      %v4406 = vpop.f32.mrf.mxu0
      %v4407 = vadd.f32 %v4054, %v4406
      %4408 = vmatprep.mubr.bf16.mxu0 %v3107
      %4409 = vmatmul.mubr.bf16.gmra.mxu0 %v3106
      %v4410 = vpop.f32.mrf.mxu0
      %v4411 = vadd.f32 %v4058, %v4410
      %v4412 = vpop.f32.mrf.mxu0
      %v4413 = vadd.f32 %v4060, %v4412
      %v4414 = vpop.f32.mrf.mxu0
      %v4415 = vadd.f32 %v4062, %v4414
      %v4416 = vpop.f32.mrf.mxu0
      %v4417 = vadd.f32 %v4064, %v4416
      %4418 = vmatprep.mubr.bf16.mxu0 %v3115
      %4419 = vmatmul.mubr.bf16.gmra.mxu0 %v3114
      %v4420 = vpop.f32.mrf.mxu0
      %v4421 = vadd.f32 %v4068, %v4420
      %v4422 = vpop.f32.mrf.mxu0
      %v4423 = vadd.f32 %v4070, %v4422
      %v4424 = vpop.f32.mrf.mxu0
      %v4425 = vadd.f32 %v4072, %v4424
      %v4426 = vpop.f32.mrf.mxu0
      %v4427 = vadd.f32 %v4074, %v4426
      %4428 = vmatprep.mubr.bf16.mxu0 %v3123
      %4429 = vmatmul.mubr.bf16.gmra.mxu0 %v3122
      %v4430 = vpop.f32.mrf.mxu0
      %v4431 = vadd.f32 %v4078, %v4430
      %v4432 = vpop.f32.mrf.mxu0
      %v4433 = vadd.f32 %v4080, %v4432
      %v4434 = vpop.f32.mrf.mxu0
      %v4435 = vadd.f32 %v4082, %v4434
      %v4436 = vpop.f32.mrf.mxu0
      %v4437 = vadd.f32 %v4084, %v4436
      %4438 = vmatprep.mubr.bf16.mxu0 %v3131
      %4439 = vmatmul.mubr.bf16.gmra.mxu0 %v3130
      %v4440 = vpop.f32.mrf.mxu0
      %v4441 = vadd.f32 %v4088, %v4440
      %v4442 = vpop.f32.mrf.mxu0
      %v4443 = vadd.f32 %v4090, %v4442
      %v4444 = vpop.f32.mrf.mxu0
      %v4445 = vadd.f32 %v4092, %v4444
      %v4446 = vpop.f32.mrf.mxu0
      %v4447 = vadd.f32 %v4094, %v4446
      %4448 = vdwg.mxu0
      %4449 = vmatprep.subr.bf16.mxu0 %v1453
      %4450 = vmatpush1.bf16.msra.mxu0 %v1452
      %4451 = vmatprep.subr.bf16.mxu0 %v1451
      %4452 = vmatpush1.bf16.msra.mxu0 %v1450
      %4453 = vmatprep.subr.bf16.mxu0 %v1449
      %4454 = vmatpush1.bf16.msra.mxu0 %v1448
      %4455 = vmatprep.subr.bf16.mxu0 %v1447
      %4456 = vmatpush1.bf16.msra.mxu0 %v1446
      %4457 = vmatprep.subr.bf16.mxu0 %v1445
      %4458 = vmatpush1.bf16.msra.mxu0 %v1444
      %4459 = vmatprep.subr.bf16.mxu0 %v1443
      %4460 = vmatpush1.bf16.msra.mxu0 %v1442
      %4461 = vmatprep.subr.bf16.mxu0 %v1441
      %4462 = vmatpush1.bf16.msra.mxu0 %v1440
      %4463 = vmatprep.subr.bf16.mxu0 %v1439
      %4464 = vmatpush1.bf16.msra.mxu0 %v1438
      %4465 = vmatprep.subr.bf16.mxu0 %v1469
      %4466 = vmatpush2.bf16.msra.mxu0 %v1468
      %4467 = vmatprep.subr.bf16.mxu0 %v1467
      %4468 = vmatpush2.bf16.msra.mxu0 %v1466
      %4469 = vmatprep.subr.bf16.mxu0 %v1465
      %4470 = vmatpush2.bf16.msra.mxu0 %v1464
      %4471 = vmatprep.subr.bf16.mxu0 %v1463
      %4472 = vmatpush2.bf16.msra.mxu0 %v1462
      %4473 = vmatprep.subr.bf16.mxu0 %v1461
      %4474 = vmatpush2.bf16.msra.mxu0 %v1460
      %4475 = vmatprep.subr.bf16.mxu0 %v1459
      %4476 = vmatpush2.bf16.msra.mxu0 %v1458
      %4477 = vmatprep.subr.bf16.mxu0 %v1457
      %4478 = vmatpush2.bf16.msra.mxu0 %v1456
      %4479 = vmatprep.subr.bf16.mxu0 %v1455
      %4480 = vmatpush2.bf16.msra.mxu0 %v1454
      %4481 = vmatprep.mubr.bf16.mxu0 %v2885
      %4482 = vmatmul.mubr.bf16.gmra.mxu0 %v2884
      %v4483 = vpop.f32.mrf.mxu0
      %v4484 = vadd.f32 %v4131, %v4483
      %v4485 = vpop.f32.mrf.mxu0
      %v4486 = vadd.f32 %v4133, %v4485
      %v4487 = vpop.f32.mrf.mxu0
      %v4488 = vadd.f32 %v4135, %v4487
      %v4489 = vpop.f32.mrf.mxu0
      %v4490 = vadd.f32 %v4137, %v4489
      %4491 = vmatprep.mubr.bf16.mxu0 %v2893
      %4492 = vmatmul.mubr.bf16.gmra.mxu0 %v2892
      %v4493 = vpop.f32.mrf.mxu0
      %v4494 = vadd.f32 %v4141, %v4493
      %v4495 = vpop.f32.mrf.mxu0
      %v4496 = vadd.f32 %v4143, %v4495
      %v4497 = vpop.f32.mrf.mxu0
      %v4498 = vadd.f32 %v4145, %v4497
      %v4499 = vpop.f32.mrf.mxu0
      %v4500 = vadd.f32 %v4147, %v4499
      %4501 = vmatprep.mubr.bf16.mxu0 %v2901
      %4502 = vmatmul.mubr.bf16.gmra.mxu0 %v2900
      %v4503 = vpop.f32.mrf.mxu0
      %v4504 = vadd.f32 %v4151, %v4503
      %v4505 = vpop.f32.mrf.mxu0
      %v4506 = vadd.f32 %v4153, %v4505
      %v4507 = vpop.f32.mrf.mxu0
      %v4508 = vadd.f32 %v4155, %v4507
      %v4509 = vpop.f32.mrf.mxu0
      %v4510 = vadd.f32 %v4157, %v4509
      %4511 = vmatprep.mubr.bf16.mxu0 %v2909
      %4512 = vmatmul.mubr.bf16.gmra.mxu0 %v2908
      %v4513 = vpop.f32.mrf.mxu0
      %v4514 = vadd.f32 %v4161, %v4513
      %v4515 = vpop.f32.mrf.mxu0
      %v4516 = vadd.f32 %v4163, %v4515
      %v4517 = vpop.f32.mrf.mxu0
      %v4518 = vadd.f32 %v4165, %v4517
      %v4519 = vpop.f32.mrf.mxu0
      %v4520 = vadd.f32 %v4167, %v4519
      %4521 = vmatprep.mubr.bf16.mxu0 %v2917
      %4522 = vmatmul.mubr.bf16.gmra.mxu0 %v2916
      %v4523 = vpop.f32.mrf.mxu0
      %v4524 = vadd.f32 %v4171, %v4523
      %v4525 = vpop.f32.mrf.mxu0
      %v4526 = vadd.f32 %v4173, %v4525
      %v4527 = vpop.f32.mrf.mxu0
      %v4528 = vadd.f32 %v4175, %v4527
      %v4529 = vpop.f32.mrf.mxu0
      %v4530 = vadd.f32 %v4177, %v4529
      %4531 = vmatprep.mubr.bf16.mxu0 %v2925
      %4532 = vmatmul.mubr.bf16.gmra.mxu0 %v2924
      %v4533 = vpop.f32.mrf.mxu0
      %v4534 = vadd.f32 %v4181, %v4533
      %v4535 = vpop.f32.mrf.mxu0
      %v4536 = vadd.f32 %v4183, %v4535
      %v4537 = vpop.f32.mrf.mxu0
      %v4538 = vadd.f32 %v4185, %v4537
      %v4539 = vpop.f32.mrf.mxu0
      %v4540 = vadd.f32 %v4187, %v4539
      %4541 = vmatprep.mubr.bf16.mxu0 %v2933
      %4542 = vmatmul.mubr.bf16.gmra.mxu0 %v2932
      %v4543 = vpop.f32.mrf.mxu0
      %v4544 = vadd.f32 %v4191, %v4543
      %v4545 = vpop.f32.mrf.mxu0
      %v4546 = vadd.f32 %v4193, %v4545
      %v4547 = vpop.f32.mrf.mxu0
      %v4548 = vadd.f32 %v4195, %v4547
      %v4549 = vpop.f32.mrf.mxu0
      %v4550 = vadd.f32 %v4197, %v4549
      %4551 = vmatprep.mubr.bf16.mxu0 %v2941
      %4552 = vmatmul.mubr.bf16.gmra.mxu0 %v2940
      %v4553 = vpop.f32.mrf.mxu0
      %v4554 = vadd.f32 %v4201, %v4553
      %v4555 = vpop.f32.mrf.mxu0
      %v4556 = vadd.f32 %v4203, %v4555
      %v4557 = vpop.f32.mrf.mxu0
      %v4558 = vadd.f32 %v4205, %v4557
      %v4559 = vpop.f32.mrf.mxu0
      %v4560 = vadd.f32 %v4207, %v4559
      %4561 = vmatprep.mubr.bf16.mxu0 %v2949
      %4562 = vmatmul.mubr.bf16.gmra.mxu0 %v2948
      %v4563 = vpop.f32.mrf.mxu0
      %v4564 = vadd.f32 %v4211, %v4563
      %v4565 = vpop.f32.mrf.mxu0
      %v4566 = vadd.f32 %v4213, %v4565
      %v4567 = vpop.f32.mrf.mxu0
      %v4568 = vadd.f32 %v4215, %v4567
      %v4569 = vpop.f32.mrf.mxu0
      %v4570 = vadd.f32 %v4217, %v4569
      %4571 = vmatprep.mubr.bf16.mxu0 %v2957
      %4572 = vmatmul.mubr.bf16.gmra.mxu0 %v2956
      %v4573 = vpop.f32.mrf.mxu0
      %v4574 = vadd.f32 %v4221, %v4573
      %v4575 = vpop.f32.mrf.mxu0
      %v4576 = vadd.f32 %v4223, %v4575
      %v4577 = vpop.f32.mrf.mxu0
      %v4578 = vadd.f32 %v4225, %v4577
      %v4579 = vpop.f32.mrf.mxu0
      %v4580 = vadd.f32 %v4227, %v4579
      %4581 = vmatprep.mubr.bf16.mxu0 %v2965
      %4582 = vmatmul.mubr.bf16.gmra.mxu0 %v2964
      %v4583 = vpop.f32.mrf.mxu0
      %v4584 = vadd.f32 %v4231, %v4583
      %v4585 = vpop.f32.mrf.mxu0
      %v4586 = vadd.f32 %v4233, %v4585
      %v4587 = vpop.f32.mrf.mxu0
      %v4588 = vadd.f32 %v4235, %v4587
      %v4589 = vpop.f32.mrf.mxu0
      %v4590 = vadd.f32 %v4237, %v4589
      %4591 = vmatprep.mubr.bf16.mxu0 %v2973
      %4592 = vmatmul.mubr.bf16.gmra.mxu0 %v2972
      %v4593 = vpop.f32.mrf.mxu0
      %v4594 = vadd.f32 %v4241, %v4593
      %v4595 = vpop.f32.mrf.mxu0
      %v4596 = vadd.f32 %v4243, %v4595
      %v4597 = vpop.f32.mrf.mxu0
      %v4598 = vadd.f32 %v4245, %v4597
      %v4599 = vpop.f32.mrf.mxu0
      %v4600 = vadd.f32 %v4247, %v4599
      %4601 = vmatprep.mubr.bf16.mxu0 %v2981
      %4602 = vmatmul.mubr.bf16.gmra.mxu0 %v2980
      %v4603 = vpop.f32.mrf.mxu0
      %v4604 = vadd.f32 %v4251, %v4603
      %v4605 = vpop.f32.mrf.mxu0
      %v4606 = vadd.f32 %v4253, %v4605
      %v4607 = vpop.f32.mrf.mxu0
      %v4608 = vadd.f32 %v4255, %v4607
      %v4609 = vpop.f32.mrf.mxu0
      %v4610 = vadd.f32 %v4257, %v4609
      %4611 = vmatprep.mubr.bf16.mxu0 %v2989
      %4612 = vmatmul.mubr.bf16.gmra.mxu0 %v2988
      %v4613 = vpop.f32.mrf.mxu0
      %v4614 = vadd.f32 %v4261, %v4613
      %v4615 = vpop.f32.mrf.mxu0
      %v4616 = vadd.f32 %v4263, %v4615
      %v4617 = vpop.f32.mrf.mxu0
      %v4618 = vadd.f32 %v4265, %v4617
      %v4619 = vpop.f32.mrf.mxu0
      %v4620 = vadd.f32 %v4267, %v4619
      %4621 = vmatprep.mubr.bf16.mxu0 %v2997
      %4622 = vmatmul.mubr.bf16.gmra.mxu0 %v2996
      %v4623 = vpop.f32.mrf.mxu0
      %v4624 = vadd.f32 %v4271, %v4623
      %v4625 = vpop.f32.mrf.mxu0
      %v4626 = vadd.f32 %v4273, %v4625
      %v4627 = vpop.f32.mrf.mxu0
      %v4628 = vadd.f32 %v4275, %v4627
      %v4629 = vpop.f32.mrf.mxu0
      %v4630 = vadd.f32 %v4277, %v4629
      %4631 = vmatprep.mubr.bf16.mxu0 %v3005
      %4632 = vmatmul.mubr.bf16.gmra.mxu0 %v3004
      %v4633 = vpop.f32.mrf.mxu0
      %v4634 = vadd.f32 %v4281, %v4633
      %v4635 = vpop.f32.mrf.mxu0
      %v4636 = vadd.f32 %v4283, %v4635
      %v4637 = vpop.f32.mrf.mxu0
      %v4638 = vadd.f32 %v4285, %v4637
      %v4639 = vpop.f32.mrf.mxu0
      %v4640 = vadd.f32 %v4287, %v4639
      %4641 = vmatprep.mubr.bf16.mxu0 %v3013
      %4642 = vmatmul.mubr.bf16.gmra.mxu0 %v3012
      %v4643 = vpop.f32.mrf.mxu0
      %v4644 = vadd.f32 %v4291, %v4643
      %v4645 = vpop.f32.mrf.mxu0
      %v4646 = vadd.f32 %v4293, %v4645
      %v4647 = vpop.f32.mrf.mxu0
      %v4648 = vadd.f32 %v4295, %v4647
      %v4649 = vpop.f32.mrf.mxu0
      %v4650 = vadd.f32 %v4297, %v4649
      %4651 = vmatprep.mubr.bf16.mxu0 %v3021
      %4652 = vmatmul.mubr.bf16.gmra.mxu0 %v3020
      %v4653 = vpop.f32.mrf.mxu0
      %v4654 = vadd.f32 %v4301, %v4653
      %v4655 = vpop.f32.mrf.mxu0
      %v4656 = vadd.f32 %v4303, %v4655
      %v4657 = vpop.f32.mrf.mxu0
      %v4658 = vadd.f32 %v4305, %v4657
      %v4659 = vpop.f32.mrf.mxu0
      %v4660 = vadd.f32 %v4307, %v4659
      %4661 = vmatprep.mubr.bf16.mxu0 %v3029
      %4662 = vmatmul.mubr.bf16.gmra.mxu0 %v3028
      %v4663 = vpop.f32.mrf.mxu0
      %v4664 = vadd.f32 %v4311, %v4663
      %v4665 = vpop.f32.mrf.mxu0
      %v4666 = vadd.f32 %v4313, %v4665
      %v4667 = vpop.f32.mrf.mxu0
      %v4668 = vadd.f32 %v4315, %v4667
      %v4669 = vpop.f32.mrf.mxu0
      %v4670 = vadd.f32 %v4317, %v4669
      %4671 = vmatprep.mubr.bf16.mxu0 %v3037
      %4672 = vmatmul.mubr.bf16.gmra.mxu0 %v3036
      %v4673 = vpop.f32.mrf.mxu0
      %v4674 = vadd.f32 %v4321, %v4673
      %v4675 = vpop.f32.mrf.mxu0
      %v4676 = vadd.f32 %v4323, %v4675
      %v4677 = vpop.f32.mrf.mxu0
      %v4678 = vadd.f32 %v4325, %v4677
      %v4679 = vpop.f32.mrf.mxu0
      %v4680 = vadd.f32 %v4327, %v4679
      %4681 = vmatprep.mubr.bf16.mxu0 %v3045
      %4682 = vmatmul.mubr.bf16.gmra.mxu0 %v3044
      %v4683 = vpop.f32.mrf.mxu0
      %v4684 = vadd.f32 %v4331, %v4683
      %v4685 = vpop.f32.mrf.mxu0
      %v4686 = vadd.f32 %v4333, %v4685
      %v4687 = vpop.f32.mrf.mxu0
      %v4688 = vadd.f32 %v4335, %v4687
      %v4689 = vpop.f32.mrf.mxu0
      %v4690 = vadd.f32 %v4337, %v4689
      %4691 = vmatprep.mubr.bf16.mxu0 %v3053
      %4692 = vmatmul.mubr.bf16.gmra.mxu0 %v3052
      %v4693 = vpop.f32.mrf.mxu0
      %v4694 = vadd.f32 %v4341, %v4693
      %v4695 = vpop.f32.mrf.mxu0
      %v4696 = vadd.f32 %v4343, %v4695
      %v4697 = vpop.f32.mrf.mxu0
      %v4698 = vadd.f32 %v4345, %v4697
      %v4699 = vpop.f32.mrf.mxu0
      %v4700 = vadd.f32 %v4347, %v4699
      %4701 = vmatprep.mubr.bf16.mxu0 %v3061
      %4702 = vmatmul.mubr.bf16.gmra.mxu0 %v3060
      %v4703 = vpop.f32.mrf.mxu0
      %v4704 = vadd.f32 %v4351, %v4703
      %v4705 = vpop.f32.mrf.mxu0
      %v4706 = vadd.f32 %v4353, %v4705
      %v4707 = vpop.f32.mrf.mxu0
      %v4708 = vadd.f32 %v4355, %v4707
      %v4709 = vpop.f32.mrf.mxu0
      %v4710 = vadd.f32 %v4357, %v4709
      %4711 = vmatprep.mubr.bf16.mxu0 %v3069
      %4712 = vmatmul.mubr.bf16.gmra.mxu0 %v3068
      %v4713 = vpop.f32.mrf.mxu0
      %v4714 = vadd.f32 %v4361, %v4713
      %v4715 = vpop.f32.mrf.mxu0
      %v4716 = vadd.f32 %v4363, %v4715
      %v4717 = vpop.f32.mrf.mxu0
      %v4718 = vadd.f32 %v4365, %v4717
      %v4719 = vpop.f32.mrf.mxu0
      %v4720 = vadd.f32 %v4367, %v4719
      %4721 = vmatprep.mubr.bf16.mxu0 %v3077
      %4722 = vmatmul.mubr.bf16.gmra.mxu0 %v3076
      %v4723 = vpop.f32.mrf.mxu0
      %v4724 = vadd.f32 %v4371, %v4723
      %v4725 = vpop.f32.mrf.mxu0
      %v4726 = vadd.f32 %v4373, %v4725
      %v4727 = vpop.f32.mrf.mxu0
      %v4728 = vadd.f32 %v4375, %v4727
      %v4729 = vpop.f32.mrf.mxu0
      %v4730 = vadd.f32 %v4377, %v4729
      %4731 = vmatprep.mubr.bf16.mxu0 %v3085
      %4732 = vmatmul.mubr.bf16.gmra.mxu0 %v3084
      %v4733 = vpop.f32.mrf.mxu0
      %v4734 = vadd.f32 %v4381, %v4733
      %v4735 = vpop.f32.mrf.mxu0
      %v4736 = vadd.f32 %v4383, %v4735
      %v4737 = vpop.f32.mrf.mxu0
      %v4738 = vadd.f32 %v4385, %v4737
      %v4739 = vpop.f32.mrf.mxu0
      %v4740 = vadd.f32 %v4387, %v4739
      %4741 = vmatprep.mubr.bf16.mxu0 %v3093
      %4742 = vmatmul.mubr.bf16.gmra.mxu0 %v3092
      %v4743 = vpop.f32.mrf.mxu0
      %v4744 = vadd.f32 %v4391, %v4743
      %v4745 = vpop.f32.mrf.mxu0
      %v4746 = vadd.f32 %v4393, %v4745
      %v4747 = vpop.f32.mrf.mxu0
      %v4748 = vadd.f32 %v4395, %v4747
      %v4749 = vpop.f32.mrf.mxu0
      %v4750 = vadd.f32 %v4397, %v4749
      %4751 = vmatprep.mubr.bf16.mxu0 %v3101
      %4752 = vmatmul.mubr.bf16.gmra.mxu0 %v3100
      %v4753 = vpop.f32.mrf.mxu0
      %v4754 = vadd.f32 %v4401, %v4753
      %v4755 = vpop.f32.mrf.mxu0
      %v4756 = vadd.f32 %v4403, %v4755
      %v4757 = vpop.f32.mrf.mxu0
      %v4758 = vadd.f32 %v4405, %v4757
      %v4759 = vpop.f32.mrf.mxu0
      %v4760 = vadd.f32 %v4407, %v4759
      %4761 = vmatprep.mubr.bf16.mxu0 %v3109
      %4762 = vmatmul.mubr.bf16.gmra.mxu0 %v3108
      %v4763 = vpop.f32.mrf.mxu0
      %v4764 = vadd.f32 %v4411, %v4763
      %v4765 = vpop.f32.mrf.mxu0
      %v4766 = vadd.f32 %v4413, %v4765
      %v4767 = vpop.f32.mrf.mxu0
      %v4768 = vadd.f32 %v4415, %v4767
      %v4769 = vpop.f32.mrf.mxu0
      %v4770 = vadd.f32 %v4417, %v4769
      %4771 = vmatprep.mubr.bf16.mxu0 %v3117
      %4772 = vmatmul.mubr.bf16.gmra.mxu0 %v3116
      %v4773 = vpop.f32.mrf.mxu0
      %v4774 = vadd.f32 %v4421, %v4773
      %v4775 = vpop.f32.mrf.mxu0
      %v4776 = vadd.f32 %v4423, %v4775
      %v4777 = vpop.f32.mrf.mxu0
      %v4778 = vadd.f32 %v4425, %v4777
      %v4779 = vpop.f32.mrf.mxu0
      %v4780 = vadd.f32 %v4427, %v4779
      %4781 = vmatprep.mubr.bf16.mxu0 %v3125
      %4782 = vmatmul.mubr.bf16.gmra.mxu0 %v3124
      %v4783 = vpop.f32.mrf.mxu0
      %v4784 = vadd.f32 %v4431, %v4783
      %v4785 = vpop.f32.mrf.mxu0
      %v4786 = vadd.f32 %v4433, %v4785
      %v4787 = vpop.f32.mrf.mxu0
      %v4788 = vadd.f32 %v4435, %v4787
      %v4789 = vpop.f32.mrf.mxu0
      %v4790 = vadd.f32 %v4437, %v4789
      %4791 = vmatprep.mubr.bf16.mxu0 %v3133
      %4792 = vmatmul.mubr.bf16.gmra.mxu0 %v3132
      %v4793 = vpop.f32.mrf.mxu0
      %v4794 = vadd.f32 %v4441, %v4793
      %v4795 = vpop.f32.mrf.mxu0
      %v4796 = vadd.f32 %v4443, %v4795
      %v4797 = vpop.f32.mrf.mxu0
      %v4798 = vadd.f32 %v4445, %v4797
      %v4799 = vpop.f32.mrf.mxu0
      %v4800 = vadd.f32 %v4447, %v4799
      %4801 = vdwg.mxu0
      %vm4802 = vcmp.gt.f32.partialorder %v4484, 0.0
      %vm4803 = vcmp.gt.f32.partialorder %v4486, 0.0
      %vm4804 = vcmp.gt.f32.partialorder %v4488, 0.0
      %vm4805 = vcmp.gt.f32.partialorder %v4490, 0.0
      %vm4806 = vcmp.gt.f32.partialorder %v4494, 0.0
      %vm4807 = vcmp.gt.f32.partialorder %v4496, 0.0
      %vm4808 = vcmp.gt.f32.partialorder %v4498, 0.0
      %vm4809 = vcmp.gt.f32.partialorder %v4500, 0.0
      %vm4810 = vcmp.gt.f32.partialorder %v4504, 0.0
      %vm4811 = vcmp.gt.f32.partialorder %v4506, 0.0
      %vm4812 = vcmp.gt.f32.partialorder %v4508, 0.0
      %vm4813 = vcmp.gt.f32.partialorder %v4510, 0.0
      %vm4814 = vcmp.gt.f32.partialorder %v4514, 0.0
      %vm4815 = vcmp.gt.f32.partialorder %v4516, 0.0
      %vm4816 = vcmp.gt.f32.partialorder %v4518, 0.0
      %vm4817 = vcmp.gt.f32.partialorder %v4520, 0.0
      %vm4818 = vcmp.gt.f32.partialorder %v4524, 0.0
      %vm4819 = vcmp.gt.f32.partialorder %v4526, 0.0
      %vm4820 = vcmp.gt.f32.partialorder %v4528, 0.0
      %vm4821 = vcmp.gt.f32.partialorder %v4530, 0.0
      %vm4822 = vcmp.gt.f32.partialorder %v4534, 0.0
      %vm4823 = vcmp.gt.f32.partialorder %v4536, 0.0
      %vm4824 = vcmp.gt.f32.partialorder %v4538, 0.0
      %vm4825 = vcmp.gt.f32.partialorder %v4540, 0.0
      %vm4826 = vcmp.gt.f32.partialorder %v4544, 0.0
      %vm4827 = vcmp.gt.f32.partialorder %v4546, 0.0
      %vm4828 = vcmp.gt.f32.partialorder %v4548, 0.0
      %vm4829 = vcmp.gt.f32.partialorder %v4550, 0.0
      %vm4830 = vcmp.gt.f32.partialorder %v4554, 0.0
      %vm4831 = vcmp.gt.f32.partialorder %v4556, 0.0
      %vm4832 = vcmp.gt.f32.partialorder %v4558, 0.0
      %vm4833 = vcmp.gt.f32.partialorder %v4560, 0.0
      %vm4834 = vcmp.gt.f32.partialorder %v4564, 0.0
      %vm4835 = vcmp.gt.f32.partialorder %v4566, 0.0
      %vm4836 = vcmp.gt.f32.partialorder %v4568, 0.0
      %vm4837 = vcmp.gt.f32.partialorder %v4570, 0.0
      %vm4838 = vcmp.gt.f32.partialorder %v4574, 0.0
      %vm4839 = vcmp.gt.f32.partialorder %v4576, 0.0
      %vm4840 = vcmp.gt.f32.partialorder %v4578, 0.0
      %vm4841 = vcmp.gt.f32.partialorder %v4580, 0.0
      %vm4842 = vcmp.gt.f32.partialorder %v4584, 0.0
      %vm4843 = vcmp.gt.f32.partialorder %v4586, 0.0
      %vm4844 = vcmp.gt.f32.partialorder %v4588, 0.0
      %vm4845 = vcmp.gt.f32.partialorder %v4590, 0.0
      %vm4846 = vcmp.gt.f32.partialorder %v4594, 0.0
      %vm4847 = vcmp.gt.f32.partialorder %v4596, 0.0
      %vm4848 = vcmp.gt.f32.partialorder %v4598, 0.0
      %vm4849 = vcmp.gt.f32.partialorder %v4600, 0.0
      %vm4850 = vcmp.gt.f32.partialorder %v4604, 0.0
      %vm4851 = vcmp.gt.f32.partialorder %v4606, 0.0
      %vm4852 = vcmp.gt.f32.partialorder %v4608, 0.0
      %vm4853 = vcmp.gt.f32.partialorder %v4610, 0.0
      %vm4854 = vcmp.gt.f32.partialorder %v4614, 0.0
      %vm4855 = vcmp.gt.f32.partialorder %v4616, 0.0
      %vm4856 = vcmp.gt.f32.partialorder %v4618, 0.0
      %vm4857 = vcmp.gt.f32.partialorder %v4620, 0.0
      %vm4858 = vcmp.gt.f32.partialorder %v4624, 0.0
      %vm4859 = vcmp.gt.f32.partialorder %v4626, 0.0
      %vm4860 = vcmp.gt.f32.partialorder %v4628, 0.0
      %vm4861 = vcmp.gt.f32.partialorder %v4630, 0.0
      %vm4862 = vcmp.gt.f32.partialorder %v4634, 0.0
      %vm4863 = vcmp.gt.f32.partialorder %v4636, 0.0
      %vm4864 = vcmp.gt.f32.partialorder %v4638, 0.0
      %vm4865 = vcmp.gt.f32.partialorder %v4640, 0.0
      %vm4866 = vcmp.gt.f32.partialorder %v4644, 0.0
      %vm4867 = vcmp.gt.f32.partialorder %v4646, 0.0
      %vm4868 = vcmp.gt.f32.partialorder %v4648, 0.0
      %vm4869 = vcmp.gt.f32.partialorder %v4650, 0.0
      %vm4870 = vcmp.gt.f32.partialorder %v4654, 0.0
      %vm4871 = vcmp.gt.f32.partialorder %v4656, 0.0
      %vm4872 = vcmp.gt.f32.partialorder %v4658, 0.0
      %vm4873 = vcmp.gt.f32.partialorder %v4660, 0.0
      %vm4874 = vcmp.gt.f32.partialorder %v4664, 0.0
      %vm4875 = vcmp.gt.f32.partialorder %v4666, 0.0
      %vm4876 = vcmp.gt.f32.partialorder %v4668, 0.0
      %vm4877 = vcmp.gt.f32.partialorder %v4670, 0.0
      %vm4878 = vcmp.gt.f32.partialorder %v4674, 0.0
      %vm4879 = vcmp.gt.f32.partialorder %v4676, 0.0
      %vm4880 = vcmp.gt.f32.partialorder %v4678, 0.0
      %vm4881 = vcmp.gt.f32.partialorder %v4680, 0.0
      %vm4882 = vcmp.gt.f32.partialorder %v4684, 0.0
      %vm4883 = vcmp.gt.f32.partialorder %v4686, 0.0
      %vm4884 = vcmp.gt.f32.partialorder %v4688, 0.0
      %vm4885 = vcmp.gt.f32.partialorder %v4690, 0.0
      %vm4886 = vcmp.gt.f32.partialorder %v4694, 0.0
      %vm4887 = vcmp.gt.f32.partialorder %v4696, 0.0
      %vm4888 = vcmp.gt.f32.partialorder %v4698, 0.0
      %vm4889 = vcmp.gt.f32.partialorder %v4700, 0.0
      %vm4890 = vcmp.gt.f32.partialorder %v4704, 0.0
      %vm4891 = vcmp.gt.f32.partialorder %v4706, 0.0
      %vm4892 = vcmp.gt.f32.partialorder %v4708, 0.0
      %vm4893 = vcmp.gt.f32.partialorder %v4710, 0.0
      %vm4894 = vcmp.gt.f32.partialorder %v4714, 0.0
      %vm4895 = vcmp.gt.f32.partialorder %v4716, 0.0
      %vm4896 = vcmp.gt.f32.partialorder %v4718, 0.0
      %vm4897 = vcmp.gt.f32.partialorder %v4720, 0.0
      %vm4898 = vcmp.gt.f32.partialorder %v4724, 0.0
      %vm4899 = vcmp.gt.f32.partialorder %v4726, 0.0
      %vm4900 = vcmp.gt.f32.partialorder %v4728, 0.0
      %vm4901 = vcmp.gt.f32.partialorder %v4730, 0.0
      %vm4902 = vcmp.gt.f32.partialorder %v4734, 0.0
      %vm4903 = vcmp.gt.f32.partialorder %v4736, 0.0
      %vm4904 = vcmp.gt.f32.partialorder %v4738, 0.0
      %vm4905 = vcmp.gt.f32.partialorder %v4740, 0.0
      %vm4906 = vcmp.gt.f32.partialorder %v4744, 0.0
      %vm4907 = vcmp.gt.f32.partialorder %v4746, 0.0
      %vm4908 = vcmp.gt.f32.partialorder %v4748, 0.0
      %vm4909 = vcmp.gt.f32.partialorder %v4750, 0.0
      %vm4910 = vcmp.gt.f32.partialorder %v4754, 0.0
      %vm4911 = vcmp.gt.f32.partialorder %v4756, 0.0
      %vm4912 = vcmp.gt.f32.partialorder %v4758, 0.0
      %vm4913 = vcmp.gt.f32.partialorder %v4760, 0.0
      %vm4914 = vcmp.gt.f32.partialorder %v4764, 0.0
      %vm4915 = vcmp.gt.f32.partialorder %v4766, 0.0
      %vm4916 = vcmp.gt.f32.partialorder %v4768, 0.0
      %vm4917 = vcmp.gt.f32.partialorder %v4770, 0.0
      %vm4918 = vcmp.gt.f32.partialorder %v4774, 0.0
      %vm4919 = vcmp.gt.f32.partialorder %v4776, 0.0
      %vm4920 = vcmp.gt.f32.partialorder %v4778, 0.0
      %vm4921 = vcmp.gt.f32.partialorder %v4780, 0.0
      %vm4922 = vcmp.gt.f32.partialorder %v4784, 0.0
      %vm4923 = vcmp.gt.f32.partialorder %v4786, 0.0
      %vm4924 = vcmp.gt.f32.partialorder %v4788, 0.0
      %vm4925 = vcmp.gt.f32.partialorder %v4790, 0.0
      %vm4926 = vcmp.gt.f32.partialorder %v4794, 0.0
      %vm4927 = vcmp.gt.f32.partialorder %v4796, 0.0
      %vm4928 = vcmp.gt.f32.partialorder %v4798, 0.0
      %vm4929 = vcmp.gt.f32.partialorder %v4800, 0.0
      %v4930 = vmul.f32 %v4484, 0.2
      %v4931 = vmul.f32 %v4486, 0.2
      %v4932 = vmul.f32 %v4488, 0.2
      %v4933 = vmul.f32 %v4490, 0.2
      %v4934 = vmul.f32 %v4494, 0.2
      %v4935 = vmul.f32 %v4496, 0.2
      %v4936 = vmul.f32 %v4498, 0.2
      %v4937 = vmul.f32 %v4500, 0.2
      %v4938 = vmul.f32 %v4504, 0.2
      %v4939 = vmul.f32 %v4506, 0.2
      %v4940 = vmul.f32 %v4508, 0.2
      %v4941 = vmul.f32 %v4510, 0.2
      %v4942 = vmul.f32 %v4514, 0.2
      %v4943 = vmul.f32 %v4516, 0.2
      %v4944 = vmul.f32 %v4518, 0.2
      %v4945 = vmul.f32 %v4520, 0.2
      %v4946 = vmul.f32 %v4524, 0.2
      %v4947 = vmul.f32 %v4526, 0.2
      %v4948 = vmul.f32 %v4528, 0.2
      %v4949 = vmul.f32 %v4530, 0.2
      %v4950 = vmul.f32 %v4534, 0.2
      %v4951 = vmul.f32 %v4536, 0.2
      %v4952 = vmul.f32 %v4538, 0.2
      %v4953 = vmul.f32 %v4540, 0.2
      %v4954 = vmul.f32 %v4544, 0.2
      %v4955 = vmul.f32 %v4546, 0.2
      %v4956 = vmul.f32 %v4548, 0.2
      %v4957 = vmul.f32 %v4550, 0.2
      %v4958 = vmul.f32 %v4554, 0.2
      %v4959 = vmul.f32 %v4556, 0.2
      %v4960 = vmul.f32 %v4558, 0.2
      %v4961 = vmul.f32 %v4560, 0.2
      %v4962 = vmul.f32 %v4564, 0.2
      %v4963 = vmul.f32 %v4566, 0.2
      %v4964 = vmul.f32 %v4568, 0.2
      %v4965 = vmul.f32 %v4570, 0.2
      %v4966 = vmul.f32 %v4574, 0.2
      %v4967 = vmul.f32 %v4576, 0.2
      %v4968 = vmul.f32 %v4578, 0.2
      %v4969 = vmul.f32 %v4580, 0.2
      %v4970 = vmul.f32 %v4584, 0.2
      %v4971 = vmul.f32 %v4586, 0.2
      %v4972 = vmul.f32 %v4588, 0.2
      %v4973 = vmul.f32 %v4590, 0.2
      %v4974 = vmul.f32 %v4594, 0.2
      %v4975 = vmul.f32 %v4596, 0.2
      %v4976 = vmul.f32 %v4598, 0.2
      %v4977 = vmul.f32 %v4600, 0.2
      %v4978 = vmul.f32 %v4604, 0.2
      %v4979 = vmul.f32 %v4606, 0.2
      %v4980 = vmul.f32 %v4608, 0.2
      %v4981 = vmul.f32 %v4610, 0.2
      %v4982 = vmul.f32 %v4614, 0.2
      %v4983 = vmul.f32 %v4616, 0.2
      %v4984 = vmul.f32 %v4618, 0.2
      %v4985 = vmul.f32 %v4620, 0.2
      %v4986 = vmul.f32 %v4624, 0.2
      %v4987 = vmul.f32 %v4626, 0.2
      %v4988 = vmul.f32 %v4628, 0.2
      %v4989 = vmul.f32 %v4630, 0.2
      %v4990 = vmul.f32 %v4634, 0.2
      %v4991 = vmul.f32 %v4636, 0.2
      %v4992 = vmul.f32 %v4638, 0.2
      %v4993 = vmul.f32 %v4640, 0.2
      %v4994 = vmul.f32 %v4644, 0.2
      %v4995 = vmul.f32 %v4646, 0.2
      %v4996 = vmul.f32 %v4648, 0.2
      %v4997 = vmul.f32 %v4650, 0.2
      %v4998 = vmul.f32 %v4654, 0.2
      %v4999 = vmul.f32 %v4656, 0.2
      %v5000 = vmul.f32 %v4658, 0.2
      %v5001 = vmul.f32 %v4660, 0.2
      %v5002 = vmul.f32 %v4664, 0.2
      %v5003 = vmul.f32 %v4666, 0.2
      %v5004 = vmul.f32 %v4668, 0.2
      %v5005 = vmul.f32 %v4670, 0.2
      %v5006 = vmul.f32 %v4674, 0.2
      %v5007 = vmul.f32 %v4676, 0.2
      %v5008 = vmul.f32 %v4678, 0.2
      %v5009 = vmul.f32 %v4680, 0.2
      %v5010 = vmul.f32 %v4684, 0.2
      %v5011 = vmul.f32 %v4686, 0.2
      %v5012 = vmul.f32 %v4688, 0.2
      %v5013 = vmul.f32 %v4690, 0.2
      %v5014 = vmul.f32 %v4694, 0.2
      %v5015 = vmul.f32 %v4696, 0.2
      %v5016 = vmul.f32 %v4698, 0.2
      %v5017 = vmul.f32 %v4700, 0.2
      %v5018 = vmul.f32 %v4704, 0.2
      %v5019 = vmul.f32 %v4706, 0.2
      %v5020 = vmul.f32 %v4708, 0.2
      %v5021 = vmul.f32 %v4710, 0.2
      %v5022 = vmul.f32 %v4714, 0.2
      %v5023 = vmul.f32 %v4716, 0.2
      %v5024 = vmul.f32 %v4718, 0.2
      %v5025 = vmul.f32 %v4720, 0.2
      %v5026 = vmul.f32 %v4724, 0.2
      %v5027 = vmul.f32 %v4726, 0.2
      %v5028 = vmul.f32 %v4728, 0.2
      %v5029 = vmul.f32 %v4730, 0.2
      %v5030 = vmul.f32 %v4734, 0.2
      %v5031 = vmul.f32 %v4736, 0.2
      %v5032 = vmul.f32 %v4738, 0.2
      %v5033 = vmul.f32 %v4740, 0.2
      %v5034 = vmul.f32 %v4744, 0.2
      %v5035 = vmul.f32 %v4746, 0.2
      %v5036 = vmul.f32 %v4748, 0.2
      %v5037 = vmul.f32 %v4750, 0.2
      %v5038 = vmul.f32 %v4754, 0.2
      %v5039 = vmul.f32 %v4756, 0.2
      %v5040 = vmul.f32 %v4758, 0.2
      %v5041 = vmul.f32 %v4760, 0.2
      %v5042 = vmul.f32 %v4764, 0.2
      %v5043 = vmul.f32 %v4766, 0.2
      %v5044 = vmul.f32 %v4768, 0.2
      %v5045 = vmul.f32 %v4770, 0.2
      %v5046 = vmul.f32 %v4774, 0.2
      %v5047 = vmul.f32 %v4776, 0.2
      %v5048 = vmul.f32 %v4778, 0.2
      %v5049 = vmul.f32 %v4780, 0.2
      %v5050 = vmul.f32 %v4784, 0.2
      %v5051 = vmul.f32 %v4786, 0.2
      %v5052 = vmul.f32 %v4788, 0.2
      %v5053 = vmul.f32 %v4790, 0.2
      %v5054 = vmul.f32 %v4794, 0.2
      %v5055 = vmul.f32 %v4796, 0.2
      %v5056 = vmul.f32 %v4798, 0.2
      %v5057 = vmul.f32 %v4800, 0.2
      %v5058 = vsel %vm4802, %v4484, %v4930
      %v5059 = vsel %vm4803, %v4486, %v4931
      %v5060 = vsel %vm4804, %v4488, %v4932
      %v5061 = vsel %vm4805, %v4490, %v4933
      %v5062 = vsel %vm4806, %v4494, %v4934
      %v5063 = vsel %vm4807, %v4496, %v4935
      %v5064 = vsel %vm4808, %v4498, %v4936
      %v5065 = vsel %vm4809, %v4500, %v4937
      %v5066 = vsel %vm4810, %v4504, %v4938
      %v5067 = vsel %vm4811, %v4506, %v4939
      %v5068 = vsel %vm4812, %v4508, %v4940
      %v5069 = vsel %vm4813, %v4510, %v4941
      %v5070 = vsel %vm4814, %v4514, %v4942
      %v5071 = vsel %vm4815, %v4516, %v4943
      %v5072 = vsel %vm4816, %v4518, %v4944
      %v5073 = vsel %vm4817, %v4520, %v4945
      %v5074 = vsel %vm4818, %v4524, %v4946
      %v5075 = vsel %vm4819, %v4526, %v4947
      %v5076 = vsel %vm4820, %v4528, %v4948
      %v5077 = vsel %vm4821, %v4530, %v4949
      %v5078 = vsel %vm4822, %v4534, %v4950
      %v5079 = vsel %vm4823, %v4536, %v4951
      %v5080 = vsel %vm4824, %v4538, %v4952
      %v5081 = vsel %vm4825, %v4540, %v4953
      %v5082 = vsel %vm4826, %v4544, %v4954
      %v5083 = vsel %vm4827, %v4546, %v4955
      %v5084 = vsel %vm4828, %v4548, %v4956
      %v5085 = vsel %vm4829, %v4550, %v4957
      %v5086 = vsel %vm4830, %v4554, %v4958
      %v5087 = vsel %vm4831, %v4556, %v4959
      %v5088 = vsel %vm4832, %v4558, %v4960
      %v5089 = vsel %vm4833, %v4560, %v4961
      %v5090 = vsel %vm4834, %v4564, %v4962
      %v5091 = vsel %vm4835, %v4566, %v4963
      %v5092 = vsel %vm4836, %v4568, %v4964
      %v5093 = vsel %vm4837, %v4570, %v4965
      %v5094 = vsel %vm4838, %v4574, %v4966
      %v5095 = vsel %vm4839, %v4576, %v4967
      %v5096 = vsel %vm4840, %v4578, %v4968
      %v5097 = vsel %vm4841, %v4580, %v4969
      %v5098 = vsel %vm4842, %v4584, %v4970
      %v5099 = vsel %vm4843, %v4586, %v4971
      %v5100 = vsel %vm4844, %v4588, %v4972
      %v5101 = vsel %vm4845, %v4590, %v4973
      %v5102 = vsel %vm4846, %v4594, %v4974
      %v5103 = vsel %vm4847, %v4596, %v4975
      %v5104 = vsel %vm4848, %v4598, %v4976
      %v5105 = vsel %vm4849, %v4600, %v4977
      %v5106 = vsel %vm4850, %v4604, %v4978
      %v5107 = vsel %vm4851, %v4606, %v4979
      %v5108 = vsel %vm4852, %v4608, %v4980
      %v5109 = vsel %vm4853, %v4610, %v4981
      %v5110 = vsel %vm4854, %v4614, %v4982
      %v5111 = vsel %vm4855, %v4616, %v4983
      %v5112 = vsel %vm4856, %v4618, %v4984
      %v5113 = vsel %vm4857, %v4620, %v4985
      %v5114 = vsel %vm4858, %v4624, %v4986
      %v5115 = vsel %vm4859, %v4626, %v4987
      %v5116 = vsel %vm4860, %v4628, %v4988
      %v5117 = vsel %vm4861, %v4630, %v4989
      %v5118 = vsel %vm4862, %v4634, %v4990
      %v5119 = vsel %vm4863, %v4636, %v4991
      %v5120 = vsel %vm4864, %v4638, %v4992
      %v5121 = vsel %vm4865, %v4640, %v4993
      %v5122 = vsel %vm4866, %v4644, %v4994
      %v5123 = vsel %vm4867, %v4646, %v4995
      %v5124 = vsel %vm4868, %v4648, %v4996
      %v5125 = vsel %vm4869, %v4650, %v4997
      %v5126 = vsel %vm4870, %v4654, %v4998
      %v5127 = vsel %vm4871, %v4656, %v4999
      %v5128 = vsel %vm4872, %v4658, %v5000
      %v5129 = vsel %vm4873, %v4660, %v5001
      %v5130 = vsel %vm4874, %v4664, %v5002
      %v5131 = vsel %vm4875, %v4666, %v5003
      %v5132 = vsel %vm4876, %v4668, %v5004
      %v5133 = vsel %vm4877, %v4670, %v5005
      %v5134 = vsel %vm4878, %v4674, %v5006
      %v5135 = vsel %vm4879, %v4676, %v5007
      %v5136 = vsel %vm4880, %v4678, %v5008
      %v5137 = vsel %vm4881, %v4680, %v5009
      %v5138 = vsel %vm4882, %v4684, %v5010
      %v5139 = vsel %vm4883, %v4686, %v5011
      %v5140 = vsel %vm4884, %v4688, %v5012
      %v5141 = vsel %vm4885, %v4690, %v5013
      %v5142 = vsel %vm4886, %v4694, %v5014
      %v5143 = vsel %vm4887, %v4696, %v5015
      %v5144 = vsel %vm4888, %v4698, %v5016
      %v5145 = vsel %vm4889, %v4700, %v5017
      %v5146 = vsel %vm4890, %v4704, %v5018
      %v5147 = vsel %vm4891, %v4706, %v5019
      %v5148 = vsel %vm4892, %v4708, %v5020
      %v5149 = vsel %vm4893, %v4710, %v5021
      %v5150 = vsel %vm4894, %v4714, %v5022
      %v5151 = vsel %vm4895, %v4716, %v5023
      %v5152 = vsel %vm4896, %v4718, %v5024
      %v5153 = vsel %vm4897, %v4720, %v5025
      %v5154 = vsel %vm4898, %v4724, %v5026
      %v5155 = vsel %vm4899, %v4726, %v5027
      %v5156 = vsel %vm4900, %v4728, %v5028
      %v5157 = vsel %vm4901, %v4730, %v5029
      %v5158 = vsel %vm4902, %v4734, %v5030
      %v5159 = vsel %vm4903, %v4736, %v5031
      %v5160 = vsel %vm4904, %v4738, %v5032
      %v5161 = vsel %vm4905, %v4740, %v5033
      %v5162 = vsel %vm4906, %v4744, %v5034
      %v5163 = vsel %vm4907, %v4746, %v5035
      %v5164 = vsel %vm4908, %v4748, %v5036
      %v5165 = vsel %vm4909, %v4750, %v5037
      %v5166 = vsel %vm4910, %v4754, %v5038
      %v5167 = vsel %vm4911, %v4756, %v5039
      %v5168 = vsel %vm4912, %v4758, %v5040
      %v5169 = vsel %vm4913, %v4760, %v5041
      %v5170 = vsel %vm4914, %v4764, %v5042
      %v5171 = vsel %vm4915, %v4766, %v5043
      %v5172 = vsel %vm4916, %v4768, %v5044
      %v5173 = vsel %vm4917, %v4770, %v5045
      %v5174 = vsel %vm4918, %v4774, %v5046
      %v5175 = vsel %vm4919, %v4776, %v5047
      %v5176 = vsel %vm4920, %v4778, %v5048
      %v5177 = vsel %vm4921, %v4780, %v5049
      %v5178 = vsel %vm4922, %v4784, %v5050
      %v5179 = vsel %vm4923, %v4786, %v5051
      %v5180 = vsel %vm4924, %v4788, %v5052
      %v5181 = vsel %vm4925, %v4790, %v5053
      %v5182 = vsel %vm4926, %v4794, %v5054
      %v5183 = vsel %vm4927, %v4796, %v5055
      %v5184 = vsel %vm4928, %v4798, %v5056
      %v5185 = vsel %vm4929, %v4800, %v5057
      %v5186 = vpack.c.bf16 %v5060, %v5058
      %v5187 = vpack.c.bf16 %v5061, %v5059
      %v5188 = vpack.c.bf16 %v5064, %v5062
      %v5189 = vpack.c.bf16 %v5065, %v5063
      %v5190 = vpack.c.bf16 %v5068, %v5066
      %v5191 = vpack.c.bf16 %v5069, %v5067
      %v5192 = vpack.c.bf16 %v5072, %v5070
      %v5193 = vpack.c.bf16 %v5073, %v5071
      %v5194 = vpack.c.bf16 %v5076, %v5074
      %v5195 = vpack.c.bf16 %v5077, %v5075
      %v5196 = vpack.c.bf16 %v5080, %v5078
      %v5197 = vpack.c.bf16 %v5081, %v5079
      %v5198 = vpack.c.bf16 %v5084, %v5082
      %v5199 = vpack.c.bf16 %v5085, %v5083
      %v5200 = vpack.c.bf16 %v5088, %v5086
      %v5201 = vpack.c.bf16 %v5089, %v5087
      %v5202 = vpack.c.bf16 %v5092, %v5090
      %v5203 = vpack.c.bf16 %v5093, %v5091
      %v5204 = vpack.c.bf16 %v5096, %v5094
      %v5205 = vpack.c.bf16 %v5097, %v5095
      %v5206 = vpack.c.bf16 %v5100, %v5098
      %v5207 = vpack.c.bf16 %v5101, %v5099
      %v5208 = vpack.c.bf16 %v5104, %v5102
      %v5209 = vpack.c.bf16 %v5105, %v5103
      %v5210 = vpack.c.bf16 %v5108, %v5106
      %v5211 = vpack.c.bf16 %v5109, %v5107
      %v5212 = vpack.c.bf16 %v5112, %v5110
      %v5213 = vpack.c.bf16 %v5113, %v5111
      %v5214 = vpack.c.bf16 %v5116, %v5114
      %v5215 = vpack.c.bf16 %v5117, %v5115
      %v5216 = vpack.c.bf16 %v5120, %v5118
      %v5217 = vpack.c.bf16 %v5121, %v5119
      %v5218 = vpack.c.bf16 %v5124, %v5122
      %v5219 = vpack.c.bf16 %v5125, %v5123
      %v5220 = vpack.c.bf16 %v5128, %v5126
      %v5221 = vpack.c.bf16 %v5129, %v5127
      %v5222 = vpack.c.bf16 %v5132, %v5130
      %v5223 = vpack.c.bf16 %v5133, %v5131
      %v5224 = vpack.c.bf16 %v5136, %v5134
      %v5225 = vpack.c.bf16 %v5137, %v5135
      %v5226 = vpack.c.bf16 %v5140, %v5138
      %v5227 = vpack.c.bf16 %v5141, %v5139
      %v5228 = vpack.c.bf16 %v5144, %v5142
      %v5229 = vpack.c.bf16 %v5145, %v5143
      %v5230 = vpack.c.bf16 %v5148, %v5146
      %v5231 = vpack.c.bf16 %v5149, %v5147
      %v5232 = vpack.c.bf16 %v5152, %v5150
      %v5233 = vpack.c.bf16 %v5153, %v5151
      %v5234 = vpack.c.bf16 %v5156, %v5154
      %v5235 = vpack.c.bf16 %v5157, %v5155
      %v5236 = vpack.c.bf16 %v5160, %v5158
      %v5237 = vpack.c.bf16 %v5161, %v5159
      %v5238 = vpack.c.bf16 %v5164, %v5162
      %v5239 = vpack.c.bf16 %v5165, %v5163
      %v5240 = vpack.c.bf16 %v5168, %v5166
      %v5241 = vpack.c.bf16 %v5169, %v5167
      %v5242 = vpack.c.bf16 %v5172, %v5170
      %v5243 = vpack.c.bf16 %v5173, %v5171
      %v5244 = vpack.c.bf16 %v5176, %v5174
      %v5245 = vpack.c.bf16 %v5177, %v5175
      %v5246 = vpack.c.bf16 %v5180, %v5178
      %v5247 = vpack.c.bf16 %v5181, %v5179
      %v5248 = vpack.c.bf16 %v5184, %v5182
      %v5249 = vpack.c.bf16 %v5185, %v5183
      %v5250 = vld [vmem:[%s3] sm:$0xff]
      %v5251 = vld [vmem:[%s3 + $0x8] sm:$0xff]
      %v5252 = vld [vmem:[%s3 + $0x10] sm:$0xff]
      %v5253 = vld [vmem:[%s3 + $0x18] sm:$0xff]
      %v5254 = vld [vmem:[%s3 + $0x20] sm:$0xff]
      %v5255 = vld [vmem:[%s3 + $0x28] sm:$0xff]
      %v5256 = vld [vmem:[%s3 + $0x30] sm:$0xff]
      %v5257 = vld [vmem:[%s3 + $0x38] sm:$0xff]
      %v5258 = vld [vmem:[%s3 + $0x40] sm:$0xff]
      %v5259 = vld [vmem:[%s3 + $0x48] sm:$0xff]
      %v5260 = vld [vmem:[%s3 + $0x50] sm:$0xff]
      %v5261 = vld [vmem:[%s3 + $0x58] sm:$0xff]
      %v5262 = vld [vmem:[%s3 + $0x60] sm:$0xff]
      %v5263 = vld [vmem:[%s3 + $0x68] sm:$0xff]
      %v5264 = vld [vmem:[%s3 + $0x70] sm:$0xff]
      %v5265 = vld [vmem:[%s3 + $0x78] sm:$0xff]
      %v5266 = vld [vmem:[%s3 + $0x80] sm:$0xff]
      %v5267 = vld [vmem:[%s3 + $0x88] sm:$0xff]
      %v5268 = vld [vmem:[%s3 + $0x90] sm:$0xff]
      %v5269 = vld [vmem:[%s3 + $0x98] sm:$0xff]
      %v5270 = vld [vmem:[%s3 + $0xa0] sm:$0xff]
      %v5271 = vld [vmem:[%s3 + $0xa8] sm:$0xff]
      %v5272 = vld [vmem:[%s3 + $0xb0] sm:$0xff]
      %v5273 = vld [vmem:[%s3 + $0xb8] sm:$0xff]
      %v5274 = vld [vmem:[%s3 + $0xc0] sm:$0xff]
      %v5275 = vld [vmem:[%s3 + $0xc8] sm:$0xff]
      %v5276 = vld [vmem:[%s3 + $0xd0] sm:$0xff]
      %v5277 = vld [vmem:[%s3 + $0xd8] sm:$0xff]
      %v5278 = vld [vmem:[%s3 + $0xe0] sm:$0xff]
      %v5279 = vld [vmem:[%s3 + $0xe8] sm:$0xff]
      %v5280 = vld [vmem:[%s3 + $0xf0] sm:$0xff]
      %v5281 = vld [vmem:[%s3 + $0xf8] sm:$0xff]
      %v5282 = vld [vmem:[%s3 + $0x100] sm:$0xff]
      %v5283 = vld [vmem:[%s3 + $0x108] sm:$0xff]
      %v5284 = vld [vmem:[%s3 + $0x110] sm:$0xff]
      %v5285 = vld [vmem:[%s3 + $0x118] sm:$0xff]
      %v5286 = vld [vmem:[%s3 + $0x120] sm:$0xff]
      %v5287 = vld [vmem:[%s3 + $0x128] sm:$0xff]
      %v5288 = vld [vmem:[%s3 + $0x130] sm:$0xff]
      %v5289 = vld [vmem:[%s3 + $0x138] sm:$0xff]
      %v5290 = vld [vmem:[%s3 + $0x140] sm:$0xff]
      %v5291 = vld [vmem:[%s3 + $0x148] sm:$0xff]
      %v5292 = vld [vmem:[%s3 + $0x150] sm:$0xff]
      %v5293 = vld [vmem:[%s3 + $0x158] sm:$0xff]
      %v5294 = vld [vmem:[%s3 + $0x160] sm:$0xff]
      %v5295 = vld [vmem:[%s3 + $0x168] sm:$0xff]
      %v5296 = vld [vmem:[%s3 + $0x170] sm:$0xff]
      %v5297 = vld [vmem:[%s3 + $0x178] sm:$0xff]
      %v5298 = vld [vmem:[%s3 + $0x180] sm:$0xff]
      %v5299 = vld [vmem:[%s3 + $0x188] sm:$0xff]
      %v5300 = vld [vmem:[%s3 + $0x190] sm:$0xff]
      %v5301 = vld [vmem:[%s3 + $0x198] sm:$0xff]
      %v5302 = vld [vmem:[%s3 + $0x1a0] sm:$0xff]
      %v5303 = vld [vmem:[%s3 + $0x1a8] sm:$0xff]
      %v5304 = vld [vmem:[%s3 + $0x1b0] sm:$0xff]
      %v5305 = vld [vmem:[%s3 + $0x1b8] sm:$0xff]
      %v5306 = vld [vmem:[%s3 + $0x1c0] sm:$0xff]
      %v5307 = vld [vmem:[%s3 + $0x1c8] sm:$0xff]
      %v5308 = vld [vmem:[%s3 + $0x1d0] sm:$0xff]
      %v5309 = vld [vmem:[%s3 + $0x1d8] sm:$0xff]
      %v5310 = vld [vmem:[%s3 + $0x1e0] sm:$0xff]
      %v5311 = vld [vmem:[%s3 + $0x1e8] sm:$0xff]
      %v5312 = vld [vmem:[%s3 + $0x1f0] sm:$0xff]
      %v5313 = vld [vmem:[%s3 + $0x1f8] sm:$0xff]
      %v5314 = vld [vmem:[%s4] sm:$0xff]
      %v5315 = vld [vmem:[%s4 + $0x8] sm:$0xff]
      %v5316 = vld [vmem:[%s4 + $0x10] sm:$0xff]
      %v5317 = vld [vmem:[%s4 + $0x18] sm:$0xff]
      %v5318 = vld [vmem:[%s4 + $0x20] sm:$0xff]
      %v5319 = vld [vmem:[%s4 + $0x28] sm:$0xff]
      %v5320 = vld [vmem:[%s4 + $0x30] sm:$0xff]
      %v5321 = vld [vmem:[%s4 + $0x38] sm:$0xff]
      %v5322 = vld [vmem:[%s4 + $0x40] sm:$0xff]
      %v5323 = vld [vmem:[%s4 + $0x48] sm:$0xff]
      %v5324 = vld [vmem:[%s4 + $0x50] sm:$0xff]
      %v5325 = vld [vmem:[%s4 + $0x58] sm:$0xff]
      %v5326 = vld [vmem:[%s4 + $0x60] sm:$0xff]
      %v5327 = vld [vmem:[%s4 + $0x68] sm:$0xff]
      %v5328 = vld [vmem:[%s4 + $0x70] sm:$0xff]
      %v5329 = vld [vmem:[%s4 + $0x78] sm:$0xff]
      %v5330 = vld [vmem:[%s4 + $0x80] sm:$0xff]
      %v5331 = vld [vmem:[%s4 + $0x88] sm:$0xff]
      %v5332 = vld [vmem:[%s4 + $0x90] sm:$0xff]
      %v5333 = vld [vmem:[%s4 + $0x98] sm:$0xff]
      %v5334 = vld [vmem:[%s4 + $0xa0] sm:$0xff]
      %v5335 = vld [vmem:[%s4 + $0xa8] sm:$0xff]
      %v5336 = vld [vmem:[%s4 + $0xb0] sm:$0xff]
      %v5337 = vld [vmem:[%s4 + $0xb8] sm:$0xff]
      %v5338 = vld [vmem:[%s4 + $0xc0] sm:$0xff]
      %v5339 = vld [vmem:[%s4 + $0xc8] sm:$0xff]
      %v5340 = vld [vmem:[%s4 + $0xd0] sm:$0xff]
      %v5341 = vld [vmem:[%s4 + $0xd8] sm:$0xff]
      %v5342 = vld [vmem:[%s4 + $0xe0] sm:$0xff]
      %v5343 = vld [vmem:[%s4 + $0xe8] sm:$0xff]
      %v5344 = vld [vmem:[%s4 + $0xf0] sm:$0xff]
      %v5345 = vld [vmem:[%s4 + $0xf8] sm:$0xff]
      %5347 = vset.pattern.permute.xlu0 0
      %5348 = vperm.xlu0 %5347, %v5314
      %v5349 = vpop.permute.xlu0 %5348
      %5352 = vset.pattern.permute.xlu0 0
      %5353 = vperm.xlu0 %5352, %v5315
      %v5354 = vpop.permute.xlu0 %5353
      %5357 = vset.pattern.permute.xlu0 0
      %5358 = vperm.xlu0 %5357, %v5316
      %v5359 = vpop.permute.xlu0 %5358
      %5362 = vset.pattern.permute.xlu0 0
      %5363 = vperm.xlu0 %5362, %v5317
      %v5364 = vpop.permute.xlu0 %5363
      %5367 = vset.pattern.permute.xlu0 0
      %5368 = vperm.xlu0 %5367, %v5318
      %v5369 = vpop.permute.xlu0 %5368
      %5372 = vset.pattern.permute.xlu0 0
      %5373 = vperm.xlu0 %5372, %v5319
      %v5374 = vpop.permute.xlu0 %5373
      %5377 = vset.pattern.permute.xlu0 0
      %5378 = vperm.xlu0 %5377, %v5320
      %v5379 = vpop.permute.xlu0 %5378
      %5382 = vset.pattern.permute.xlu0 0
      %5383 = vperm.xlu0 %5382, %v5321
      %v5384 = vpop.permute.xlu0 %5383
      %5387 = vset.pattern.permute.xlu0 0
      %5388 = vperm.xlu0 %5387, %v5322
      %v5389 = vpop.permute.xlu0 %5388
      %5392 = vset.pattern.permute.xlu0 0
      %5393 = vperm.xlu0 %5392, %v5323
      %v5394 = vpop.permute.xlu0 %5393
      %5397 = vset.pattern.permute.xlu0 0
      %5398 = vperm.xlu0 %5397, %v5324
      %v5399 = vpop.permute.xlu0 %5398
      %5402 = vset.pattern.permute.xlu0 0
      %5403 = vperm.xlu0 %5402, %v5325
      %v5404 = vpop.permute.xlu0 %5403
      %5407 = vset.pattern.permute.xlu0 0
      %5408 = vperm.xlu0 %5407, %v5326
      %v5409 = vpop.permute.xlu0 %5408
      %5412 = vset.pattern.permute.xlu0 0
      %5413 = vperm.xlu0 %5412, %v5327
      %v5414 = vpop.permute.xlu0 %5413
      %5417 = vset.pattern.permute.xlu0 0
      %5418 = vperm.xlu0 %5417, %v5328
      %v5419 = vpop.permute.xlu0 %5418
      %5422 = vset.pattern.permute.xlu0 0
      %5423 = vperm.xlu0 %5422, %v5329
      %v5424 = vpop.permute.xlu0 %5423
      %5427 = vset.pattern.permute.xlu0 0
      %5428 = vperm.xlu0 %5427, %v5330
      %v5429 = vpop.permute.xlu0 %5428
      %5432 = vset.pattern.permute.xlu0 0
      %5433 = vperm.xlu0 %5432, %v5331
      %v5434 = vpop.permute.xlu0 %5433
      %5437 = vset.pattern.permute.xlu0 0
      %5438 = vperm.xlu0 %5437, %v5332
      %v5439 = vpop.permute.xlu0 %5438
      %5442 = vset.pattern.permute.xlu0 0
      %5443 = vperm.xlu0 %5442, %v5333
      %v5444 = vpop.permute.xlu0 %5443
      %5447 = vset.pattern.permute.xlu0 0
      %5448 = vperm.xlu0 %5447, %v5334
      %v5449 = vpop.permute.xlu0 %5448
      %5452 = vset.pattern.permute.xlu0 0
      %5453 = vperm.xlu0 %5452, %v5335
      %v5454 = vpop.permute.xlu0 %5453
      %5457 = vset.pattern.permute.xlu0 0
      %5458 = vperm.xlu0 %5457, %v5336
      %v5459 = vpop.permute.xlu0 %5458
      %5462 = vset.pattern.permute.xlu0 0
      %5463 = vperm.xlu0 %5462, %v5337
      %v5464 = vpop.permute.xlu0 %5463
      %5467 = vset.pattern.permute.xlu0 0
      %5468 = vperm.xlu0 %5467, %v5338
      %v5469 = vpop.permute.xlu0 %5468
      %5472 = vset.pattern.permute.xlu0 0
      %5473 = vperm.xlu0 %5472, %v5339
      %v5474 = vpop.permute.xlu0 %5473
      %5477 = vset.pattern.permute.xlu0 0
      %5478 = vperm.xlu0 %5477, %v5340
      %v5479 = vpop.permute.xlu0 %5478
      %5482 = vset.pattern.permute.xlu0 0
      %5483 = vperm.xlu0 %5482, %v5341
      %v5484 = vpop.permute.xlu0 %5483
      %5487 = vset.pattern.permute.xlu0 0
      %5488 = vperm.xlu0 %5487, %v5342
      %v5489 = vpop.permute.xlu0 %5488
      %5492 = vset.pattern.permute.xlu0 0
      %5493 = vperm.xlu0 %5492, %v5343
      %v5494 = vpop.permute.xlu0 %5493
      %5497 = vset.pattern.permute.xlu0 0
      %5498 = vperm.xlu0 %5497, %v5344
      %v5499 = vpop.permute.xlu0 %5498
      %5502 = vset.pattern.permute.xlu0 0
      %5503 = vperm.xlu0 %5502, %v5345
      %v5504 = vpop.permute.xlu0 %5503
      %v5570 = vunpack.c.l.b16 %v5250
      %v5571 = vunpack.c.h.b16 %v5250
      %v5572 = vunpack.c.l.b16 %v5251
      %v5573 = vunpack.c.h.b16 %v5251
      %v5574 = vunpack.c.l.b16 %v5252
      %v5575 = vunpack.c.h.b16 %v5252
      %v5576 = vunpack.c.l.b16 %v5253
      %v5577 = vunpack.c.h.b16 %v5253
      %v5578 = vunpack.c.l.b16 %v5254
      %v5579 = vunpack.c.h.b16 %v5254
      %v5580 = vunpack.c.l.b16 %v5255
      %v5581 = vunpack.c.h.b16 %v5255
      %v5582 = vunpack.c.l.b16 %v5256
      %v5583 = vunpack.c.h.b16 %v5256
      %v5584 = vunpack.c.l.b16 %v5257
      %v5585 = vunpack.c.h.b16 %v5257
      %v5586 = vunpack.c.l.b16 %v5258
      %v5587 = vunpack.c.h.b16 %v5258
      %v5588 = vunpack.c.l.b16 %v5259
      %v5589 = vunpack.c.h.b16 %v5259
      %v5590 = vunpack.c.l.b16 %v5260
      %v5591 = vunpack.c.h.b16 %v5260
      %v5592 = vunpack.c.l.b16 %v5261
      %v5593 = vunpack.c.h.b16 %v5261
      %v5594 = vunpack.c.l.b16 %v5262
      %v5595 = vunpack.c.h.b16 %v5262
      %v5596 = vunpack.c.l.b16 %v5263
      %v5597 = vunpack.c.h.b16 %v5263
      %v5598 = vunpack.c.l.b16 %v5264
      %v5599 = vunpack.c.h.b16 %v5264
      %v5600 = vunpack.c.l.b16 %v5265
      %v5601 = vunpack.c.h.b16 %v5265
      %v5602 = vunpack.c.l.b16 %v5266
      %v5603 = vunpack.c.h.b16 %v5266
      %v5604 = vunpack.c.l.b16 %v5267
      %v5605 = vunpack.c.h.b16 %v5267
      %v5606 = vunpack.c.l.b16 %v5268
      %v5607 = vunpack.c.h.b16 %v5268
      %v5608 = vunpack.c.l.b16 %v5269
      %v5609 = vunpack.c.h.b16 %v5269
      %v5610 = vunpack.c.l.b16 %v5270
      %v5611 = vunpack.c.h.b16 %v5270
      %v5612 = vunpack.c.l.b16 %v5271
      %v5613 = vunpack.c.h.b16 %v5271
      %v5614 = vunpack.c.l.b16 %v5272
      %v5615 = vunpack.c.h.b16 %v5272
      %v5616 = vunpack.c.l.b16 %v5273
      %v5617 = vunpack.c.h.b16 %v5273
      %v5618 = vunpack.c.l.b16 %v5274
      %v5619 = vunpack.c.h.b16 %v5274
      %v5620 = vunpack.c.l.b16 %v5275
      %v5621 = vunpack.c.h.b16 %v5275
      %v5622 = vunpack.c.l.b16 %v5276
      %v5623 = vunpack.c.h.b16 %v5276
      %v5624 = vunpack.c.l.b16 %v5277
      %v5625 = vunpack.c.h.b16 %v5277
      %v5626 = vunpack.c.l.b16 %v5278
      %v5627 = vunpack.c.h.b16 %v5278
      %v5628 = vunpack.c.l.b16 %v5279
      %v5629 = vunpack.c.h.b16 %v5279
      %v5630 = vunpack.c.l.b16 %v5280
      %v5631 = vunpack.c.h.b16 %v5280
      %v5632 = vunpack.c.l.b16 %v5281
      %v5633 = vunpack.c.h.b16 %v5281
      %v5634 = vunpack.c.l.b16 %v5282
      %v5635 = vunpack.c.h.b16 %v5282
      %v5636 = vunpack.c.l.b16 %v5283
      %v5637 = vunpack.c.h.b16 %v5283
      %v5638 = vunpack.c.l.b16 %v5284
      %v5639 = vunpack.c.h.b16 %v5284
      %v5640 = vunpack.c.l.b16 %v5285
      %v5641 = vunpack.c.h.b16 %v5285
      %v5642 = vunpack.c.l.b16 %v5286
      %v5643 = vunpack.c.h.b16 %v5286
      %v5644 = vunpack.c.l.b16 %v5287
      %v5645 = vunpack.c.h.b16 %v5287
      %v5646 = vunpack.c.l.b16 %v5288
      %v5647 = vunpack.c.h.b16 %v5288
      %v5648 = vunpack.c.l.b16 %v5289
      %v5649 = vunpack.c.h.b16 %v5289
      %v5650 = vunpack.c.l.b16 %v5290
      %v5651 = vunpack.c.h.b16 %v5290
      %v5652 = vunpack.c.l.b16 %v5291
      %v5653 = vunpack.c.h.b16 %v5291
      %v5654 = vunpack.c.l.b16 %v5292
      %v5655 = vunpack.c.h.b16 %v5292
      %v5656 = vunpack.c.l.b16 %v5293
      %v5657 = vunpack.c.h.b16 %v5293
      %v5658 = vunpack.c.l.b16 %v5294
      %v5659 = vunpack.c.h.b16 %v5294
      %v5660 = vunpack.c.l.b16 %v5295
      %v5661 = vunpack.c.h.b16 %v5295
      %v5662 = vunpack.c.l.b16 %v5296
      %v5663 = vunpack.c.h.b16 %v5296
      %v5664 = vunpack.c.l.b16 %v5297
      %v5665 = vunpack.c.h.b16 %v5297
      %v5666 = vunpack.c.l.b16 %v5298
      %v5667 = vunpack.c.h.b16 %v5298
      %v5668 = vunpack.c.l.b16 %v5299
      %v5669 = vunpack.c.h.b16 %v5299
      %v5670 = vunpack.c.l.b16 %v5300
      %v5671 = vunpack.c.h.b16 %v5300
      %v5672 = vunpack.c.l.b16 %v5301
      %v5673 = vunpack.c.h.b16 %v5301
      %v5674 = vunpack.c.l.b16 %v5302
      %v5675 = vunpack.c.h.b16 %v5302
      %v5676 = vunpack.c.l.b16 %v5303
      %v5677 = vunpack.c.h.b16 %v5303
      %v5678 = vunpack.c.l.b16 %v5304
      %v5679 = vunpack.c.h.b16 %v5304
      %v5680 = vunpack.c.l.b16 %v5305
      %v5681 = vunpack.c.h.b16 %v5305
      %v5682 = vunpack.c.l.b16 %v5306
      %v5683 = vunpack.c.h.b16 %v5306
      %v5684 = vunpack.c.l.b16 %v5307
      %v5685 = vunpack.c.h.b16 %v5307
      %v5686 = vunpack.c.l.b16 %v5308
      %v5687 = vunpack.c.h.b16 %v5308
      %v5688 = vunpack.c.l.b16 %v5309
      %v5689 = vunpack.c.h.b16 %v5309
      %v5690 = vunpack.c.l.b16 %v5310
      %v5691 = vunpack.c.h.b16 %v5310
      %v5692 = vunpack.c.l.b16 %v5311
      %v5693 = vunpack.c.h.b16 %v5311
      %v5694 = vunpack.c.l.b16 %v5312
      %v5695 = vunpack.c.h.b16 %v5312
      %v5696 = vunpack.c.l.b16 %v5313
      %v5697 = vunpack.c.h.b16 %v5313
      %v5698 = vpack.c.b16 %v5574, %v5570
      %v5699 = vpack.c.b16 %v5575, %v5571
      %v5700 = vpack.c.b16 %v5576, %v5572
      %v5701 = vpack.c.b16 %v5577, %v5573
      %v5702 = vpack.c.b16 %v5582, %v5578
      %v5703 = vpack.c.b16 %v5583, %v5579
      %v5704 = vpack.c.b16 %v5584, %v5580
      %v5705 = vpack.c.b16 %v5585, %v5581
      %v5706 = vpack.c.b16 %v5590, %v5586
      %v5707 = vpack.c.b16 %v5591, %v5587
      %v5708 = vpack.c.b16 %v5592, %v5588
      %v5709 = vpack.c.b16 %v5593, %v5589
      %v5710 = vpack.c.b16 %v5598, %v5594
      %v5711 = vpack.c.b16 %v5599, %v5595
      %v5712 = vpack.c.b16 %v5600, %v5596
      %v5713 = vpack.c.b16 %v5601, %v5597
      %v5714 = vpack.c.b16 %v5606, %v5602
      %v5715 = vpack.c.b16 %v5607, %v5603
      %v5716 = vpack.c.b16 %v5608, %v5604
      %v5717 = vpack.c.b16 %v5609, %v5605
      %v5718 = vpack.c.b16 %v5614, %v5610
      %v5719 = vpack.c.b16 %v5615, %v5611
      %v5720 = vpack.c.b16 %v5616, %v5612
      %v5721 = vpack.c.b16 %v5617, %v5613
      %v5722 = vpack.c.b16 %v5622, %v5618
      %v5723 = vpack.c.b16 %v5623, %v5619
      %v5724 = vpack.c.b16 %v5624, %v5620
      %v5725 = vpack.c.b16 %v5625, %v5621
      %v5726 = vpack.c.b16 %v5630, %v5626
      %v5727 = vpack.c.b16 %v5631, %v5627
      %v5728 = vpack.c.b16 %v5632, %v5628
      %v5729 = vpack.c.b16 %v5633, %v5629
      %v5730 = vpack.c.b16 %v5638, %v5634
      %v5731 = vpack.c.b16 %v5639, %v5635
      %v5732 = vpack.c.b16 %v5640, %v5636
      %v5733 = vpack.c.b16 %v5641, %v5637
      %v5734 = vpack.c.b16 %v5646, %v5642
      %v5735 = vpack.c.b16 %v5647, %v5643
      %v5736 = vpack.c.b16 %v5648, %v5644
      %v5737 = vpack.c.b16 %v5649, %v5645
      %v5738 = vpack.c.b16 %v5654, %v5650
      %v5739 = vpack.c.b16 %v5655, %v5651
      %v5740 = vpack.c.b16 %v5656, %v5652
      %v5741 = vpack.c.b16 %v5657, %v5653
      %v5742 = vpack.c.b16 %v5662, %v5658
      %v5743 = vpack.c.b16 %v5663, %v5659
      %v5744 = vpack.c.b16 %v5664, %v5660
      %v5745 = vpack.c.b16 %v5665, %v5661
      %v5746 = vpack.c.b16 %v5670, %v5666
      %v5747 = vpack.c.b16 %v5671, %v5667
      %v5748 = vpack.c.b16 %v5672, %v5668
      %v5749 = vpack.c.b16 %v5673, %v5669
      %v5750 = vpack.c.b16 %v5678, %v5674
      %v5751 = vpack.c.b16 %v5679, %v5675
      %v5752 = vpack.c.b16 %v5680, %v5676
      %v5753 = vpack.c.b16 %v5681, %v5677
      %v5754 = vpack.c.b16 %v5686, %v5682
      %v5755 = vpack.c.b16 %v5687, %v5683
      %v5756 = vpack.c.b16 %v5688, %v5684
      %v5757 = vpack.c.b16 %v5689, %v5685
      %v5758 = vpack.c.b16 %v5694, %v5690
      %v5759 = vpack.c.b16 %v5695, %v5691
      %v5760 = vpack.c.b16 %v5696, %v5692
      %v5761 = vpack.c.b16 %v5697, %v5693
      %5826 = vmatprep.subr.bf16.mxu0 %v5201
      %5827 = vmatpush1.bf16.msra.mxu0 %v5200
      %5828 = vmatprep.subr.bf16.mxu0 %v5199
      %5829 = vmatpush1.bf16.msra.mxu0 %v5198
      %5830 = vmatprep.subr.bf16.mxu0 %v5197
      %5831 = vmatpush1.bf16.msra.mxu0 %v5196
      %5832 = vmatprep.subr.bf16.mxu0 %v5195
      %5833 = vmatpush1.bf16.msra.mxu0 %v5194
      %5834 = vmatprep.subr.bf16.mxu0 %v5193
      %5835 = vmatpush1.bf16.msra.mxu0 %v5192
      %5836 = vmatprep.subr.bf16.mxu0 %v5191
      %5837 = vmatpush1.bf16.msra.mxu0 %v5190
      %5838 = vmatprep.subr.bf16.mxu0 %v5189
      %5839 = vmatpush1.bf16.msra.mxu0 %v5188
      %5840 = vmatprep.subr.bf16.mxu0 %v5187
      %5841 = vmatpush1.bf16.msra.mxu0 %v5186
      %5842 = vmatprep.subr.bf16.mxu0 %v5217
      %5843 = vmatpush2.bf16.msra.mxu0 %v5216
      %5844 = vmatprep.subr.bf16.mxu0 %v5215
      %5845 = vmatpush2.bf16.msra.mxu0 %v5214
      %5846 = vmatprep.subr.bf16.mxu0 %v5213
      %5847 = vmatpush2.bf16.msra.mxu0 %v5212
      %5848 = vmatprep.subr.bf16.mxu0 %v5211
      %5849 = vmatpush2.bf16.msra.mxu0 %v5210
      %5850 = vmatprep.subr.bf16.mxu0 %v5209
      %5851 = vmatpush2.bf16.msra.mxu0 %v5208
      %5852 = vmatprep.subr.bf16.mxu0 %v5207
      %5853 = vmatpush2.bf16.msra.mxu0 %v5206
      %5854 = vmatprep.subr.bf16.mxu0 %v5205
      %5855 = vmatpush2.bf16.msra.mxu0 %v5204
      %5856 = vmatprep.subr.bf16.mxu0 %v5203
      %5857 = vmatpush2.bf16.msra.mxu0 %v5202
      %5858 = vmatprep.mubr.bf16.mxu0 %v5699
      %5859 = vmatmul.mubr.bf16.gmra.mxu0 %v5698
      %v5860 = vpop.f32.mrf.mxu0
      %v5861 = vadd.f32 %v5349, %v5860
      %v5862 = vpop.f32.mrf.mxu0
      %v5863 = vadd.f32 %v5349, %v5862
      %v5864 = vpop.f32.mrf.mxu0
      %v5865 = vadd.f32 %v5354, %v5864
      %v5866 = vpop.f32.mrf.mxu0
      %v5867 = vadd.f32 %v5354, %v5866
      %5868 = vmatprep.mubr.bf16.mxu0 %v5703
      %5869 = vmatmul.mubr.bf16.gmra.mxu0 %v5702
      %v5870 = vpop.f32.mrf.mxu0
      %v5871 = vadd.f32 %v5359, %v5870
      %v5872 = vpop.f32.mrf.mxu0
      %v5873 = vadd.f32 %v5359, %v5872
      %v5874 = vpop.f32.mrf.mxu0
      %v5875 = vadd.f32 %v5364, %v5874
      %v5876 = vpop.f32.mrf.mxu0
      %v5877 = vadd.f32 %v5364, %v5876
      %5878 = vmatprep.mubr.bf16.mxu0 %v5707
      %5879 = vmatmul.mubr.bf16.gmra.mxu0 %v5706
      %v5880 = vpop.f32.mrf.mxu0
      %v5881 = vadd.f32 %v5369, %v5880
      %v5882 = vpop.f32.mrf.mxu0
      %v5883 = vadd.f32 %v5369, %v5882
      %v5884 = vpop.f32.mrf.mxu0
      %v5885 = vadd.f32 %v5374, %v5884
      %v5886 = vpop.f32.mrf.mxu0
      %v5887 = vadd.f32 %v5374, %v5886
      %5888 = vmatprep.mubr.bf16.mxu0 %v5711
      %5889 = vmatmul.mubr.bf16.gmra.mxu0 %v5710
      %v5890 = vpop.f32.mrf.mxu0
      %v5891 = vadd.f32 %v5379, %v5890
      %v5892 = vpop.f32.mrf.mxu0
      %v5893 = vadd.f32 %v5379, %v5892
      %v5894 = vpop.f32.mrf.mxu0
      %v5895 = vadd.f32 %v5384, %v5894
      %v5896 = vpop.f32.mrf.mxu0
      %v5897 = vadd.f32 %v5384, %v5896
      %5898 = vmatprep.mubr.bf16.mxu0 %v5715
      %5899 = vmatmul.mubr.bf16.gmra.mxu0 %v5714
      %v5900 = vpop.f32.mrf.mxu0
      %v5901 = vadd.f32 %v5389, %v5900
      %v5902 = vpop.f32.mrf.mxu0
      %v5903 = vadd.f32 %v5389, %v5902
      %v5904 = vpop.f32.mrf.mxu0
      %v5905 = vadd.f32 %v5394, %v5904
      %v5906 = vpop.f32.mrf.mxu0
      %v5907 = vadd.f32 %v5394, %v5906
      %5908 = vmatprep.mubr.bf16.mxu0 %v5719
      %5909 = vmatmul.mubr.bf16.gmra.mxu0 %v5718
      %v5910 = vpop.f32.mrf.mxu0
      %v5911 = vadd.f32 %v5399, %v5910
      %v5912 = vpop.f32.mrf.mxu0
      %v5913 = vadd.f32 %v5399, %v5912
      %v5914 = vpop.f32.mrf.mxu0
      %v5915 = vadd.f32 %v5404, %v5914
      %v5916 = vpop.f32.mrf.mxu0
      %v5917 = vadd.f32 %v5404, %v5916
      %5918 = vmatprep.mubr.bf16.mxu0 %v5723
      %5919 = vmatmul.mubr.bf16.gmra.mxu0 %v5722
      %v5920 = vpop.f32.mrf.mxu0
      %v5921 = vadd.f32 %v5409, %v5920
      %v5922 = vpop.f32.mrf.mxu0
      %v5923 = vadd.f32 %v5409, %v5922
      %v5924 = vpop.f32.mrf.mxu0
      %v5925 = vadd.f32 %v5414, %v5924
      %v5926 = vpop.f32.mrf.mxu0
      %v5927 = vadd.f32 %v5414, %v5926
      %5928 = vmatprep.mubr.bf16.mxu0 %v5727
      %5929 = vmatmul.mubr.bf16.gmra.mxu0 %v5726
      %v5930 = vpop.f32.mrf.mxu0
      %v5931 = vadd.f32 %v5419, %v5930
      %v5932 = vpop.f32.mrf.mxu0
      %v5933 = vadd.f32 %v5419, %v5932
      %v5934 = vpop.f32.mrf.mxu0
      %v5935 = vadd.f32 %v5424, %v5934
      %v5936 = vpop.f32.mrf.mxu0
      %v5937 = vadd.f32 %v5424, %v5936
      %5938 = vmatprep.mubr.bf16.mxu0 %v5731
      %5939 = vmatmul.mubr.bf16.gmra.mxu0 %v5730
      %v5940 = vpop.f32.mrf.mxu0
      %v5941 = vadd.f32 %v5429, %v5940
      %v5942 = vpop.f32.mrf.mxu0
      %v5943 = vadd.f32 %v5429, %v5942
      %v5944 = vpop.f32.mrf.mxu0
      %v5945 = vadd.f32 %v5434, %v5944
      %v5946 = vpop.f32.mrf.mxu0
      %v5947 = vadd.f32 %v5434, %v5946
      %5948 = vmatprep.mubr.bf16.mxu0 %v5735
      %5949 = vmatmul.mubr.bf16.gmra.mxu0 %v5734
      %v5950 = vpop.f32.mrf.mxu0
      %v5951 = vadd.f32 %v5439, %v5950
      %v5952 = vpop.f32.mrf.mxu0
      %v5953 = vadd.f32 %v5439, %v5952
      %v5954 = vpop.f32.mrf.mxu0
      %v5955 = vadd.f32 %v5444, %v5954
      %v5956 = vpop.f32.mrf.mxu0
      %v5957 = vadd.f32 %v5444, %v5956
      %5958 = vmatprep.mubr.bf16.mxu0 %v5739
      %5959 = vmatmul.mubr.bf16.gmra.mxu0 %v5738
      %v5960 = vpop.f32.mrf.mxu0
      %v5961 = vadd.f32 %v5449, %v5960
      %v5962 = vpop.f32.mrf.mxu0
      %v5963 = vadd.f32 %v5449, %v5962
      %v5964 = vpop.f32.mrf.mxu0
      %v5965 = vadd.f32 %v5454, %v5964
      %v5966 = vpop.f32.mrf.mxu0
      %v5967 = vadd.f32 %v5454, %v5966
      %5968 = vmatprep.mubr.bf16.mxu0 %v5743
      %5969 = vmatmul.mubr.bf16.gmra.mxu0 %v5742
      %v5970 = vpop.f32.mrf.mxu0
      %v5971 = vadd.f32 %v5459, %v5970
      %v5972 = vpop.f32.mrf.mxu0
      %v5973 = vadd.f32 %v5459, %v5972
      %v5974 = vpop.f32.mrf.mxu0
      %v5975 = vadd.f32 %v5464, %v5974
      %v5976 = vpop.f32.mrf.mxu0
      %v5977 = vadd.f32 %v5464, %v5976
      %5978 = vmatprep.mubr.bf16.mxu0 %v5747
      %5979 = vmatmul.mubr.bf16.gmra.mxu0 %v5746
      %v5980 = vpop.f32.mrf.mxu0
      %v5981 = vadd.f32 %v5469, %v5980
      %v5982 = vpop.f32.mrf.mxu0
      %v5983 = vadd.f32 %v5469, %v5982
      %v5984 = vpop.f32.mrf.mxu0
      %v5985 = vadd.f32 %v5474, %v5984
      %v5986 = vpop.f32.mrf.mxu0
      %v5987 = vadd.f32 %v5474, %v5986
      %5988 = vmatprep.mubr.bf16.mxu0 %v5751
      %5989 = vmatmul.mubr.bf16.gmra.mxu0 %v5750
      %v5990 = vpop.f32.mrf.mxu0
      %v5991 = vadd.f32 %v5479, %v5990
      %v5992 = vpop.f32.mrf.mxu0
      %v5993 = vadd.f32 %v5479, %v5992
      %v5994 = vpop.f32.mrf.mxu0
      %v5995 = vadd.f32 %v5484, %v5994
      %v5996 = vpop.f32.mrf.mxu0
      %v5997 = vadd.f32 %v5484, %v5996
      %5998 = vmatprep.mubr.bf16.mxu0 %v5755
      %5999 = vmatmul.mubr.bf16.gmra.mxu0 %v5754
      %v6000 = vpop.f32.mrf.mxu0
      %v6001 = vadd.f32 %v5489, %v6000
      %v6002 = vpop.f32.mrf.mxu0
      %v6003 = vadd.f32 %v5489, %v6002
      %v6004 = vpop.f32.mrf.mxu0
      %v6005 = vadd.f32 %v5494, %v6004
      %v6006 = vpop.f32.mrf.mxu0
      %v6007 = vadd.f32 %v5494, %v6006
      %6008 = vmatprep.mubr.bf16.mxu0 %v5759
      %6009 = vmatmul.mubr.bf16.gmra.mxu0 %v5758
      %v6010 = vpop.f32.mrf.mxu0
      %v6011 = vadd.f32 %v5499, %v6010
      %v6012 = vpop.f32.mrf.mxu0
      %v6013 = vadd.f32 %v5499, %v6012
      %v6014 = vpop.f32.mrf.mxu0
      %v6015 = vadd.f32 %v5504, %v6014
      %v6016 = vpop.f32.mrf.mxu0
      %v6017 = vadd.f32 %v5504, %v6016
      %6018 = vdwg.mxu0
      %6019 = vmatprep.subr.bf16.mxu0 %v5233
      %6020 = vmatpush1.bf16.msra.mxu0 %v5232
      %6021 = vmatprep.subr.bf16.mxu0 %v5231
      %6022 = vmatpush1.bf16.msra.mxu0 %v5230
      %6023 = vmatprep.subr.bf16.mxu0 %v5229
      %6024 = vmatpush1.bf16.msra.mxu0 %v5228
      %6025 = vmatprep.subr.bf16.mxu0 %v5227
      %6026 = vmatpush1.bf16.msra.mxu0 %v5226
      %6027 = vmatprep.subr.bf16.mxu0 %v5225
      %6028 = vmatpush1.bf16.msra.mxu0 %v5224
      %6029 = vmatprep.subr.bf16.mxu0 %v5223
      %6030 = vmatpush1.bf16.msra.mxu0 %v5222
      %6031 = vmatprep.subr.bf16.mxu0 %v5221
      %6032 = vmatpush1.bf16.msra.mxu0 %v5220
      %6033 = vmatprep.subr.bf16.mxu0 %v5219
      %6034 = vmatpush1.bf16.msra.mxu0 %v5218
      %6035 = vmatprep.subr.bf16.mxu0 %v5249
      %6036 = vmatpush2.bf16.msra.mxu0 %v5248
      %6037 = vmatprep.subr.bf16.mxu0 %v5247
      %6038 = vmatpush2.bf16.msra.mxu0 %v5246
      %6039 = vmatprep.subr.bf16.mxu0 %v5245
      %6040 = vmatpush2.bf16.msra.mxu0 %v5244
      %6041 = vmatprep.subr.bf16.mxu0 %v5243
      %6042 = vmatpush2.bf16.msra.mxu0 %v5242
      %6043 = vmatprep.subr.bf16.mxu0 %v5241
      %6044 = vmatpush2.bf16.msra.mxu0 %v5240
      %6045 = vmatprep.subr.bf16.mxu0 %v5239
      %6046 = vmatpush2.bf16.msra.mxu0 %v5238
      %6047 = vmatprep.subr.bf16.mxu0 %v5237
      %6048 = vmatpush2.bf16.msra.mxu0 %v5236
      %6049 = vmatprep.subr.bf16.mxu0 %v5235
      %6050 = vmatpush2.bf16.msra.mxu0 %v5234
      %6051 = vmatprep.mubr.bf16.mxu0 %v5701
      %6052 = vmatmul.mubr.bf16.gmra.mxu0 %v5700
      %v6053 = vpop.f32.mrf.mxu0
      %v6054 = vadd.f32 %v5861, %v6053
      %v6055 = vpop.f32.mrf.mxu0
      %v6056 = vadd.f32 %v5863, %v6055
      %v6057 = vpop.f32.mrf.mxu0
      %v6058 = vadd.f32 %v5865, %v6057
      %v6059 = vpop.f32.mrf.mxu0
      %v6060 = vadd.f32 %v5867, %v6059
      %6061 = vmatprep.mubr.bf16.mxu0 %v5705
      %6062 = vmatmul.mubr.bf16.gmra.mxu0 %v5704
      %v6063 = vpop.f32.mrf.mxu0
      %v6064 = vadd.f32 %v5871, %v6063
      %v6065 = vpop.f32.mrf.mxu0
      %v6066 = vadd.f32 %v5873, %v6065
      %v6067 = vpop.f32.mrf.mxu0
      %v6068 = vadd.f32 %v5875, %v6067
      %v6069 = vpop.f32.mrf.mxu0
      %v6070 = vadd.f32 %v5877, %v6069
      %6071 = vmatprep.mubr.bf16.mxu0 %v5709
      %6072 = vmatmul.mubr.bf16.gmra.mxu0 %v5708
      %v6073 = vpop.f32.mrf.mxu0
      %v6074 = vadd.f32 %v5881, %v6073
      %v6075 = vpop.f32.mrf.mxu0
      %v6076 = vadd.f32 %v5883, %v6075
      %v6077 = vpop.f32.mrf.mxu0
      %v6078 = vadd.f32 %v5885, %v6077
      %v6079 = vpop.f32.mrf.mxu0
      %v6080 = vadd.f32 %v5887, %v6079
      %6081 = vmatprep.mubr.bf16.mxu0 %v5713
      %6082 = vmatmul.mubr.bf16.gmra.mxu0 %v5712
      %v6083 = vpop.f32.mrf.mxu0
      %v6084 = vadd.f32 %v5891, %v6083
      %v6085 = vpop.f32.mrf.mxu0
      %v6086 = vadd.f32 %v5893, %v6085
      %v6087 = vpop.f32.mrf.mxu0
      %v6088 = vadd.f32 %v5895, %v6087
      %v6089 = vpop.f32.mrf.mxu0
      %v6090 = vadd.f32 %v5897, %v6089
      %6091 = vmatprep.mubr.bf16.mxu0 %v5717
      %6092 = vmatmul.mubr.bf16.gmra.mxu0 %v5716
      %v6093 = vpop.f32.mrf.mxu0
      %v6094 = vadd.f32 %v5901, %v6093
      %v6095 = vpop.f32.mrf.mxu0
      %v6096 = vadd.f32 %v5903, %v6095
      %v6097 = vpop.f32.mrf.mxu0
      %v6098 = vadd.f32 %v5905, %v6097
      %v6099 = vpop.f32.mrf.mxu0
      %v6100 = vadd.f32 %v5907, %v6099
      %6101 = vmatprep.mubr.bf16.mxu0 %v5721
      %6102 = vmatmul.mubr.bf16.gmra.mxu0 %v5720
      %v6103 = vpop.f32.mrf.mxu0
      %v6104 = vadd.f32 %v5911, %v6103
      %v6105 = vpop.f32.mrf.mxu0
      %v6106 = vadd.f32 %v5913, %v6105
      %v6107 = vpop.f32.mrf.mxu0
      %v6108 = vadd.f32 %v5915, %v6107
      %v6109 = vpop.f32.mrf.mxu0
      %v6110 = vadd.f32 %v5917, %v6109
      %6111 = vmatprep.mubr.bf16.mxu0 %v5725
      %6112 = vmatmul.mubr.bf16.gmra.mxu0 %v5724
      %v6113 = vpop.f32.mrf.mxu0
      %v6114 = vadd.f32 %v5921, %v6113
      %v6115 = vpop.f32.mrf.mxu0
      %v6116 = vadd.f32 %v5923, %v6115
      %v6117 = vpop.f32.mrf.mxu0
      %v6118 = vadd.f32 %v5925, %v6117
      %v6119 = vpop.f32.mrf.mxu0
      %v6120 = vadd.f32 %v5927, %v6119
      %6121 = vmatprep.mubr.bf16.mxu0 %v5729
      %6122 = vmatmul.mubr.bf16.gmra.mxu0 %v5728
      %v6123 = vpop.f32.mrf.mxu0
      %v6124 = vadd.f32 %v5931, %v6123
      %v6125 = vpop.f32.mrf.mxu0
      %v6126 = vadd.f32 %v5933, %v6125
      %v6127 = vpop.f32.mrf.mxu0
      %v6128 = vadd.f32 %v5935, %v6127
      %v6129 = vpop.f32.mrf.mxu0
      %v6130 = vadd.f32 %v5937, %v6129
      %6131 = vmatprep.mubr.bf16.mxu0 %v5733
      %6132 = vmatmul.mubr.bf16.gmra.mxu0 %v5732
      %v6133 = vpop.f32.mrf.mxu0
      %v6134 = vadd.f32 %v5941, %v6133
      %v6135 = vpop.f32.mrf.mxu0
      %v6136 = vadd.f32 %v5943, %v6135
      %v6137 = vpop.f32.mrf.mxu0
      %v6138 = vadd.f32 %v5945, %v6137
      %v6139 = vpop.f32.mrf.mxu0
      %v6140 = vadd.f32 %v5947, %v6139
      %6141 = vmatprep.mubr.bf16.mxu0 %v5737
      %6142 = vmatmul.mubr.bf16.gmra.mxu0 %v5736
      %v6143 = vpop.f32.mrf.mxu0
      %v6144 = vadd.f32 %v5951, %v6143
      %v6145 = vpop.f32.mrf.mxu0
      %v6146 = vadd.f32 %v5953, %v6145
      %v6147 = vpop.f32.mrf.mxu0
      %v6148 = vadd.f32 %v5955, %v6147
      %v6149 = vpop.f32.mrf.mxu0
      %v6150 = vadd.f32 %v5957, %v6149
      %6151 = vmatprep.mubr.bf16.mxu0 %v5741
      %6152 = vmatmul.mubr.bf16.gmra.mxu0 %v5740
      %v6153 = vpop.f32.mrf.mxu0
      %v6154 = vadd.f32 %v5961, %v6153
      %v6155 = vpop.f32.mrf.mxu0
      %v6156 = vadd.f32 %v5963, %v6155
      %v6157 = vpop.f32.mrf.mxu0
      %v6158 = vadd.f32 %v5965, %v6157
      %v6159 = vpop.f32.mrf.mxu0
      %v6160 = vadd.f32 %v5967, %v6159
      %6161 = vmatprep.mubr.bf16.mxu0 %v5745
      %6162 = vmatmul.mubr.bf16.gmra.mxu0 %v5744
      %v6163 = vpop.f32.mrf.mxu0
      %v6164 = vadd.f32 %v5971, %v6163
      %v6165 = vpop.f32.mrf.mxu0
      %v6166 = vadd.f32 %v5973, %v6165
      %v6167 = vpop.f32.mrf.mxu0
      %v6168 = vadd.f32 %v5975, %v6167
      %v6169 = vpop.f32.mrf.mxu0
      %v6170 = vadd.f32 %v5977, %v6169
      %6171 = vmatprep.mubr.bf16.mxu0 %v5749
      %6172 = vmatmul.mubr.bf16.gmra.mxu0 %v5748
      %v6173 = vpop.f32.mrf.mxu0
      %v6174 = vadd.f32 %v5981, %v6173
      %v6175 = vpop.f32.mrf.mxu0
      %v6176 = vadd.f32 %v5983, %v6175
      %v6177 = vpop.f32.mrf.mxu0
      %v6178 = vadd.f32 %v5985, %v6177
      %v6179 = vpop.f32.mrf.mxu0
      %v6180 = vadd.f32 %v5987, %v6179
      %6181 = vmatprep.mubr.bf16.mxu0 %v5753
      %6182 = vmatmul.mubr.bf16.gmra.mxu0 %v5752
      %v6183 = vpop.f32.mrf.mxu0
      %v6184 = vadd.f32 %v5991, %v6183
      %v6185 = vpop.f32.mrf.mxu0
      %v6186 = vadd.f32 %v5993, %v6185
      %v6187 = vpop.f32.mrf.mxu0
      %v6188 = vadd.f32 %v5995, %v6187
      %v6189 = vpop.f32.mrf.mxu0
      %v6190 = vadd.f32 %v5997, %v6189
      %6191 = vmatprep.mubr.bf16.mxu0 %v5757
      %6192 = vmatmul.mubr.bf16.gmra.mxu0 %v5756
      %v6193 = vpop.f32.mrf.mxu0
      %v6194 = vadd.f32 %v6001, %v6193
      %v6195 = vpop.f32.mrf.mxu0
      %v6196 = vadd.f32 %v6003, %v6195
      %v6197 = vpop.f32.mrf.mxu0
      %v6198 = vadd.f32 %v6005, %v6197
      %v6199 = vpop.f32.mrf.mxu0
      %v6200 = vadd.f32 %v6007, %v6199
      %6201 = vmatprep.mubr.bf16.mxu0 %v5761
      %6202 = vmatmul.mubr.bf16.gmra.mxu0 %v5760
      %v6203 = vpop.f32.mrf.mxu0
      %v6204 = vadd.f32 %v6011, %v6203
      %v6205 = vpop.f32.mrf.mxu0
      %v6206 = vadd.f32 %v6013, %v6205
      %v6207 = vpop.f32.mrf.mxu0
      %v6208 = vadd.f32 %v6015, %v6207
      %v6209 = vpop.f32.mrf.mxu0
      %v6210 = vadd.f32 %v6017, %v6209
      %6211 = vdwg.mxu0
      %vm6212 = vcmp.gt.f32.partialorder %v6054, 0.0
      %vm6213 = vcmp.gt.f32.partialorder %v6056, 0.0
      %vm6214 = vcmp.gt.f32.partialorder %v6058, 0.0
      %vm6215 = vcmp.gt.f32.partialorder %v6060, 0.0
      %vm6216 = vcmp.gt.f32.partialorder %v6064, 0.0
      %vm6217 = vcmp.gt.f32.partialorder %v6066, 0.0
      %vm6218 = vcmp.gt.f32.partialorder %v6068, 0.0
      %vm6219 = vcmp.gt.f32.partialorder %v6070, 0.0
      %vm6220 = vcmp.gt.f32.partialorder %v6074, 0.0
      %vm6221 = vcmp.gt.f32.partialorder %v6076, 0.0
      %vm6222 = vcmp.gt.f32.partialorder %v6078, 0.0
      %vm6223 = vcmp.gt.f32.partialorder %v6080, 0.0
      %vm6224 = vcmp.gt.f32.partialorder %v6084, 0.0
      %vm6225 = vcmp.gt.f32.partialorder %v6086, 0.0
      %vm6226 = vcmp.gt.f32.partialorder %v6088, 0.0
      %vm6227 = vcmp.gt.f32.partialorder %v6090, 0.0
      %vm6228 = vcmp.gt.f32.partialorder %v6094, 0.0
      %vm6229 = vcmp.gt.f32.partialorder %v6096, 0.0
      %vm6230 = vcmp.gt.f32.partialorder %v6098, 0.0
      %vm6231 = vcmp.gt.f32.partialorder %v6100, 0.0
      %vm6232 = vcmp.gt.f32.partialorder %v6104, 0.0
      %vm6233 = vcmp.gt.f32.partialorder %v6106, 0.0
      %vm6234 = vcmp.gt.f32.partialorder %v6108, 0.0
      %vm6235 = vcmp.gt.f32.partialorder %v6110, 0.0
      %vm6236 = vcmp.gt.f32.partialorder %v6114, 0.0
      %vm6237 = vcmp.gt.f32.partialorder %v6116, 0.0
      %vm6238 = vcmp.gt.f32.partialorder %v6118, 0.0
      %vm6239 = vcmp.gt.f32.partialorder %v6120, 0.0
      %vm6240 = vcmp.gt.f32.partialorder %v6124, 0.0
      %vm6241 = vcmp.gt.f32.partialorder %v6126, 0.0
      %vm6242 = vcmp.gt.f32.partialorder %v6128, 0.0
      %vm6243 = vcmp.gt.f32.partialorder %v6130, 0.0
      %vm6244 = vcmp.gt.f32.partialorder %v6134, 0.0
      %vm6245 = vcmp.gt.f32.partialorder %v6136, 0.0
      %vm6246 = vcmp.gt.f32.partialorder %v6138, 0.0
      %vm6247 = vcmp.gt.f32.partialorder %v6140, 0.0
      %vm6248 = vcmp.gt.f32.partialorder %v6144, 0.0
      %vm6249 = vcmp.gt.f32.partialorder %v6146, 0.0
      %vm6250 = vcmp.gt.f32.partialorder %v6148, 0.0
      %vm6251 = vcmp.gt.f32.partialorder %v6150, 0.0
      %vm6252 = vcmp.gt.f32.partialorder %v6154, 0.0
      %vm6253 = vcmp.gt.f32.partialorder %v6156, 0.0
      %vm6254 = vcmp.gt.f32.partialorder %v6158, 0.0
      %vm6255 = vcmp.gt.f32.partialorder %v6160, 0.0
      %vm6256 = vcmp.gt.f32.partialorder %v6164, 0.0
      %vm6257 = vcmp.gt.f32.partialorder %v6166, 0.0
      %vm6258 = vcmp.gt.f32.partialorder %v6168, 0.0
      %vm6259 = vcmp.gt.f32.partialorder %v6170, 0.0
      %vm6260 = vcmp.gt.f32.partialorder %v6174, 0.0
      %vm6261 = vcmp.gt.f32.partialorder %v6176, 0.0
      %vm6262 = vcmp.gt.f32.partialorder %v6178, 0.0
      %vm6263 = vcmp.gt.f32.partialorder %v6180, 0.0
      %vm6264 = vcmp.gt.f32.partialorder %v6184, 0.0
      %vm6265 = vcmp.gt.f32.partialorder %v6186, 0.0
      %vm6266 = vcmp.gt.f32.partialorder %v6188, 0.0
      %vm6267 = vcmp.gt.f32.partialorder %v6190, 0.0
      %vm6268 = vcmp.gt.f32.partialorder %v6194, 0.0
      %vm6269 = vcmp.gt.f32.partialorder %v6196, 0.0
      %vm6270 = vcmp.gt.f32.partialorder %v6198, 0.0
      %vm6271 = vcmp.gt.f32.partialorder %v6200, 0.0
      %vm6272 = vcmp.gt.f32.partialorder %v6204, 0.0
      %vm6273 = vcmp.gt.f32.partialorder %v6206, 0.0
      %vm6274 = vcmp.gt.f32.partialorder %v6208, 0.0
      %vm6275 = vcmp.gt.f32.partialorder %v6210, 0.0
      %v6276 = vmul.f32 %v6054, 0.2
      %v6277 = vmul.f32 %v6056, 0.2
      %v6278 = vmul.f32 %v6058, 0.2
      %v6279 = vmul.f32 %v6060, 0.2
      %v6280 = vmul.f32 %v6064, 0.2
      %v6281 = vmul.f32 %v6066, 0.2
      %v6282 = vmul.f32 %v6068, 0.2
      %v6283 = vmul.f32 %v6070, 0.2
      %v6284 = vmul.f32 %v6074, 0.2
      %v6285 = vmul.f32 %v6076, 0.2
      %v6286 = vmul.f32 %v6078, 0.2
      %v6287 = vmul.f32 %v6080, 0.2
      %v6288 = vmul.f32 %v6084, 0.2
      %v6289 = vmul.f32 %v6086, 0.2
      %v6290 = vmul.f32 %v6088, 0.2
      %v6291 = vmul.f32 %v6090, 0.2
      %v6292 = vmul.f32 %v6094, 0.2
      %v6293 = vmul.f32 %v6096, 0.2
      %v6294 = vmul.f32 %v6098, 0.2
      %v6295 = vmul.f32 %v6100, 0.2
      %v6296 = vmul.f32 %v6104, 0.2
      %v6297 = vmul.f32 %v6106, 0.2
      %v6298 = vmul.f32 %v6108, 0.2
      %v6299 = vmul.f32 %v6110, 0.2
      %v6300 = vmul.f32 %v6114, 0.2
      %v6301 = vmul.f32 %v6116, 0.2
      %v6302 = vmul.f32 %v6118, 0.2
      %v6303 = vmul.f32 %v6120, 0.2
      %v6304 = vmul.f32 %v6124, 0.2
      %v6305 = vmul.f32 %v6126, 0.2
      %v6306 = vmul.f32 %v6128, 0.2
      %v6307 = vmul.f32 %v6130, 0.2
      %v6308 = vmul.f32 %v6134, 0.2
      %v6309 = vmul.f32 %v6136, 0.2
      %v6310 = vmul.f32 %v6138, 0.2
      %v6311 = vmul.f32 %v6140, 0.2
      %v6312 = vmul.f32 %v6144, 0.2
      %v6313 = vmul.f32 %v6146, 0.2
      %v6314 = vmul.f32 %v6148, 0.2
      %v6315 = vmul.f32 %v6150, 0.2
      %v6316 = vmul.f32 %v6154, 0.2
      %v6317 = vmul.f32 %v6156, 0.2
      %v6318 = vmul.f32 %v6158, 0.2
      %v6319 = vmul.f32 %v6160, 0.2
      %v6320 = vmul.f32 %v6164, 0.2
      %v6321 = vmul.f32 %v6166, 0.2
      %v6322 = vmul.f32 %v6168, 0.2
      %v6323 = vmul.f32 %v6170, 0.2
      %v6324 = vmul.f32 %v6174, 0.2
      %v6325 = vmul.f32 %v6176, 0.2
      %v6326 = vmul.f32 %v6178, 0.2
      %v6327 = vmul.f32 %v6180, 0.2
      %v6328 = vmul.f32 %v6184, 0.2
      %v6329 = vmul.f32 %v6186, 0.2
      %v6330 = vmul.f32 %v6188, 0.2
      %v6331 = vmul.f32 %v6190, 0.2
      %v6332 = vmul.f32 %v6194, 0.2
      %v6333 = vmul.f32 %v6196, 0.2
      %v6334 = vmul.f32 %v6198, 0.2
      %v6335 = vmul.f32 %v6200, 0.2
      %v6336 = vmul.f32 %v6204, 0.2
      %v6337 = vmul.f32 %v6206, 0.2
      %v6338 = vmul.f32 %v6208, 0.2
      %v6339 = vmul.f32 %v6210, 0.2
      %v6340 = vsel %vm6212, %v6054, %v6276
      %v6341 = vsel %vm6213, %v6056, %v6277
      %v6342 = vsel %vm6214, %v6058, %v6278
      %v6343 = vsel %vm6215, %v6060, %v6279
      %v6344 = vsel %vm6216, %v6064, %v6280
      %v6345 = vsel %vm6217, %v6066, %v6281
      %v6346 = vsel %vm6218, %v6068, %v6282
      %v6347 = vsel %vm6219, %v6070, %v6283
      %v6348 = vsel %vm6220, %v6074, %v6284
      %v6349 = vsel %vm6221, %v6076, %v6285
      %v6350 = vsel %vm6222, %v6078, %v6286
      %v6351 = vsel %vm6223, %v6080, %v6287
      %v6352 = vsel %vm6224, %v6084, %v6288
      %v6353 = vsel %vm6225, %v6086, %v6289
      %v6354 = vsel %vm6226, %v6088, %v6290
      %v6355 = vsel %vm6227, %v6090, %v6291
      %v6356 = vsel %vm6228, %v6094, %v6292
      %v6357 = vsel %vm6229, %v6096, %v6293
      %v6358 = vsel %vm6230, %v6098, %v6294
      %v6359 = vsel %vm6231, %v6100, %v6295
      %v6360 = vsel %vm6232, %v6104, %v6296
      %v6361 = vsel %vm6233, %v6106, %v6297
      %v6362 = vsel %vm6234, %v6108, %v6298
      %v6363 = vsel %vm6235, %v6110, %v6299
      %v6364 = vsel %vm6236, %v6114, %v6300
      %v6365 = vsel %vm6237, %v6116, %v6301
      %v6366 = vsel %vm6238, %v6118, %v6302
      %v6367 = vsel %vm6239, %v6120, %v6303
      %v6368 = vsel %vm6240, %v6124, %v6304
      %v6369 = vsel %vm6241, %v6126, %v6305
      %v6370 = vsel %vm6242, %v6128, %v6306
      %v6371 = vsel %vm6243, %v6130, %v6307
      %v6372 = vsel %vm6244, %v6134, %v6308
      %v6373 = vsel %vm6245, %v6136, %v6309
      %v6374 = vsel %vm6246, %v6138, %v6310
      %v6375 = vsel %vm6247, %v6140, %v6311
      %v6376 = vsel %vm6248, %v6144, %v6312
      %v6377 = vsel %vm6249, %v6146, %v6313
      %v6378 = vsel %vm6250, %v6148, %v6314
      %v6379 = vsel %vm6251, %v6150, %v6315
      %v6380 = vsel %vm6252, %v6154, %v6316
      %v6381 = vsel %vm6253, %v6156, %v6317
      %v6382 = vsel %vm6254, %v6158, %v6318
      %v6383 = vsel %vm6255, %v6160, %v6319
      %v6384 = vsel %vm6256, %v6164, %v6320
      %v6385 = vsel %vm6257, %v6166, %v6321
      %v6386 = vsel %vm6258, %v6168, %v6322
      %v6387 = vsel %vm6259, %v6170, %v6323
      %v6388 = vsel %vm6260, %v6174, %v6324
      %v6389 = vsel %vm6261, %v6176, %v6325
      %v6390 = vsel %vm6262, %v6178, %v6326
      %v6391 = vsel %vm6263, %v6180, %v6327
      %v6392 = vsel %vm6264, %v6184, %v6328
      %v6393 = vsel %vm6265, %v6186, %v6329
      %v6394 = vsel %vm6266, %v6188, %v6330
      %v6395 = vsel %vm6267, %v6190, %v6331
      %v6396 = vsel %vm6268, %v6194, %v6332
      %v6397 = vsel %vm6269, %v6196, %v6333
      %v6398 = vsel %vm6270, %v6198, %v6334
      %v6399 = vsel %vm6271, %v6200, %v6335
      %v6400 = vsel %vm6272, %v6204, %v6336
      %v6401 = vsel %vm6273, %v6206, %v6337
      %v6402 = vsel %vm6274, %v6208, %v6338
      %v6403 = vsel %vm6275, %v6210, %v6339
      %v6404 = vpack.c.bf16 %v6342, %v6340
      %v6405 = vpack.c.bf16 %v6343, %v6341
      %v6406 = vpack.c.bf16 %v6346, %v6344
      %v6407 = vpack.c.bf16 %v6347, %v6345
      %v6408 = vpack.c.bf16 %v6350, %v6348
      %v6409 = vpack.c.bf16 %v6351, %v6349
      %v6410 = vpack.c.bf16 %v6354, %v6352
      %v6411 = vpack.c.bf16 %v6355, %v6353
      %v6412 = vpack.c.bf16 %v6358, %v6356
      %v6413 = vpack.c.bf16 %v6359, %v6357
      %v6414 = vpack.c.bf16 %v6362, %v6360
      %v6415 = vpack.c.bf16 %v6363, %v6361
      %v6416 = vpack.c.bf16 %v6366, %v6364
      %v6417 = vpack.c.bf16 %v6367, %v6365
      %v6418 = vpack.c.bf16 %v6370, %v6368
      %v6419 = vpack.c.bf16 %v6371, %v6369
      %v6420 = vpack.c.bf16 %v6374, %v6372
      %v6421 = vpack.c.bf16 %v6375, %v6373
      %v6422 = vpack.c.bf16 %v6378, %v6376
      %v6423 = vpack.c.bf16 %v6379, %v6377
      %v6424 = vpack.c.bf16 %v6382, %v6380
      %v6425 = vpack.c.bf16 %v6383, %v6381
      %v6426 = vpack.c.bf16 %v6386, %v6384
      %v6427 = vpack.c.bf16 %v6387, %v6385
      %v6428 = vpack.c.bf16 %v6390, %v6388
      %v6429 = vpack.c.bf16 %v6391, %v6389
      %v6430 = vpack.c.bf16 %v6394, %v6392
      %v6431 = vpack.c.bf16 %v6395, %v6393
      %v6432 = vpack.c.bf16 %v6398, %v6396
      %v6433 = vpack.c.bf16 %v6399, %v6397
      %v6434 = vpack.c.bf16 %v6402, %v6400
      %v6435 = vpack.c.bf16 %v6403, %v6401
      %v6436 = vld [vmem:[%s5] sm:$0xff]
      %v6437 = vld [vmem:[%s5 + $0x8] sm:$0xff]
      %v6438 = vld [vmem:[%s5 + $0x10] sm:$0xff]
      %v6439 = vld [vmem:[%s5 + $0x18] sm:$0xff]
      %v6440 = vld [vmem:[%s5 + $0x20] sm:$0xff]
      %v6441 = vld [vmem:[%s5 + $0x28] sm:$0xff]
      %v6442 = vld [vmem:[%s5 + $0x30] sm:$0xff]
      %v6443 = vld [vmem:[%s5 + $0x38] sm:$0xff]
      %v6444 = vld [vmem:[%s5 + $0x40] sm:$0xff]
      %v6445 = vld [vmem:[%s5 + $0x48] sm:$0xff]
      %v6446 = vld [vmem:[%s5 + $0x50] sm:$0xff]
      %v6447 = vld [vmem:[%s5 + $0x58] sm:$0xff]
      %v6448 = vld [vmem:[%s5 + $0x60] sm:$0xff]
      %v6449 = vld [vmem:[%s5 + $0x68] sm:$0xff]
      %v6450 = vld [vmem:[%s5 + $0x70] sm:$0xff]
      %v6451 = vld [vmem:[%s5 + $0x78] sm:$0xff]
      %v6452 = vld [vmem:[%s6] sm:$0xff]
      %v6453 = vld [vmem:[%s6 + $0x8] sm:$0xff]
      %v6454 = vld [vmem:[%s6 + $0x10] sm:$0xff]
      %v6455 = vld [vmem:[%s6 + $0x18] sm:$0xff]
      %v6456 = vld [vmem:[%s6 + $0x20] sm:$0xff]
      %v6457 = vld [vmem:[%s6 + $0x28] sm:$0xff]
      %v6458 = vld [vmem:[%s6 + $0x30] sm:$0xff]
      %v6459 = vld [vmem:[%s6 + $0x38] sm:$0xff]
      %v6460 = vld [vmem:[%s6 + $0x40] sm:$0xff]
      %v6461 = vld [vmem:[%s6 + $0x48] sm:$0xff]
      %v6462 = vld [vmem:[%s6 + $0x50] sm:$0xff]
      %v6463 = vld [vmem:[%s6 + $0x58] sm:$0xff]
      %v6464 = vld [vmem:[%s6 + $0x60] sm:$0xff]
      %v6465 = vld [vmem:[%s6 + $0x68] sm:$0xff]
      %v6466 = vld [vmem:[%s6 + $0x70] sm:$0xff]
      %v6467 = vld [vmem:[%s6 + $0x78] sm:$0xff]
      %6469 = vset.pattern.permute.xlu0 0
      %6470 = vperm.xlu0 %6469, %v6452
      %v6471 = vpop.permute.xlu0 %6470
      %6474 = vset.pattern.permute.xlu0 0
      %6475 = vperm.xlu0 %6474, %v6453
      %v6476 = vpop.permute.xlu0 %6475
      %6479 = vset.pattern.permute.xlu0 0
      %6480 = vperm.xlu0 %6479, %v6454
      %v6481 = vpop.permute.xlu0 %6480
      %6484 = vset.pattern.permute.xlu0 0
      %6485 = vperm.xlu0 %6484, %v6455
      %v6486 = vpop.permute.xlu0 %6485
      %6489 = vset.pattern.permute.xlu0 0
      %6490 = vperm.xlu0 %6489, %v6456
      %v6491 = vpop.permute.xlu0 %6490
      %6494 = vset.pattern.permute.xlu0 0
      %6495 = vperm.xlu0 %6494, %v6457
      %v6496 = vpop.permute.xlu0 %6495
      %6499 = vset.pattern.permute.xlu0 0
      %6500 = vperm.xlu0 %6499, %v6458
      %v6501 = vpop.permute.xlu0 %6500
      %6504 = vset.pattern.permute.xlu0 0
      %6505 = vperm.xlu0 %6504, %v6459
      %v6506 = vpop.permute.xlu0 %6505
      %6509 = vset.pattern.permute.xlu0 0
      %6510 = vperm.xlu0 %6509, %v6460
      %v6511 = vpop.permute.xlu0 %6510
      %6514 = vset.pattern.permute.xlu0 0
      %6515 = vperm.xlu0 %6514, %v6461
      %v6516 = vpop.permute.xlu0 %6515
      %6519 = vset.pattern.permute.xlu0 0
      %6520 = vperm.xlu0 %6519, %v6462
      %v6521 = vpop.permute.xlu0 %6520
      %6524 = vset.pattern.permute.xlu0 0
      %6525 = vperm.xlu0 %6524, %v6463
      %v6526 = vpop.permute.xlu0 %6525
      %6529 = vset.pattern.permute.xlu0 0
      %6530 = vperm.xlu0 %6529, %v6464
      %v6531 = vpop.permute.xlu0 %6530
      %6534 = vset.pattern.permute.xlu0 0
      %6535 = vperm.xlu0 %6534, %v6465
      %v6536 = vpop.permute.xlu0 %6535
      %6539 = vset.pattern.permute.xlu0 0
      %6540 = vperm.xlu0 %6539, %v6466
      %v6541 = vpop.permute.xlu0 %6540
      %6544 = vset.pattern.permute.xlu0 0
      %6545 = vperm.xlu0 %6544, %v6467
      %v6546 = vpop.permute.xlu0 %6545
      %v6564 = vunpack.c.l.b16 %v6436
      %v6565 = vunpack.c.h.b16 %v6436
      %v6566 = vunpack.c.l.b16 %v6437
      %v6567 = vunpack.c.h.b16 %v6437
      %v6568 = vunpack.c.l.b16 %v6438
      %v6569 = vunpack.c.h.b16 %v6438
      %v6570 = vunpack.c.l.b16 %v6439
      %v6571 = vunpack.c.h.b16 %v6439
      %v6572 = vunpack.c.l.b16 %v6440
      %v6573 = vunpack.c.h.b16 %v6440
      %v6574 = vunpack.c.l.b16 %v6441
      %v6575 = vunpack.c.h.b16 %v6441
      %v6576 = vunpack.c.l.b16 %v6442
      %v6577 = vunpack.c.h.b16 %v6442
      %v6578 = vunpack.c.l.b16 %v6443
      %v6579 = vunpack.c.h.b16 %v6443
      %v6580 = vunpack.c.l.b16 %v6444
      %v6581 = vunpack.c.h.b16 %v6444
      %v6582 = vunpack.c.l.b16 %v6445
      %v6583 = vunpack.c.h.b16 %v6445
      %v6584 = vunpack.c.l.b16 %v6446
      %v6585 = vunpack.c.h.b16 %v6446
      %v6586 = vunpack.c.l.b16 %v6447
      %v6587 = vunpack.c.h.b16 %v6447
      %v6588 = vunpack.c.l.b16 %v6448
      %v6589 = vunpack.c.h.b16 %v6448
      %v6590 = vunpack.c.l.b16 %v6449
      %v6591 = vunpack.c.h.b16 %v6449
      %v6592 = vunpack.c.l.b16 %v6450
      %v6593 = vunpack.c.h.b16 %v6450
      %v6594 = vunpack.c.l.b16 %v6451
      %v6595 = vunpack.c.h.b16 %v6451
      %v6596 = vpack.c.b16 %v6566, %v6564
      %v6597 = vpack.c.b16 %v6567, %v6565
      %v6598 = vpack.c.b16 %v6570, %v6568
      %v6599 = vpack.c.b16 %v6571, %v6569
      %v6600 = vpack.c.b16 %v6574, %v6572
      %v6601 = vpack.c.b16 %v6575, %v6573
      %v6602 = vpack.c.b16 %v6578, %v6576
      %v6603 = vpack.c.b16 %v6579, %v6577
      %v6604 = vpack.c.b16 %v6582, %v6580
      %v6605 = vpack.c.b16 %v6583, %v6581
      %v6606 = vpack.c.b16 %v6586, %v6584
      %v6607 = vpack.c.b16 %v6587, %v6585
      %v6608 = vpack.c.b16 %v6590, %v6588
      %v6609 = vpack.c.b16 %v6591, %v6589
      %v6610 = vpack.c.b16 %v6594, %v6592
      %v6611 = vpack.c.b16 %v6595, %v6593
      %6628 = vmatprep.subr.bf16.mxu0 %v6419
      %6629 = vmatpush1.bf16.msra.mxu0 %v6418
      %6630 = vmatprep.subr.bf16.mxu0 %v6417
      %6631 = vmatpush1.bf16.msra.mxu0 %v6416
      %6632 = vmatprep.subr.bf16.mxu0 %v6415
      %6633 = vmatpush1.bf16.msra.mxu0 %v6414
      %6634 = vmatprep.subr.bf16.mxu0 %v6413
      %6635 = vmatpush1.bf16.msra.mxu0 %v6412
      %6636 = vmatprep.subr.bf16.mxu0 %v6411
      %6637 = vmatpush1.bf16.msra.mxu0 %v6410
      %6638 = vmatprep.subr.bf16.mxu0 %v6409
      %6639 = vmatpush1.bf16.msra.mxu0 %v6408
      %6640 = vmatprep.subr.bf16.mxu0 %v6407
      %6641 = vmatpush1.bf16.msra.mxu0 %v6406
      %6642 = vmatprep.subr.bf16.mxu0 %v6405
      %6643 = vmatpush1.bf16.msra.mxu0 %v6404
      %6644 = vmatprep.subr.bf16.mxu0 %v6435
      %6645 = vmatpush2.bf16.msra.mxu0 %v6434
      %6646 = vmatprep.subr.bf16.mxu0 %v6433
      %6647 = vmatpush2.bf16.msra.mxu0 %v6432
      %6648 = vmatprep.subr.bf16.mxu0 %v6431
      %6649 = vmatpush2.bf16.msra.mxu0 %v6430
      %6650 = vmatprep.subr.bf16.mxu0 %v6429
      %6651 = vmatpush2.bf16.msra.mxu0 %v6428
      %6652 = vmatprep.subr.bf16.mxu0 %v6427
      %6653 = vmatpush2.bf16.msra.mxu0 %v6426
      %6654 = vmatprep.subr.bf16.mxu0 %v6425
      %6655 = vmatpush2.bf16.msra.mxu0 %v6424
      %6656 = vmatprep.subr.bf16.mxu0 %v6423
      %6657 = vmatpush2.bf16.msra.mxu0 %v6422
      %6658 = vmatprep.subr.bf16.mxu0 %v6421
      %6659 = vmatpush2.bf16.msra.mxu0 %v6420
      %6660 = vmatprep.mubr.bf16.mxu0 %v6597
      %6661 = vmatmul.mubr.bf16.gmra.mxu0 %v6596
      %v6662 = vpop.f32.mrf.mxu0
      %v6663 = vadd.f32 %v6471, %v6662
      %v6664 = vpop.f32.mrf.mxu0
      %v6665 = vadd.f32 %v6471, %v6664
      %v6666 = vpop.f32.mrf.mxu0
      %v6667 = vadd.f32 %v6476, %v6666
      %v6668 = vpop.f32.mrf.mxu0
      %v6669 = vadd.f32 %v6476, %v6668
      %6670 = vmatprep.mubr.bf16.mxu0 %v6599
      %6671 = vmatmul.mubr.bf16.gmra.mxu0 %v6598
      %v6672 = vpop.f32.mrf.mxu0
      %v6673 = vadd.f32 %v6481, %v6672
      %v6674 = vpop.f32.mrf.mxu0
      %v6675 = vadd.f32 %v6481, %v6674
      %v6676 = vpop.f32.mrf.mxu0
      %v6677 = vadd.f32 %v6486, %v6676
      %v6678 = vpop.f32.mrf.mxu0
      %v6679 = vadd.f32 %v6486, %v6678
      %6680 = vmatprep.mubr.bf16.mxu0 %v6601
      %6681 = vmatmul.mubr.bf16.gmra.mxu0 %v6600
      %v6682 = vpop.f32.mrf.mxu0
      %v6683 = vadd.f32 %v6491, %v6682
      %v6684 = vpop.f32.mrf.mxu0
      %v6685 = vadd.f32 %v6491, %v6684
      %v6686 = vpop.f32.mrf.mxu0
      %v6687 = vadd.f32 %v6496, %v6686
      %v6688 = vpop.f32.mrf.mxu0
      %v6689 = vadd.f32 %v6496, %v6688
      %6690 = vmatprep.mubr.bf16.mxu0 %v6603
      %6691 = vmatmul.mubr.bf16.gmra.mxu0 %v6602
      %v6692 = vpop.f32.mrf.mxu0
      %v6693 = vadd.f32 %v6501, %v6692
      %v6694 = vpop.f32.mrf.mxu0
      %v6695 = vadd.f32 %v6501, %v6694
      %v6696 = vpop.f32.mrf.mxu0
      %v6697 = vadd.f32 %v6506, %v6696
      %v6698 = vpop.f32.mrf.mxu0
      %v6699 = vadd.f32 %v6506, %v6698
      %6700 = vmatprep.mubr.bf16.mxu0 %v6605
      %6701 = vmatmul.mubr.bf16.gmra.mxu0 %v6604
      %v6702 = vpop.f32.mrf.mxu0
      %v6703 = vadd.f32 %v6511, %v6702
      %v6704 = vpop.f32.mrf.mxu0
      %v6705 = vadd.f32 %v6511, %v6704
      %v6706 = vpop.f32.mrf.mxu0
      %v6707 = vadd.f32 %v6516, %v6706
      %v6708 = vpop.f32.mrf.mxu0
      %v6709 = vadd.f32 %v6516, %v6708
      %6710 = vmatprep.mubr.bf16.mxu0 %v6607
      %6711 = vmatmul.mubr.bf16.gmra.mxu0 %v6606
      %v6712 = vpop.f32.mrf.mxu0
      %v6713 = vadd.f32 %v6521, %v6712
      %v6714 = vpop.f32.mrf.mxu0
      %v6715 = vadd.f32 %v6521, %v6714
      %v6716 = vpop.f32.mrf.mxu0
      %v6717 = vadd.f32 %v6526, %v6716
      %v6718 = vpop.f32.mrf.mxu0
      %v6719 = vadd.f32 %v6526, %v6718
      %6720 = vmatprep.mubr.bf16.mxu0 %v6609
      %6721 = vmatmul.mubr.bf16.gmra.mxu0 %v6608
      %v6722 = vpop.f32.mrf.mxu0
      %v6723 = vadd.f32 %v6531, %v6722
      %v6724 = vpop.f32.mrf.mxu0
      %v6725 = vadd.f32 %v6531, %v6724
      %v6726 = vpop.f32.mrf.mxu0
      %v6727 = vadd.f32 %v6536, %v6726
      %v6728 = vpop.f32.mrf.mxu0
      %v6729 = vadd.f32 %v6536, %v6728
      %6730 = vmatprep.mubr.bf16.mxu0 %v6611
      %6731 = vmatmul.mubr.bf16.gmra.mxu0 %v6610
      %v6732 = vpop.f32.mrf.mxu0
      %v6733 = vadd.f32 %v6541, %v6732
      %v6734 = vpop.f32.mrf.mxu0
      %v6735 = vadd.f32 %v6541, %v6734
      %v6736 = vpop.f32.mrf.mxu0
      %v6737 = vadd.f32 %v6546, %v6736
      %v6738 = vpop.f32.mrf.mxu0
      %v6739 = vadd.f32 %v6546, %v6738
      %6740 = vdwg.mxu0
      %6741 = vst [vmem:[%s316] sm:$0xff] %v6663
      %6742 = vst [vmem:[%s316 + $0x8] sm:$0xff] %v6665
      %6743 = vst [vmem:[%s316 + $0x10] sm:$0xff] %v6667
      %6744 = vst [vmem:[%s316 + $0x18] sm:$0xff] %v6669
      %6745 = vst [vmem:[%s316 + $0x20] sm:$0xff] %v6673
      %6746 = vst [vmem:[%s316 + $0x28] sm:$0xff] %v6675
      %6747 = vst [vmem:[%s316 + $0x30] sm:$0xff] %v6677
      %6748 = vst [vmem:[%s316 + $0x38] sm:$0xff] %v6679
      %6749 = vst [vmem:[%s316 + $0x40] sm:$0xff] %v6683
      %6750 = vst [vmem:[%s316 + $0x48] sm:$0xff] %v6685
      %6751 = vst [vmem:[%s316 + $0x50] sm:$0xff] %v6687
      %6752 = vst [vmem:[%s316 + $0x58] sm:$0xff] %v6689
      %6753 = vst [vmem:[%s316 + $0x60] sm:$0xff] %v6693
      %6754 = vst [vmem:[%s316 + $0x68] sm:$0xff] %v6695
      %6755 = vst [vmem:[%s316 + $0x70] sm:$0xff] %v6697
      %6756 = vst [vmem:[%s316 + $0x78] sm:$0xff] %v6699
      %6757 = vst [vmem:[%s316 + $0x80] sm:$0xff] %v6703
      %6758 = vst [vmem:[%s316 + $0x88] sm:$0xff] %v6705
      %6759 = vst [vmem:[%s316 + $0x90] sm:$0xff] %v6707
      %6760 = vst [vmem:[%s316 + $0x98] sm:$0xff] %v6709
      %6761 = vst [vmem:[%s316 + $0xa0] sm:$0xff] %v6713
      %6762 = vst [vmem:[%s316 + $0xa8] sm:$0xff] %v6715
      %6763 = vst [vmem:[%s316 + $0xb0] sm:$0xff] %v6717
      %6764 = vst [vmem:[%s316 + $0xb8] sm:$0xff] %v6719
      %6765 = vst [vmem:[%s316 + $0xc0] sm:$0xff] %v6723
      %6766 = vst [vmem:[%s316 + $0xc8] sm:$0xff] %v6725
      %6767 = vst [vmem:[%s316 + $0xd0] sm:$0xff] %v6727
      %6768 = vst [vmem:[%s316 + $0xd8] sm:$0xff] %v6729
      %6769 = vst [vmem:[%s316 + $0xe0] sm:$0xff] %v6733
      %6770 = vst [vmem:[%s316 + $0xe8] sm:$0xff] %v6735
      %6771 = vst [vmem:[%s316 + $0xf0] sm:$0xff] %v6737
      %6772 = vst [vmem:[%s316 + $0xf8] sm:$0xff] %v6739
      %s6773 = smul.u32 2, %s23
      %p6774 = scmp.lt.s32.totalorder %s22, 1
      %s6775 = scalar_select %p6774, %s22, 1
      %p6776 = scmp.lt.s32.totalorder %s6773, 1
      %s6777 = scalar_select %p6776, %s6773, 1
      %s6778 = smul.addr %s6775, 32
      %s6779 = sadd.s32 %s6777, %s6778
      %s6780 = smul.addr %s6779, 8
      %s6781 = scalar_lea.vmem %s7, %s6780
      // Predicated region
      $region49: #{project_3d_to_2d.1} parent=47 // pred_check
        %p6782 = pneg %p204
      $region50: #{project_3d_to_2d.1} parent=47 // pred_check_branch
        %6784 = sbr.rel (%p6782) target = $region52
      $region51: #{project_3d_to_2d.1} parent=47 // pred_region
        %s6785 = smul.u32 2, %s23
      $region52: #{project_3d_to_2d.1} parent=47 // pred_fallthru
        _
    $region48: #{project_3d_to_2d.1} parent=5 // pred_fallthru
      _
    %p6786 = scmp.le.s32.totalorder 2, %s13
    // Predicated region
    $region53: #{project_3d_to_2d.1} parent=5 // pred_check
      %p6787 = pneg %p6786
    $region54: #{project_3d_to_2d.1} parent=5 // pred_check_branch
      %6789 = sbr.rel (%p6787) target = $region56
    $region55: #{project_3d_to_2d.1} parent=5 // pred_region
      %s6790 = ssub.s32 %s13, 2
      // Predicated region
      $region57: #{project_3d_to_2d.1} parent=55 // pred_check
        %p6791 = pneg %p210
      $region58: #{project_3d_to_2d.1} parent=55 // pred_check_branch
        %6793 = sbr.rel (%p6791) target = $region60
      $region59: #{project_3d_to_2d.1} parent=55 // pred_region
        %s6794 = smul.u32 2, %s25
        %p6795 = scmp.lt.s32.totalorder %s24, 1
        %s6796 = scalar_select %p6795, %s24, 1
        %p6797 = scmp.lt.s32.totalorder %s6794, 1
        %s6798 = scalar_select %p6797, %s6794, 1
        %s6799 = smul.addr %s6796, 32
        %s6800 = sadd.s32 %s6798, %s6799
        %s6801 = smul.addr %s6800, 8
        %s6802 = scalar_lea.vmem %s7, %s6801
      $region60: #{project_3d_to_2d.1} parent=55 // pred_fallthru
        _
    $region56: #{project_3d_to_2d.1} parent=5 // pred_fallthru
      _
  $region6: #{project_3d_to_2d.1} parent=0 // loop_footer
    %s17 = sadd.s32 1, %s13
  $region7: #{project_3d_to_2d.1} parent=0 // loop_footer_branch
    %12 = sbr.rel target = $region3
  $region8: #{project_3d_to_2d.1} parent=0 // loop_exit
    _

</llo_original>
